<compile_context>
chip_gen: v7x
topology: tpu7x:2x2x1
jax: 0.10.0
libtpu: 0.0.40
codegen_flags: <defaults>
</compile_context>

<pallas_src>
import math

import jax
import jax.numpy as jnp
from jax.experimental import pallas as pl
from jax.experimental.pallas import tpu as pltpu


# ----------------------------------------------------------------------------
# Kernel: whole recurrence in one invocation.
#   x:(S,B,D)  m:(S,B,1)  lm/rm:(S,S,B)  w:(D+2M,5M)  b:(1,5M)  hc(out):(S,B,2M)
# ----------------------------------------------------------------------------
def _tree_lstm_kernel(x_ref, m_ref, lm_ref, rm_ref, w_ref, b_ref, hc_ref):
    S = x_ref.shape[0]
    M = hc_ref.shape[2] // 2

    # The output buffer doubles as the recurrent [h | c] state.  Each slot is
    # written exactly once (at its own step); slots >= step are zero when read.
    # NOTE: correctness relies on strictly sequential steps (serial recurrence).
    hc_ref[...] = jnp.zeros_like(hc_ref)

    def step_body(step, carry):
        inp = x_ref[step]        # (B, D)
        mask = m_ref[step]       # (B, 1)
        lmask = lm_ref[step]     # (S, B)   pre-transposed child masks
        rmask = rm_ref[step]     # (S, B)

        hc = hc_ref[...]         # (S, B, 2M) == [h | c] on the lane axis
        l_hc = jnp.sum(lmask[:, :, None] * hc, axis=0)   # (B, 2M) = [lh | lc]
        r_hc = jnp.sum(rmask[:, :, None] * hc, axis=0)   # (B, 2M) = [rh | rc]
        lh, lc = l_hc[:, :M], l_hc[:, M:]
        rh, rc = r_hc[:, :M], r_hc[:, M:]

        # One fused MXU call (K = D + 2M) replaces the three tiny projections.
        fused_in = jnp.concatenate([inp, lh, rh], axis=1)              # (B, D+2M)
        z = jnp.dot(fused_in, w_ref[...],
                    preferred_element_type=jnp.float32) + b_ref[...]   # (B, 5M)

        u = jnp.tanh(z[:, 0 * M:1 * M])
        i = jax.nn.sigmoid(z[:, 1 * M:2 * M])
        lf = jax.nn.sigmoid(z[:, 2 * M:3 * M])
        rf = jax.nn.sigmoid(z[:, 3 * M:4 * M])
        o = jax.nn.sigmoid(z[:, 4 * M:5 * M])

        c_new = i * u + lf * lc + rf * rc
        h_new = o * jnp.tanh(c_new)

        # Slot `step` was zero before this write, so the torch mask blend
        # mask*new + (1-mask)*old reduces to mask*new for this slot and is a
        # no-op for every other slot (new == old there).  Exact match, even for
        # non-binary masks.
        hc_ref[step] = mask * jnp.concatenate([h_new, c_new], axis=1)
        return carry

    # Short fixed trip count: fully unroll for LLO scheduling visibility.
    jax.lax.fori_loop(0, S, step_body, 0, unroll=True)


# ----------------------------------------------------------------------------
# Wrapper: weight fusion, batch padding, lane-concatenated state, output slice.
# ----------------------------------------------------------------------------
def binary_tree_lstm_forward(x, x_mask, x_left_mask, x_right_mask, wx, bx, wl, wr):
    """x: (S, B, D); x_mask: (S, B); x_*_mask: (S, B, S). Returns (B, S, D)."""
    S, B, D = x.shape
    M = D  # module implicitly requires mem_dim == in_dim (h/c allocated with dim_emb)

    # --- pad batch to the 8-sublane width (padded rows fully masked out) -----
    B_pad = ((B + 7) // 8) * 8
    pad = B_pad - B
    xf = x.astype(jnp.float32)
    mf = x_mask.astype(jnp.float32)
    lmf = x_left_mask.astype(jnp.float32)
    rmf = x_right_mask.astype(jnp.float32)
    if pad:
        xf = jnp.pad(xf, ((0, 0), (0, pad), (0, 0)))
        mf = jnp.pad(mf, ((0, 0), (0, pad)))
        lmf = jnp.pad(lmf, ((0, 0), (0, pad), (0, 0)))
        rmf = jnp.pad(rmf, ((0, 0), (0, pad), (0, 0)))

    mask3 = mf[:, :, None]                       # (S, B_pad, 1)
    lm_t = jnp.transpose(lmf, (0, 2, 1))         # (S, S, B_pad)
    rm_t = jnp.transpose(rmf, (0, 2, 1))         # (S, S, B_pad)

    # --- fused weight [wx_expanded ; wl ; wr] with [u, i, lf, rf, o] columns --
    # wx columns are [cx(u), ix(i), fx(f), ox(o)]; fx is duplicated for rf.
    wxf, wlf, wrf = (w.astype(jnp.float32) for w in (wx, wl, wr))
    bxf = bx.astype(jnp.float32)
    wx_exp = jnp.concatenate(
        [wxf[:, 0:M], wxf[:, M:2 * M], wxf[:, 2 * M:3 * M],
         wxf[:, 2 * M:3 * M], wxf[:, 3 * M:4 * M]], axis=1)          # (D, 5M)
    w_fused = jnp.concatenate([wx_exp, wlf, wrf], axis=0)            # (D+2M, 5M)
    b_fused = jnp.concatenate(
        [bxf[0:M], bxf[M:2 * M], bxf[2 * M:3 * M],
         bxf[2 * M:3 * M], bxf[3 * M:4 * M]]).reshape(1, 5 * M)      # (1, 5M)

    vmem = pl.BlockSpec(memory_space=pltpu.MemorySpace.VMEM)
    hc = pl.pallas_call(
        _tree_lstm_kernel,
        out_shape=jax.ShapeDtypeStruct((S, B_pad, 2 * M), jnp.float32),
        in_specs=[vmem, vmem, vmem, vmem, vmem, vmem],
        out_specs=vmem,
    )(xf, mask3, lm_t, rm_t, w_fused, b_fused)

    # Keep the h half, drop batch padding, match torch return shape (B, S, D).
    return jnp.transpose(hc[:, :B, :M], (1, 0, 2))


# ----------------------------------------------------------------------------
# Pure-JAX reference mirroring the PyTorch module (for correctness check).
# ----------------------------------------------------------------------------
def reference_forward(x, x_mask, x_left_mask, x_right_mask, wx, bx, wl, wr):
    S, B, D = x.shape
    M = D
    h = jnp.zeros((B, S, M), jnp.float32)
    c = jnp.zeros((B, S, M), jnp.float32)
    for step in range(S):
        inp = x[step]
        lh = jnp.sum(x_left_mask[step][:, :, None] * h, axis=1)
        rh = jnp.sum(x_right_mask[step][:, :, None] * h, axis=1)
        lc = jnp.sum(x_left_mask[step][:, :, None] * c, axis=1)
        rc = jnp.sum(x_right_mask[step][:, :, None] * c, axis=1)

        xz = inp @ wx + bx[None, :]
        lz = lh @ wl
        rz = rh @ wr
        u = jnp.tanh(xz[:, 0 * M:1 * M] + lz[:, 0 * M:1 * M] + rz[:, 0 * M:1 * M])
        i = jax.nn.sigmoid(xz[:, 1 * M:2 * M] + lz[:, 1 * M:2 * M] + rz[:, 1 * M:2 * M])
        lf = jax.nn.sigmoid(xz[:, 2 * M:3 * M] + lz[:, 2 * M:3 * M] + rz[:, 2 * M:3 * M])
        rf = jax.nn.sigmoid(xz[:, 2 * M:3 * M] + lz[:, 3 * M:4 * M] + rz[:, 3 * M:4 * M])
        o = jax.nn.sigmoid(xz[:, 3 * M:4 * M] + lz[:, 4 * M:5 * M] + rz[:, 4 * M:5 * M])
        step_c = i * u + lf * lc + rf * rc
        step_h = o * jnp.tanh(step_c)

        new_h = h.at[:, step, :].set(step_h)
        new_c = c.at[:, step, :].set(step_c)
        m = x_mask[step][:, None, None]
        h = m * new_h + (1.0 - m) * h
        c = m * new_c + (1.0 - m) * c
    return h


# ----------------------------------------------------------------------------
# Deterministic parameter init (orthogonal like ortho_weight in the module).
# ----------------------------------------------------------------------------
def _ortho(key, n):
    w = jax.random.normal(key, (n, n), dtype=jnp.float32)
    q, _ = jnp.linalg.qr(w)
    return q.astype(jnp.float32)


def make_params(key, in_dim, mem_dim):
    assert in_dim == mem_dim, "module implicitly requires in_dim == mem_dim"
    keys = jax.random.split(key, 15)
    # input projections: cx(u), ix(i), fx(f), ox(o)
    wx = jnp.concatenate([_ortho(keys[k], in_dim) for k in range(4)], axis=1)  # (D, 4M)
    bx = jax.random.uniform(keys[4], (4 * mem_dim,), jnp.float32,
                            minval=-1.0 / math.sqrt(in_dim),
                            maxval=1.0 / math.sqrt(in_dim))
    # left-hidden projections: ulh, ilh, lflh, rflh, olh
    wl = jnp.concatenate([_ortho(keys[5 + k], mem_dim) for k in range(5)], axis=1)  # (M, 5M)
    # right-hidden projections: urh, irh, lfrh, rfrh, orh
    wr = jnp.concatenate([_ortho(keys[10 + k], mem_dim) for k in range(5)], axis=1)  # (M, 5M)
    return wx, bx, wl, wr


if __name__ == "__main__":
    S, B, D = 8, 4, 32        # steps, batch, in_dim == mem_dim
    key = jax.random.PRNGKey(0)
    k_x, k_m, k_lm, k_rm, k_w = jax.random.split(key, 5)

    x = jax.random.normal(k_x, (S, B, D), dtype=jnp.float32)
    x_mask = (jax.random.uniform(k_m, (S, B)) > 0.3).astype(jnp.float32)
    x_left_mask = (jax.random.uniform(k_lm, (S, B, S)) > 0.5).astype(jnp.float32)
    x_right_mask = (jax.random.uniform(k_rm, (S, B, S)) > 0.5).astype(jnp.float32)

    wx, bx, wl, wr = make_params(k_w, D, D)

    run = jax.jit(binary_tree_lstm_forward)
    out = jax.block_until_ready(run(x, x_mask, x_left_mask, x_right_mask, wx, bx, wl, wr))

    ref = reference_forward(x, x_mask, x_left_mask, x_right_mask, wx, bx, wl, wr)
    assert out.shape == (B, S, D)
    err = jnp.max(jnp.abs(out - ref))
    assert jnp.allclose(out, ref, rtol=1e-4, atol=1e-4), f"max abs err {err}"

    print("KERNEL_OK")
</pallas_src>

<mosaic_0001>
module attributes {stable_mosaic.version = 11 : i64} {
  func.func @_tree_lstm_kernel(%arg0: memref<8x8x32xf32, #tpu.memory_space<vmem>>, %arg1: memref<8x8x1xf32, #tpu.memory_space<vmem>>, %arg2: memref<8x8x8xf32, #tpu.memory_space<vmem>>, %arg3: memref<8x8x8xf32, #tpu.memory_space<vmem>>, %arg4: memref<96x160xf32, #tpu.memory_space<vmem>>, %arg5: memref<1x160xf32, #tpu.memory_space<vmem>>, %arg6: memref<8x8x64xf32, #tpu.memory_space<vmem>>) attributes {dimension_semantics = [], scalar_prefetch = 0 : i64, scratch_operands = 0 : i64, tpu.core_type = #tpu.core_type<tc>} {
    %cst = arith.constant 0.000000e+00 : f32
    %0 = vector.broadcast %cst : f32 to vector<8x8x64xf32>
    %c0 = arith.constant 0 : index
    %c0_0 = arith.constant 0 : index
    %c0_1 = arith.constant 0 : index
    %1 = vector.load %arg6[%c0, %c0_0, %c0_1] : memref<8x8x64xf32, #tpu.memory_space<vmem>>, vector<8x8x64xf32>
    tpu.vector_store %arg6[%c0, %c0_0, %c0_1], %0 {strides = array<i32>} : memref<8x8x64xf32, #tpu.memory_space<vmem>>, vector<8x8x64xf32>,
    %c0_i32 = arith.constant 0 : i32
    %2 = arith.index_cast %c0_i32 : i32 to index
    %c0_2 = arith.constant 0 : index
    %c0_3 = arith.constant 0 : index
    %3 = vector.load %arg0[%2, %c0_2, %c0_3] : memref<8x8x32xf32, #tpu.memory_space<vmem>>, vector<1x8x32xf32>
    %4 = vector.shape_cast %3 : vector<1x8x32xf32> to vector<8x32xf32>
    %5 = arith.index_cast %c0_i32 : i32 to index
    %c0_4 = arith.constant 0 : index
    %c0_5 = arith.constant 0 : index
    %6 = vector.load %arg1[%5, %c0_4, %c0_5] : memref<8x8x1xf32, #tpu.memory_space<vmem>>, vector<1x8x1xf32>
    %7 = vector.shape_cast %6 : vector<1x8x1xf32> to vector<8x1xf32>
    %8 = arith.index_cast %c0_i32 : i32 to index
    %c0_6 = arith.constant 0 : index
    %c0_7 = arith.constant 0 : index
    %9 = vector.load %arg2[%8, %c0_6, %c0_7] : memref<8x8x8xf32, #tpu.memory_space<vmem>>, vector<1x8x8xf32>
    %10 = vector.shape_cast %9 : vector<1x8x8xf32> to vector<8x8xf32>
    %11 = arith.index_cast %c0_i32 : i32 to index
    %c0_8 = arith.constant 0 : index
    %c0_9 = arith.constant 0 : index
    %12 = vector.load %arg3[%11, %c0_8, %c0_9] : memref<8x8x8xf32, #tpu.memory_space<vmem>>, vector<1x8x8xf32>
    %13 = vector.shape_cast %12 : vector<1x8x8xf32> to vector<8x8xf32>
    %c0_10 = arith.constant 0 : index
    %c0_11 = arith.constant 0 : index
    %c0_12 = arith.constant 0 : index
    %14 = vector.load %arg6[%c0_10, %c0_11, %c0_12] : memref<8x8x64xf32, #tpu.memory_space<vmem>>, vector<8x8x64xf32>
    %15 = vector.shape_cast %10 : vector<8x8xf32> to vector<8x8x1xf32>
    %16 = vector.broadcast %15 : vector<8x8x1xf32> to vector<8x8x64xf32>
    %17 = arith.mulf %16, %14 : vector<8x8x64xf32>
    %cst_13 = arith.constant dense<0.000000e+00> : vector<8x64xf32>
    %18 = vector.multi_reduction <add>, %17, %cst_13 [0] : vector<8x8x64xf32> to vector<8x64xf32>
    %19 = vector.shape_cast %13 : vector<8x8xf32> to vector<8x8x1xf32>
    %20 = vector.broadcast %19 : vector<8x8x1xf32> to vector<8x8x64xf32>
    %21 = arith.mulf %20, %14 : vector<8x8x64xf32>
    %cst_14 = arith.constant dense<0.000000e+00> : vector<8x64xf32>
    %22 = vector.multi_reduction <add>, %21, %cst_14 [0] : vector<8x8x64xf32> to vector<8x64xf32>
    %23 = vector.extract_strided_slice %18 {offsets = [0, 0], sizes = [8, 32], strides = [1, 1]} : vector<8x64xf32> to vector<8x32xf32>
    %24 = vector.extract_strided_slice %18 {offsets = [0, 32], sizes = [8, 32], strides = [1, 1]} : vector<8x64xf32> to vector<8x32xf32>
    %25 = vector.extract_strided_slice %22 {offsets = [0, 0], sizes = [8, 32], strides = [1, 1]} : vector<8x64xf32> to vector<8x32xf32>
    %26 = vector.extract_strided_slice %22 {offsets = [0, 32], sizes = [8, 32], strides = [1, 1]} : vector<8x64xf32> to vector<8x32xf32>
    %27 = tpu.concatenate %4, %23, %25 in 1 : vector<8x32xf32>, vector<8x32xf32>, vector<8x32xf32> -> vector<8x96xf32>
    %c0_15 = arith.constant 0 : index
    %c0_16 = arith.constant 0 : index
    %28 = vector.load %arg4[%c0_15, %c0_16] : memref<96x160xf32, #tpu.memory_space<vmem>>, vector<96x160xf32>
    %cst_17 = arith.constant dense<0.000000e+00> : vector<8x160xf32>
    %29 = tpu.matmul %27, %28, %cst_17 {dimension_numbers = #tpu.dot_dimension_numbers<[1], [0], [0], [1], [0, 0, 1, 1], [], []>} : vector<8x96xf32>, vector<96x160xf32>, vector<8x160xf32> -> vector<8x160xf32>
    %c0_18 = arith.constant 0 : index
    %c0_19 = arith.constant 0 : index
    %30 = vector.load %arg5[%c0_18, %c0_19] : memref<1x160xf32, #tpu.memory_space<vmem>>, vector<1x160xf32>
    %31 = vector.broadcast %30 : vector<1x160xf32> to vector<8x160xf32>
    %32 = arith.addf %29, %31 : vector<8x160xf32>
    %33 = vector.extract_strided_slice %32 {offsets = [0, 0], sizes = [8, 32], strides = [1, 1]} : vector<8x160xf32> to vector<8x32xf32>
    %34 = math.tanh %33 : vector<8x32xf32>
    %35 = vector.extract_strided_slice %32 {offsets = [0, 32], sizes = [8, 32], strides = [1, 1]} : vector<8x160xf32> to vector<8x32xf32>
    %36 = arith.negf %35 : vector<8x32xf32>
    %37 = math.exp %36 : vector<8x32xf32>
    %cst_20 = arith.constant 1.000000e+00 : f32
    %38 = vector.broadcast %cst_20 : f32 to vector<8x32xf32>
    %39 = arith.addf %38, %37 : vector<8x32xf32>
    %40 = arith.divf %38, %39 : vector<8x32xf32>
    %41 = vector.extract_strided_slice %32 {offsets = [0, 64], sizes = [8, 32], strides = [1, 1]} : vector<8x160xf32> to vector<8x32xf32>
    %42 = arith.negf %41 : vector<8x32xf32>
    %43 = math.exp %42 : vector<8x32xf32>
    %cst_21 = arith.constant 1.000000e+00 : f32
    %44 = vector.broadcast %cst_21 : f32 to vector<8x32xf32>
    %45 = arith.addf %44, %43 : vector<8x32xf32>
    %46 = arith.divf %44, %45 : vector<8x32xf32>
    %47 = vector.extract_strided_slice %32 {offsets = [0, 96], sizes = [8, 32], strides = [1, 1]} : vector<8x160xf32> to vector<8x32xf32>
    %48 = arith.negf %47 : vector<8x32xf32>
    %49 = math.exp %48 : vector<8x32xf32>
    %cst_22 = arith.constant 1.000000e+00 : f32
    %50 = vector.broadcast %cst_22 : f32 to vector<8x32xf32>
    %51 = arith.addf %50, %49 : vector<8x32xf32>
    %52 = arith.divf %50, %51 : vector<8x32xf32>
    %53 = vector.extract_strided_slice %32 {offsets = [0, 128], sizes = [8, 32], strides = [1, 1]} : vector<8x160xf32> to vector<8x32xf32>
    %54 = arith.negf %53 : vector<8x32xf32>
    %55 = math.exp %54 : vector<8x32xf32>
    %cst_23 = arith.constant 1.000000e+00 : f32
    %56 = vector.broadcast %cst_23 : f32 to vector<8x32xf32>
    %57 = arith.addf %56, %55 : vector<8x32xf32>
    %58 = arith.divf %56, %57 : vector<8x32xf32>
    %59 = arith.mulf %40, %34 : vector<8x32xf32>
    %60 = arith.mulf %46, %24 : vector<8x32xf32>
    %61 = arith.addf %59, %60 : vector<8x32xf32>
    %62 = arith.mulf %52, %26 : vector<8x32xf32>
    %63 = arith.addf %61, %62 : vector<8x32xf32>
    %64 = math.tanh %63 : vector<8x32xf32>
    %65 = arith.mulf %58, %64 : vector<8x32xf32>
    %66 = tpu.concatenate %65, %63 in 1 : vector<8x32xf32>, vector<8x32xf32> -> vector<8x64xf32>
    %67 = vector.broadcast %7 : vector<8x1xf32> to vector<8x64xf32>
    %68 = arith.mulf %67, %66 : vector<8x64xf32>
    %69 = arith.index_cast %c0_i32 : i32 to index
    %c0_24 = arith.constant 0 : index
    %c0_25 = arith.constant 0 : index
    %70 = vector.load %arg6[%69, %c0_24, %c0_25] : memref<8x8x64xf32, #tpu.memory_space<vmem>>, vector<1x8x64xf32>
    %71 = vector.shape_cast %70 : vector<1x8x64xf32> to vector<8x64xf32>
    %72 = vector.shape_cast %68 : vector<8x64xf32> to vector<1x8x64xf32>
    tpu.vector_store %arg6[%69, %c0_24, %c0_25], %72 {strides = array<i32>} : memref<8x8x64xf32, #tpu.memory_space<vmem>>, vector<1x8x64xf32>,
    %c1_i32 = arith.constant 1 : i32
    %73 = arith.index_cast %c1_i32 : i32 to index
    %c0_26 = arith.constant 0 : index
    %c0_27 = arith.constant 0 : index
    %74 = vector.load %arg0[%73, %c0_26, %c0_27] : memref<8x8x32xf32, #tpu.memory_space<vmem>>, vector<1x8x32xf32>
    %75 = vector.shape_cast %74 : vector<1x8x32xf32> to vector<8x32xf32>
    %76 = arith.index_cast %c1_i32 : i32 to index
    %c0_28 = arith.constant 0 : index
    %c0_29 = arith.constant 0 : index
    %77 = vector.load %arg1[%76, %c0_28, %c0_29] : memref<8x8x1xf32, #tpu.memory_space<vmem>>, vector<1x8x1xf32>
    %78 = vector.shape_cast %77 : vector<1x8x1xf32> to vector<8x1xf32>
    %79 = arith.index_cast %c1_i32 : i32 to index
    %c0_30 = arith.constant 0 : index
    %c0_31 = arith.constant 0 : index
    %80 = vector.load %arg2[%79, %c0_30, %c0_31] : memref<8x8x8xf32, #tpu.memory_space<vmem>>, vector<1x8x8xf32>
    %81 = vector.shape_cast %80 : vector<1x8x8xf32> to vector<8x8xf32>
    %82 = arith.index_cast %c1_i32 : i32 to index
    %c0_32 = arith.constant 0 : index
    %c0_33 = arith.constant 0 : index
    %83 = vector.load %arg3[%82, %c0_32, %c0_33] : memref<8x8x8xf32, #tpu.memory_space<vmem>>, vector<1x8x8xf32>
    %84 = vector.shape_cast %83 : vector<1x8x8xf32> to vector<8x8xf32>
    %c0_34 = arith.constant 0 : index
    %c0_35 = arith.constant 0 : index
    %c0_36 = arith.constant 0 : index
    %85 = vector.load %arg6[%c0_34, %c0_35, %c0_36] : memref<8x8x64xf32, #tpu.memory_space<vmem>>, vector<8x8x64xf32>
    %86 = vector.shape_cast %81 : vector<8x8xf32> to vector<8x8x1xf32>
    %87 = vector.broadcast %86 : vector<8x8x1xf32> to vector<8x8x64xf32>
    %88 = arith.mulf %87, %85 : vector<8x8x64xf32>
    %cst_37 = arith.constant dense<0.000000e+00> : vector<8x64xf32>
    %89 = vector.multi_reduction <add>, %88, %cst_37 [0] : vector<8x8x64xf32> to vector<8x64xf32>
    %90 = vector.shape_cast %84 : vector<8x8xf32> to vector<8x8x1xf32>
    %91 = vector.broadcast %90 : vector<8x8x1xf32> to vector<8x8x64xf32>
    %92 = arith.mulf %91, %85 : vector<8x8x64xf32>
    %cst_38 = arith.constant dense<0.000000e+00> : vector<8x64xf32>
    %93 = vector.multi_reduction <add>, %92, %cst_38 [0] : vector<8x8x64xf32> to vector<8x64xf32>
    %94 = vector.extract_strided_slice %89 {offsets = [0, 0], sizes = [8, 32], strides = [1, 1]} : vector<8x64xf32> to vector<8x32xf32>
    %95 = vector.extract_strided_slice %89 {offsets = [0, 32], sizes = [8, 32], strides = [1, 1]} : vector<8x64xf32> to vector<8x32xf32>
    %96 = vector.extract_strided_slice %93 {offsets = [0, 0], sizes = [8, 32], strides = [1, 1]} : vector<8x64xf32> to vector<8x32xf32>
    %97 = vector.extract_strided_slice %93 {offsets = [0, 32], sizes = [8, 32], strides = [1, 1]} : vector<8x64xf32> to vector<8x32xf32>
    %98 = tpu.concatenate %75, %94, %96 in 1 : vector<8x32xf32>, vector<8x32xf32>, vector<8x32xf32> -> vector<8x96xf32>
    %c0_39 = arith.constant 0 : index
    %c0_40 = arith.constant 0 : index
    %99 = vector.load %arg4[%c0_39, %c0_40] : memref<96x160xf32, #tpu.memory_space<vmem>>, vector<96x160xf32>
    %cst_41 = arith.constant dense<0.000000e+00> : vector<8x160xf32>
    %100 = tpu.matmul %98, %99, %cst_41 {dimension_numbers = #tpu.dot_dimension_numbers<[1], [0], [0], [1], [0, 0, 1, 1], [], []>} : vector<8x96xf32>, vector<96x160xf32>, vector<8x160xf32> -> vector<8x160xf32>
    %c0_42 = arith.constant 0 : index
    %c0_43 = arith.constant 0 : index
    %101 = vector.load %arg5[%c0_42, %c0_43] : memref<1x160xf32, #tpu.memory_space<vmem>>, vector<1x160xf32>
    %102 = vector.broadcast %101 : vector<1x160xf32> to vector<8x160xf32>
    %103 = arith.addf %100, %102 : vector<8x160xf32>
    %104 = vector.extract_strided_slice %103 {offsets = [0, 0], sizes = [8, 32], strides = [1, 1]} : vector<8x160xf32> to vector<8x32xf32>
    %105 = math.tanh %104 : vector<8x32xf32>
    %106 = vector.extract_strided_slice %103 {offsets = [0, 32], sizes = [8, 32], strides = [1, 1]} : vector<8x160xf32> to vector<8x32xf32>
    %107 = arith.negf %106 : vector<8x32xf32>
    %108 = math.exp %107 : vector<8x32xf32>
    %cst_44 = arith.constant 1.000000e+00 : f32
    %109 = vector.broadcast %cst_44 : f32 to vector<8x32xf32>
    %110 = arith.addf %109, %108 : vector<8x32xf32>
    %111 = arith.divf %109, %110 : vector<8x32xf32>
    %112 = vector.extract_strided_slice %103 {offsets = [0, 64], sizes = [8, 32], strides = [1, 1]} : vector<8x160xf32> to vector<8x32xf32>
    %113 = arith.negf %112 : vector<8x32xf32>
    %114 = math.exp %113 : vector<8x32xf32>
    %cst_45 = arith.constant 1.000000e+00 : f32
    %115 = vector.broadcast %cst_45 : f32 to vector<8x32xf32>
    %116 = arith.addf %115, %114 : vector<8x32xf32>
    %117 = arith.divf %115, %116 : vector<8x32xf32>
    %118 = vector.extract_strided_slice %103 {offsets = [0, 96], sizes = [8, 32], strides = [1, 1]} : vector<8x160xf32> to vector<8x32xf32>
    %119 = arith.negf %118 : vector<8x32xf32>
    %120 = math.exp %119 : vector<8x32xf32>
    %cst_46 = arith.constant 1.000000e+00 : f32
    %121 = vector.broadcast %cst_46 : f32 to vector<8x32xf32>
    %122 = arith.addf %121, %120 : vector<8x32xf32>
    %123 = arith.divf %121, %122 : vector<8x32xf32>
    %124 = vector.extract_strided_slice %103 {offsets = [0, 128], sizes = [8, 32], strides = [1, 1]} : vector<8x160xf32> to vector<8x32xf32>
    %125 = arith.negf %124 : vector<8x32xf32>
    %126 = math.exp %125 : vector<8x32xf32>
    %cst_47 = arith.constant 1.000000e+00 : f32
    %127 = vector.broadcast %cst_47 : f32 to vector<8x32xf32>
    %128 = arith.addf %127, %126 : vector<8x32xf32>
    %129 = arith.divf %127, %128 : vector<8x32xf32>
    %130 = arith.mulf %111, %105 : vector<8x32xf32>
    %131 = arith.mulf %117, %95 : vector<8x32xf32>
    %132 = arith.addf %130, %131 : vector<8x32xf32>
    %133 = arith.mulf %123, %97 : vector<8x32xf32>
    %134 = arith.addf %132, %133 : vector<8x32xf32>
    %135 = math.tanh %134 : vector<8x32xf32>
    %136 = arith.mulf %129, %135 : vector<8x32xf32>
    %137 = tpu.concatenate %136, %134 in 1 : vector<8x32xf32>, vector<8x32xf32> -> vector<8x64xf32>
    %138 = vector.broadcast %78 : vector<8x1xf32> to vector<8x64xf32>
    %139 = arith.mulf %138, %137 : vector<8x64xf32>
    %140 = arith.index_cast %c1_i32 : i32 to index
    %c0_48 = arith.constant 0 : index
    %c0_49 = arith.constant 0 : index
    %141 = vector.load %arg6[%140, %c0_48, %c0_49] : memref<8x8x64xf32, #tpu.memory_space<vmem>>, vector<1x8x64xf32>
    %142 = vector.shape_cast %141 : vector<1x8x64xf32> to vector<8x64xf32>
    %143 = vector.shape_cast %139 : vector<8x64xf32> to vector<1x8x64xf32>
    tpu.vector_store %arg6[%140, %c0_48, %c0_49], %143 {strides = array<i32>} : memref<8x8x64xf32, #tpu.memory_space<vmem>>, vector<1x8x64xf32>,
    %c2_i32 = arith.constant 2 : i32
    %144 = arith.index_cast %c2_i32 : i32 to index
    %c0_50 = arith.constant 0 : index
    %c0_51 = arith.constant 0 : index
    %145 = vector.load %arg0[%144, %c0_50, %c0_51] : memref<8x8x32xf32, #tpu.memory_space<vmem>>, vector<1x8x32xf32>
    %146 = vector.shape_cast %145 : vector<1x8x32xf32> to vector<8x32xf32>
    %147 = arith.index_cast %c2_i32 : i32 to index
    %c0_52 = arith.constant 0 : index
    %c0_53 = arith.constant 0 : index
    %148 = vector.load %arg1[%147, %c0_52, %c0_53] : memref<8x8x1xf32, #tpu.memory_space<vmem>>, vector<1x8x1xf32>
    %149 = vector.shape_cast %148 : vector<1x8x1xf32> to vector<8x1xf32>
    %150 = arith.index_cast %c2_i32 : i32 to index
    %c0_54 = arith.constant 0 : index
    %c0_55 = arith.constant 0 : index
    %151 = vector.load %arg2[%150, %c0_54, %c0_55] : memref<8x8x8xf32, #tpu.memory_space<vmem>>, vector<1x8x8xf32>
    %152 = vector.shape_cast %151 : vector<1x8x8xf32> to vector<8x8xf32>
    %153 = arith.index_cast %c2_i32 : i32 to index
    %c0_56 = arith.constant 0 : index
    %c0_57 = arith.constant 0 : index
    %154 = vector.load %arg3[%153, %c0_56, %c0_57] : memref<8x8x8xf32, #tpu.memory_space<vmem>>, vector<1x8x8xf32>
    %155 = vector.shape_cast %154 : vector<1x8x8xf32> to vector<8x8xf32>
    %c0_58 = arith.constant 0 : index
    %c0_59 = arith.constant 0 : index
    %c0_60 = arith.constant 0 : index
    %156 = vector.load %arg6[%c0_58, %c0_59, %c0_60] : memref<8x8x64xf32, #tpu.memory_space<vmem>>, vector<8x8x64xf32>
    %157 = vector.shape_cast %152 : vector<8x8xf32> to vector<8x8x1xf32>
    %158 = vector.broadcast %157 : vector<8x8x1xf32> to vector<8x8x64xf32>
    %159 = arith.mulf %158, %156 : vector<8x8x64xf32>
    %cst_61 = arith.constant dense<0.000000e+00> : vector<8x64xf32>
    %160 = vector.multi_reduction <add>, %159, %cst_61 [0] : vector<8x8x64xf32> to vector<8x64xf32>
    %161 = vector.shape_cast %155 : vector<8x8xf32> to vector<8x8x1xf32>
    %162 = vector.broadcast %161 : vector<8x8x1xf32> to vector<8x8x64xf32>
    %163 = arith.mulf %162, %156 : vector<8x8x64xf32>
    %cst_62 = arith.constant dense<0.000000e+00> : vector<8x64xf32>
    %164 = vector.multi_reduction <add>, %163, %cst_62 [0] : vector<8x8x64xf32> to vector<8x64xf32>
    %165 = vector.extract_strided_slice %160 {offsets = [0, 0], sizes = [8, 32], strides = [1, 1]} : vector<8x64xf32> to vector<8x32xf32>
    %166 = vector.extract_strided_slice %160 {offsets = [0, 32], sizes = [8, 32], strides = [1, 1]} : vector<8x64xf32> to vector<8x32xf32>
    %167 = vector.extract_strided_slice %164 {offsets = [0, 0], sizes = [8, 32], strides = [1, 1]} : vector<8x64xf32> to vector<8x32xf32>
    %168 = vector.extract_strided_slice %164 {offsets = [0, 32], sizes = [8, 32], strides = [1, 1]} : vector<8x64xf32> to vector<8x32xf32>
    %169 = tpu.concatenate %146, %165, %167 in 1 : vector<8x32xf32>, vector<8x32xf32>, vector<8x32xf32> -> vector<8x96xf32>
    %c0_63 = arith.constant 0 : index
    %c0_64 = arith.constant 0 : index
    %170 = vector.load %arg4[%c0_63, %c0_64] : memref<96x160xf32, #tpu.memory_space<vmem>>, vector<96x160xf32>
    %cst_65 = arith.constant dense<0.000000e+00> : vector<8x160xf32>
    %171 = tpu.matmul %169, %170, %cst_65 {dimension_numbers = #tpu.dot_dimension_numbers<[1], [0], [0], [1], [0, 0, 1, 1], [], []>} : vector<8x96xf32>, vector<96x160xf32>, vector<8x160xf32> -> vector<8x160xf32>
    %c0_66 = arith.constant 0 : index
    %c0_67 = arith.constant 0 : index
    %172 = vector.load %arg5[%c0_66, %c0_67] : memref<1x160xf32, #tpu.memory_space<vmem>>, vector<1x160xf32>
    %173 = vector.broadcast %172 : vector<1x160xf32> to vector<8x160xf32>
    %174 = arith.addf %171, %173 : vector<8x160xf32>
    %175 = vector.extract_strided_slice %174 {offsets = [0, 0], sizes = [8, 32], strides = [1, 1]} : vector<8x160xf32> to vector<8x32xf32>
    %176 = math.tanh %175 : vector<8x32xf32>
    %177 = vector.extract_strided_slice %174 {offsets = [0, 32], sizes = [8, 32], strides = [1, 1]} : vector<8x160xf32> to vector<8x32xf32>
    %178 = arith.negf %177 : vector<8x32xf32>
    %179 = math.exp %178 : vector<8x32xf32>
    %cst_68 = arith.constant 1.000000e+00 : f32
    %180 = vector.broadcast %cst_68 : f32 to vector<8x32xf32>
    %181 = arith.addf %180, %179 : vector<8x32xf32>
    %182 = arith.divf %180, %181 : vector<8x32xf32>
    %183 = vector.extract_strided_slice %174 {offsets = [0, 64], sizes = [8, 32], strides = [1, 1]} : vector<8x160xf32> to vector<8x32xf32>
    %184 = arith.negf %183 : vector<8x32xf32>
    %185 = math.exp %184 : vector<8x32xf32>
    %cst_69 = arith.constant 1.000000e+00 : f32
    %186 = vector.broadcast %cst_69 : f32 to vector<8x32xf32>
    %187 = arith.addf %186, %185 : vector<8x32xf32>
    %188 = arith.divf %186, %187 : vector<8x32xf32>
    %189 = vector.extract_strided_slice %174 {offsets = [0, 96], sizes = [8, 32], strides = [1, 1]} : vector<8x160xf32> to vector<8x32xf32>
    %190 = arith.negf %189 : vector<8x32xf32>
    %191 = math.exp %190 : vector<8x32xf32>
    %cst_70 = arith.constant 1.000000e+00 : f32
    %192 = vector.broadcast %cst_70 : f32 to vector<8x32xf32>
    %193 = arith.addf %192, %191 : vector<8x32xf32>
    %194 = arith.divf %192, %193 : vector<8x32xf32>
    %195 = vector.extract_strided_slice %174 {offsets = [0, 128], sizes = [8, 32], strides = [1, 1]} : vector<8x160xf32> to vector<8x32xf32>
    %196 = arith.negf %195 : vector<8x32xf32>
    %197 = math.exp %196 : vector<8x32xf32>
    %cst_71 = arith.constant 1.000000e+00 : f32
    %198 = vector.broadcast %cst_71 : f32 to vector<8x32xf32>
    %199 = arith.addf %198, %197 : vector<8x32xf32>
    %200 = arith.divf %198, %199 : vector<8x32xf32>
    %201 = arith.mulf %182, %176 : vector<8x32xf32>
    %202 = arith.mulf %188, %166 : vector<8x32xf32>
    %203 = arith.addf %201, %202 : vector<8x32xf32>
    %204 = arith.mulf %194, %168 : vector<8x32xf32>
    %205 = arith.addf %203, %204 : vector<8x32xf32>
    %206 = math.tanh %205 : vector<8x32xf32>
    %207 = arith.mulf %200, %206 : vector<8x32xf32>
    %208 = tpu.concatenate %207, %205 in 1 : vector<8x32xf32>, vector<8x32xf32> -> vector<8x64xf32>
    %209 = vector.broadcast %149 : vector<8x1xf32> to vector<8x64xf32>
    %210 = arith.mulf %209, %208 : vector<8x64xf32>
    %211 = arith.index_cast %c2_i32 : i32 to index
    %c0_72 = arith.constant 0 : index
    %c0_73 = arith.constant 0 : index
    %212 = vector.load %arg6[%211, %c0_72, %c0_73] : memref<8x8x64xf32, #tpu.memory_space<vmem>>, vector<1x8x64xf32>
    %213 = vector.shape_cast %212 : vector<1x8x64xf32> to vector<8x64xf32>
    %214 = vector.shape_cast %210 : vector<8x64xf32> to vector<1x8x64xf32>
    tpu.vector_store %arg6[%211, %c0_72, %c0_73], %214 {strides = array<i32>} : memref<8x8x64xf32, #tpu.memory_space<vmem>>, vector<1x8x64xf32>,
    %c3_i32 = arith.constant 3 : i32
    %215 = arith.index_cast %c3_i32 : i32 to index
    %c0_74 = arith.constant 0 : index
    %c0_75 = arith.constant 0 : index
    %216 = vector.load %arg0[%215, %c0_74, %c0_75] : memref<8x8x32xf32, #tpu.memory_space<vmem>>, vector<1x8x32xf32>
    %217 = vector.shape_cast %216 : vector<1x8x32xf32> to vector<8x32xf32>
    %218 = arith.index_cast %c3_i32 : i32 to index
    %c0_76 = arith.constant 0 : index
    %c0_77 = arith.constant 0 : index
    %219 = vector.load %arg1[%218, %c0_76, %c0_77] : memref<8x8x1xf32, #tpu.memory_space<vmem>>, vector<1x8x1xf32>
    %220 = vector.shape_cast %219 : vector<1x8x1xf32> to vector<8x1xf32>
    %221 = arith.index_cast %c3_i32 : i32 to index
    %c0_78 = arith.constant 0 : index
    %c0_79 = arith.constant 0 : index
    %222 = vector.load %arg2[%221, %c0_78, %c0_79] : memref<8x8x8xf32, #tpu.memory_space<vmem>>, vector<1x8x8xf32>
    %223 = vector.shape_cast %222 : vector<1x8x8xf32> to vector<8x8xf32>
    %224 = arith.index_cast %c3_i32 : i32 to index
    %c0_80 = arith.constant 0 : index
    %c0_81 = arith.constant 0 : index
    %225 = vector.load %arg3[%224, %c0_80, %c0_81] : memref<8x8x8xf32, #tpu.memory_space<vmem>>, vector<1x8x8xf32>
    %226 = vector.shape_cast %225 : vector<1x8x8xf32> to vector<8x8xf32>
    %c0_82 = arith.constant 0 : index
    %c0_83 = arith.constant 0 : index
    %c0_84 = arith.constant 0 : index
    %227 = vector.load %arg6[%c0_82, %c0_83, %c0_84] : memref<8x8x64xf32, #tpu.memory_space<vmem>>, vector<8x8x64xf32>
    %228 = vector.shape_cast %223 : vector<8x8xf32> to vector<8x8x1xf32>
    %229 = vector.broadcast %228 : vector<8x8x1xf32> to vector<8x8x64xf32>
    %230 = arith.mulf %229, %227 : vector<8x8x64xf32>
    %cst_85 = arith.constant dense<0.000000e+00> : vector<8x64xf32>
    %231 = vector.multi_reduction <add>, %230, %cst_85 [0] : vector<8x8x64xf32> to vector<8x64xf32>
    %232 = vector.shape_cast %226 : vector<8x8xf32> to vector<8x8x1xf32>
    %233 = vector.broadcast %232 : vector<8x8x1xf32> to vector<8x8x64xf32>
    %234 = arith.mulf %233, %227 : vector<8x8x64xf32>
    %cst_86 = arith.constant dense<0.000000e+00> : vector<8x64xf32>
    %235 = vector.multi_reduction <add>, %234, %cst_86 [0] : vector<8x8x64xf32> to vector<8x64xf32>
    %236 = vector.extract_strided_slice %231 {offsets = [0, 0], sizes = [8, 32], strides = [1, 1]} : vector<8x64xf32> to vector<8x32xf32>
    %237 = vector.extract_strided_slice %231 {offsets = [0, 32], sizes = [8, 32], strides = [1, 1]} : vector<8x64xf32> to vector<8x32xf32>
    %238 = vector.extract_strided_slice %235 {offsets = [0, 0], sizes = [8, 32], strides = [1, 1]} : vector<8x64xf32> to vector<8x32xf32>
    %239 = vector.extract_strided_slice %235 {offsets = [0, 32], sizes = [8, 32], strides = [1, 1]} : vector<8x64xf32> to vector<8x32xf32>
    %240 = tpu.concatenate %217, %236, %238 in 1 : vector<8x32xf32>, vector<8x32xf32>, vector<8x32xf32> -> vector<8x96xf32>
    %c0_87 = arith.constant 0 : index
    %c0_88 = arith.constant 0 : index
    %241 = vector.load %arg4[%c0_87, %c0_88] : memref<96x160xf32, #tpu.memory_space<vmem>>, vector<96x160xf32>
    %cst_89 = arith.constant dense<0.000000e+00> : vector<8x160xf32>
    %242 = tpu.matmul %240, %241, %cst_89 {dimension_numbers = #tpu.dot_dimension_numbers<[1], [0], [0], [1], [0, 0, 1, 1], [], []>} : vector<8x96xf32>, vector<96x160xf32>, vector<8x160xf32> -> vector<8x160xf32>
    %c0_90 = arith.constant 0 : index
    %c0_91 = arith.constant 0 : index
    %243 = vector.load %arg5[%c0_90, %c0_91] : memref<1x160xf32, #tpu.memory_space<vmem>>, vector<1x160xf32>
    %244 = vector.broadcast %243 : vector<1x160xf32> to vector<8x160xf32>
    %245 = arith.addf %242, %244 : vector<8x160xf32>
    %246 = vector.extract_strided_slice %245 {offsets = [0, 0], sizes = [8, 32], strides = [1, 1]} : vector<8x160xf32> to vector<8x32xf32>
    %247 = math.tanh %246 : vector<8x32xf32>
    %248 = vector.extract_strided_slice %245 {offsets = [0, 32], sizes = [8, 32], strides = [1, 1]} : vector<8x160xf32> to vector<8x32xf32>
    %249 = arith.negf %248 : vector<8x32xf32>
    %250 = math.exp %249 : vector<8x32xf32>
    %cst_92 = arith.constant 1.000000e+00 : f32
    %251 = vector.broadcast %cst_92 : f32 to vector<8x32xf32>
    %252 = arith.addf %251, %250 : vector<8x32xf32>
    %253 = arith.divf %251, %252 : vector<8x32xf32>
    %254 = vector.extract_strided_slice %245 {offsets = [0, 64], sizes = [8, 32], strides = [1, 1]} : vector<8x160xf32> to vector<8x32xf32>
    %255 = arith.negf %254 : vector<8x32xf32>
    %256 = math.exp %255 : vector<8x32xf32>
    %cst_93 = arith.constant 1.000000e+00 : f32
    %257 = vector.broadcast %cst_93 : f32 to vector<8x32xf32>
    %258 = arith.addf %257, %256 : vector<8x32xf32>
    %259 = arith.divf %257, %258 : vector<8x32xf32>
    %260 = vector.extract_strided_slice %245 {offsets = [0, 96], sizes = [8, 32], strides = [1, 1]} : vector<8x160xf32> to vector<8x32xf32>
    %261 = arith.negf %260 : vector<8x32xf32>
    %262 = math.exp %261 : vector<8x32xf32>
    %cst_94 = arith.constant 1.000000e+00 : f32
    %263 = vector.broadcast %cst_94 : f32 to vector<8x32xf32>
    %264 = arith.addf %263, %262 : vector<8x32xf32>
    %265 = arith.divf %263, %264 : vector<8x32xf32>
    %266 = vector.extract_strided_slice %245 {offsets = [0, 128], sizes = [8, 32], strides = [1, 1]} : vector<8x160xf32> to vector<8x32xf32>
    %267 = arith.negf %266 : vector<8x32xf32>
    %268 = math.exp %267 : vector<8x32xf32>
    %cst_95 = arith.constant 1.000000e+00 : f32
    %269 = vector.broadcast %cst_95 : f32 to vector<8x32xf32>
    %270 = arith.addf %269, %268 : vector<8x32xf32>
    %271 = arith.divf %269, %270 : vector<8x32xf32>
    %272 = arith.mulf %253, %247 : vector<8x32xf32>
    %273 = arith.mulf %259, %237 : vector<8x32xf32>
    %274 = arith.addf %272, %273 : vector<8x32xf32>
    %275 = arith.mulf %265, %239 : vector<8x32xf32>
    %276 = arith.addf %274, %275 : vector<8x32xf32>
    %277 = math.tanh %276 : vector<8x32xf32>
    %278 = arith.mulf %271, %277 : vector<8x32xf32>
    %279 = tpu.concatenate %278, %276 in 1 : vector<8x32xf32>, vector<8x32xf32> -> vector<8x64xf32>
    %280 = vector.broadcast %220 : vector<8x1xf32> to vector<8x64xf32>
    %281 = arith.mulf %280, %279 : vector<8x64xf32>
    %282 = arith.index_cast %c3_i32 : i32 to index
    %c0_96 = arith.constant 0 : index
    %c0_97 = arith.constant 0 : index
    %283 = vector.load %arg6[%282, %c0_96, %c0_97] : memref<8x8x64xf32, #tpu.memory_space<vmem>>, vector<1x8x64xf32>
    %284 = vector.shape_cast %283 : vector<1x8x64xf32> to vector<8x64xf32>
    %285 = vector.shape_cast %281 : vector<8x64xf32> to vector<1x8x64xf32>
    tpu.vector_store %arg6[%282, %c0_96, %c0_97], %285 {strides = array<i32>} : memref<8x8x64xf32, #tpu.memory_space<vmem>>, vector<1x8x64xf32>,
    %c4_i32 = arith.constant 4 : i32
    %286 = arith.index_cast %c4_i32 : i32 to index
    %c0_98 = arith.constant 0 : index
    %c0_99 = arith.constant 0 : index
    %287 = vector.load %arg0[%286, %c0_98, %c0_99] : memref<8x8x32xf32, #tpu.memory_space<vmem>>, vector<1x8x32xf32>
    %288 = vector.shape_cast %287 : vector<1x8x32xf32> to vector<8x32xf32>
    %289 = arith.index_cast %c4_i32 : i32 to index
    %c0_100 = arith.constant 0 : index
    %c0_101 = arith.constant 0 : index
    %290 = vector.load %arg1[%289, %c0_100, %c0_101] : memref<8x8x1xf32, #tpu.memory_space<vmem>>, vector<1x8x1xf32>
    %291 = vector.shape_cast %290 : vector<1x8x1xf32> to vector<8x1xf32>
    %292 = arith.index_cast %c4_i32 : i32 to index
    %c0_102 = arith.constant 0 : index
    %c0_103 = arith.constant 0 : index
    %293 = vector.load %arg2[%292, %c0_102, %c0_103] : memref<8x8x8xf32, #tpu.memory_space<vmem>>, vector<1x8x8xf32>
    %294 = vector.shape_cast %293 : vector<1x8x8xf32> to vector<8x8xf32>
    %295 = arith.index_cast %c4_i32 : i32 to index
    %c0_104 = arith.constant 0 : index
    %c0_105 = arith.constant 0 : index
    %296 = vector.load %arg3[%295, %c0_104, %c0_105] : memref<8x8x8xf32, #tpu.memory_space<vmem>>, vector<1x8x8xf32>
    %297 = vector.shape_cast %296 : vector<1x8x8xf32> to vector<8x8xf32>
    %c0_106 = arith.constant 0 : index
    %c0_107 = arith.constant 0 : index
    %c0_108 = arith.constant 0 : index
    %298 = vector.load %arg6[%c0_106, %c0_107, %c0_108] : memref<8x8x64xf32, #tpu.memory_space<vmem>>, vector<8x8x64xf32>
    %299 = vector.shape_cast %294 : vector<8x8xf32> to vector<8x8x1xf32>
    %300 = vector.broadcast %299 : vector<8x8x1xf32> to vector<8x8x64xf32>
    %301 = arith.mulf %300, %298 : vector<8x8x64xf32>
    %cst_109 = arith.constant dense<0.000000e+00> : vector<8x64xf32>
    %302 = vector.multi_reduction <add>, %301, %cst_109 [0] : vector<8x8x64xf32> to vector<8x64xf32>
    %303 = vector.shape_cast %297 : vector<8x8xf32> to vector<8x8x1xf32>
    %304 = vector.broadcast %303 : vector<8x8x1xf32> to vector<8x8x64xf32>
    %305 = arith.mulf %304, %298 : vector<8x8x64xf32>
    %cst_110 = arith.constant dense<0.000000e+00> : vector<8x64xf32>
    %306 = vector.multi_reduction <add>, %305, %cst_110 [0] : vector<8x8x64xf32> to vector<8x64xf32>
    %307 = vector.extract_strided_slice %302 {offsets = [0, 0], sizes = [8, 32], strides = [1, 1]} : vector<8x64xf32> to vector<8x32xf32>
    %308 = vector.extract_strided_slice %302 {offsets = [0, 32], sizes = [8, 32], strides = [1, 1]} : vector<8x64xf32> to vector<8x32xf32>
    %309 = vector.extract_strided_slice %306 {offsets = [0, 0], sizes = [8, 32], strides = [1, 1]} : vector<8x64xf32> to vector<8x32xf32>
    %310 = vector.extract_strided_slice %306 {offsets = [0, 32], sizes = [8, 32], strides = [1, 1]} : vector<8x64xf32> to vector<8x32xf32>
    %311 = tpu.concatenate %288, %307, %309 in 1 : vector<8x32xf32>, vector<8x32xf32>, vector<8x32xf32> -> vector<8x96xf32>
    %c0_111 = arith.constant 0 : index
    %c0_112 = arith.constant 0 : index
    %312 = vector.load %arg4[%c0_111, %c0_112] : memref<96x160xf32, #tpu.memory_space<vmem>>, vector<96x160xf32>
    %cst_113 = arith.constant dense<0.000000e+00> : vector<8x160xf32>
    %313 = tpu.matmul %311, %312, %cst_113 {dimension_numbers = #tpu.dot_dimension_numbers<[1], [0], [0], [1], [0, 0, 1, 1], [], []>} : vector<8x96xf32>, vector<96x160xf32>, vector<8x160xf32> -> vector<8x160xf32>
    %c0_114 = arith.constant 0 : index
    %c0_115 = arith.constant 0 : index
    %314 = vector.load %arg5[%c0_114, %c0_115] : memref<1x160xf32, #tpu.memory_space<vmem>>, vector<1x160xf32>
    %315 = vector.broadcast %314 : vector<1x160xf32> to vector<8x160xf32>
    %316 = arith.addf %313, %315 : vector<8x160xf32>
    %317 = vector.extract_strided_slice %316 {offsets = [0, 0], sizes = [8, 32], strides = [1, 1]} : vector<8x160xf32> to vector<8x32xf32>
    %318 = math.tanh %317 : vector<8x32xf32>
    %319 = vector.extract_strided_slice %316 {offsets = [0, 32], sizes = [8, 32], strides = [1, 1]} : vector<8x160xf32> to vector<8x32xf32>
    %320 = arith.negf %319 : vector<8x32xf32>
    %321 = math.exp %320 : vector<8x32xf32>
    %cst_116 = arith.constant 1.000000e+00 : f32
    %322 = vector.broadcast %cst_116 : f32 to vector<8x32xf32>
    %323 = arith.addf %322, %321 : vector<8x32xf32>
    %324 = arith.divf %322, %323 : vector<8x32xf32>
    %325 = vector.extract_strided_slice %316 {offsets = [0, 64], sizes = [8, 32], strides = [1, 1]} : vector<8x160xf32> to vector<8x32xf32>
    %326 = arith.negf %325 : vector<8x32xf32>
    %327 = math.exp %326 : vector<8x32xf32>
    %cst_117 = arith.constant 1.000000e+00 : f32
    %328 = vector.broadcast %cst_117 : f32 to vector<8x32xf32>
    %329 = arith.addf %328, %327 : vector<8x32xf32>
    %330 = arith.divf %328, %329 : vector<8x32xf32>
    %331 = vector.extract_strided_slice %316 {offsets = [0, 96], sizes = [8, 32], strides = [1, 1]} : vector<8x160xf32> to vector<8x32xf32>
    %332 = arith.negf %331 : vector<8x32xf32>
    %333 = math.exp %332 : vector<8x32xf32>
    %cst_118 = arith.constant 1.000000e+00 : f32
    %334 = vector.broadcast %cst_118 : f32 to vector<8x32xf32>
    %335 = arith.addf %334, %333 : vector<8x32xf32>
    %336 = arith.divf %334, %335 : vector<8x32xf32>
    %337 = vector.extract_strided_slice %316 {offsets = [0, 128], sizes = [8, 32], strides = [1, 1]} : vector<8x160xf32> to vector<8x32xf32>
    %338 = arith.negf %337 : vector<8x32xf32>
    %339 = math.exp %338 : vector<8x32xf32>
    %cst_119 = arith.constant 1.000000e+00 : f32
    %340 = vector.broadcast %cst_119 : f32 to vector<8x32xf32>
    %341 = arith.addf %340, %339 : vector<8x32xf32>
    %342 = arith.divf %340, %341 : vector<8x32xf32>
    %343 = arith.mulf %324, %318 : vector<8x32xf32>
    %344 = arith.mulf %330, %308 : vector<8x32xf32>
    %345 = arith.addf %343, %344 : vector<8x32xf32>
    %346 = arith.mulf %336, %310 : vector<8x32xf32>
    %347 = arith.addf %345, %346 : vector<8x32xf32>
    %348 = math.tanh %347 : vector<8x32xf32>
    %349 = arith.mulf %342, %348 : vector<8x32xf32>
    %350 = tpu.concatenate %349, %347 in 1 : vector<8x32xf32>, vector<8x32xf32> -> vector<8x64xf32>
    %351 = vector.broadcast %291 : vector<8x1xf32> to vector<8x64xf32>
    %352 = arith.mulf %351, %350 : vector<8x64xf32>
    %353 = arith.index_cast %c4_i32 : i32 to index
    %c0_120 = arith.constant 0 : index
    %c0_121 = arith.constant 0 : index
    %354 = vector.load %arg6[%353, %c0_120, %c0_121] : memref<8x8x64xf32, #tpu.memory_space<vmem>>, vector<1x8x64xf32>
    %355 = vector.shape_cast %354 : vector<1x8x64xf32> to vector<8x64xf32>
    %356 = vector.shape_cast %352 : vector<8x64xf32> to vector<1x8x64xf32>
    tpu.vector_store %arg6[%353, %c0_120, %c0_121], %356 {strides = array<i32>} : memref<8x8x64xf32, #tpu.memory_space<vmem>>, vector<1x8x64xf32>,
    %c5_i32 = arith.constant 5 : i32
    %357 = arith.index_cast %c5_i32 : i32 to index
    %c0_122 = arith.constant 0 : index
    %c0_123 = arith.constant 0 : index
    %358 = vector.load %arg0[%357, %c0_122, %c0_123] : memref<8x8x32xf32, #tpu.memory_space<vmem>>, vector<1x8x32xf32>
    %359 = vector.shape_cast %358 : vector<1x8x32xf32> to vector<8x32xf32>
    %360 = arith.index_cast %c5_i32 : i32 to index
    %c0_124 = arith.constant 0 : index
    %c0_125 = arith.constant 0 : index
    %361 = vector.load %arg1[%360, %c0_124, %c0_125] : memref<8x8x1xf32, #tpu.memory_space<vmem>>, vector<1x8x1xf32>
    %362 = vector.shape_cast %361 : vector<1x8x1xf32> to vector<8x1xf32>
    %363 = arith.index_cast %c5_i32 : i32 to index
    %c0_126 = arith.constant 0 : index
    %c0_127 = arith.constant 0 : index
    %364 = vector.load %arg2[%363, %c0_126, %c0_127] : memref<8x8x8xf32, #tpu.memory_space<vmem>>, vector<1x8x8xf32>
    %365 = vector.shape_cast %364 : vector<1x8x8xf32> to vector<8x8xf32>
    %366 = arith.index_cast %c5_i32 : i32 to index
    %c0_128 = arith.constant 0 : index
    %c0_129 = arith.constant 0 : index
    %367 = vector.load %arg3[%366, %c0_128, %c0_129] : memref<8x8x8xf32, #tpu.memory_space<vmem>>, vector<1x8x8xf32>
    %368 = vector.shape_cast %367 : vector<1x8x8xf32> to vector<8x8xf32>
    %c0_130 = arith.constant 0 : index
    %c0_131 = arith.constant 0 : index
    %c0_132 = arith.constant 0 : index
    %369 = vector.load %arg6[%c0_130, %c0_131, %c0_132] : memref<8x8x64xf32, #tpu.memory_space<vmem>>, vector<8x8x64xf32>
    %370 = vector.shape_cast %365 : vector<8x8xf32> to vector<8x8x1xf32>
    %371 = vector.broadcast %370 : vector<8x8x1xf32> to vector<8x8x64xf32>
    %372 = arith.mulf %371, %369 : vector<8x8x64xf32>
    %cst_133 = arith.constant dense<0.000000e+00> : vector<8x64xf32>
    %373 = vector.multi_reduction <add>, %372, %cst_133 [0] : vector<8x8x64xf32> to vector<8x64xf32>
    %374 = vector.shape_cast %368 : vector<8x8xf32> to vector<8x8x1xf32>
    %375 = vector.broadcast %374 : vector<8x8x1xf32> to vector<8x8x64xf32>
    %376 = arith.mulf %375, %369 : vector<8x8x64xf32>
    %cst_134 = arith.constant dense<0.000000e+00> : vector<8x64xf32>
    %377 = vector.multi_reduction <add>, %376, %cst_134 [0] : vector<8x8x64xf32> to vector<8x64xf32>
    %378 = vector.extract_strided_slice %373 {offsets = [0, 0], sizes = [8, 32], strides = [1, 1]} : vector<8x64xf32> to vector<8x32xf32>
    %379 = vector.extract_strided_slice %373 {offsets = [0, 32], sizes = [8, 32], strides = [1, 1]} : vector<8x64xf32> to vector<8x32xf32>
    %380 = vector.extract_strided_slice %377 {offsets = [0, 0], sizes = [8, 32], strides = [1, 1]} : vector<8x64xf32> to vector<8x32xf32>
    %381 = vector.extract_strided_slice %377 {offsets = [0, 32], sizes = [8, 32], strides = [1, 1]} : vector<8x64xf32> to vector<8x32xf32>
    %382 = tpu.concatenate %359, %378, %380 in 1 : vector<8x32xf32>, vector<8x32xf32>, vector<8x32xf32> -> vector<8x96xf32>
    %c0_135 = arith.constant 0 : index
    %c0_136 = arith.constant 0 : index
    %383 = vector.load %arg4[%c0_135, %c0_136] : memref<96x160xf32, #tpu.memory_space<vmem>>, vector<96x160xf32>
    %cst_137 = arith.constant dense<0.000000e+00> : vector<8x160xf32>
    %384 = tpu.matmul %382, %383, %cst_137 {dimension_numbers = #tpu.dot_dimension_numbers<[1], [0], [0], [1], [0, 0, 1, 1], [], []>} : vector<8x96xf32>, vector<96x160xf32>, vector<8x160xf32> -> vector<8x160xf32>
    %c0_138 = arith.constant 0 : index
    %c0_139 = arith.constant 0 : index
    %385 = vector.load %arg5[%c0_138, %c0_139] : memref<1x160xf32, #tpu.memory_space<vmem>>, vector<1x160xf32>
    %386 = vector.broadcast %385 : vector<1x160xf32> to vector<8x160xf32>
    %387 = arith.addf %384, %386 : vector<8x160xf32>
    %388 = vector.extract_strided_slice %387 {offsets = [0, 0], sizes = [8, 32], strides = [1, 1]} : vector<8x160xf32> to vector<8x32xf32>
    %389 = math.tanh %388 : vector<8x32xf32>
    %390 = vector.extract_strided_slice %387 {offsets = [0, 32], sizes = [8, 32], strides = [1, 1]} : vector<8x160xf32> to vector<8x32xf32>
    %391 = arith.negf %390 : vector<8x32xf32>
    %392 = math.exp %391 : vector<8x32xf32>
    %cst_140 = arith.constant 1.000000e+00 : f32
    %393 = vector.broadcast %cst_140 : f32 to vector<8x32xf32>
    %394 = arith.addf %393, %392 : vector<8x32xf32>
    %395 = arith.divf %393, %394 : vector<8x32xf32>
    %396 = vector.extract_strided_slice %387 {offsets = [0, 64], sizes = [8, 32], strides = [1, 1]} : vector<8x160xf32> to vector<8x32xf32>
    %397 = arith.negf %396 : vector<8x32xf32>
    %398 = math.exp %397 : vector<8x32xf32>
    %cst_141 = arith.constant 1.000000e+00 : f32
    %399 = vector.broadcast %cst_141 : f32 to vector<8x32xf32>
    %400 = arith.addf %399, %398 : vector<8x32xf32>
    %401 = arith.divf %399, %400 : vector<8x32xf32>
    %402 = vector.extract_strided_slice %387 {offsets = [0, 96], sizes = [8, 32], strides = [1, 1]} : vector<8x160xf32> to vector<8x32xf32>
    %403 = arith.negf %402 : vector<8x32xf32>
    %404 = math.exp %403 : vector<8x32xf32>
    %cst_142 = arith.constant 1.000000e+00 : f32
    %405 = vector.broadcast %cst_142 : f32 to vector<8x32xf32>
    %406 = arith.addf %405, %404 : vector<8x32xf32>
    %407 = arith.divf %405, %406 : vector<8x32xf32>
    %408 = vector.extract_strided_slice %387 {offsets = [0, 128], sizes = [8, 32], strides = [1, 1]} : vector<8x160xf32> to vector<8x32xf32>
    %409 = arith.negf %408 : vector<8x32xf32>
    %410 = math.exp %409 : vector<8x32xf32>
    %cst_143 = arith.constant 1.000000e+00 : f32
    %411 = vector.broadcast %cst_143 : f32 to vector<8x32xf32>
    %412 = arith.addf %411, %410 : vector<8x32xf32>
    %413 = arith.divf %411, %412 : vector<8x32xf32>
    %414 = arith.mulf %395, %389 : vector<8x32xf32>
    %415 = arith.mulf %401, %379 : vector<8x32xf32>
    %416 = arith.addf %414, %415 : vector<8x32xf32>
    %417 = arith.mulf %407, %381 : vector<8x32xf32>
    %418 = arith.addf %416, %417 : vector<8x32xf32>
    %419 = math.tanh %418 : vector<8x32xf32>
    %420 = arith.mulf %413, %419 : vector<8x32xf32>
    %421 = tpu.concatenate %420, %418 in 1 : vector<8x32xf32>, vector<8x32xf32> -> vector<8x64xf32>
    %422 = vector.broadcast %362 : vector<8x1xf32> to vector<8x64xf32>
    %423 = arith.mulf %422, %421 : vector<8x64xf32>
    %424 = arith.index_cast %c5_i32 : i32 to index
    %c0_144 = arith.constant 0 : index
    %c0_145 = arith.constant 0 : index
    %425 = vector.load %arg6[%424, %c0_144, %c0_145] : memref<8x8x64xf32, #tpu.memory_space<vmem>>, vector<1x8x64xf32>
    %426 = vector.shape_cast %425 : vector<1x8x64xf32> to vector<8x64xf32>
    %427 = vector.shape_cast %423 : vector<8x64xf32> to vector<1x8x64xf32>
    tpu.vector_store %arg6[%424, %c0_144, %c0_145], %427 {strides = array<i32>} : memref<8x8x64xf32, #tpu.memory_space<vmem>>, vector<1x8x64xf32>,
    %c6_i32 = arith.constant 6 : i32
    %428 = arith.index_cast %c6_i32 : i32 to index
    %c0_146 = arith.constant 0 : index
    %c0_147 = arith.constant 0 : index
    %429 = vector.load %arg0[%428, %c0_146, %c0_147] : memref<8x8x32xf32, #tpu.memory_space<vmem>>, vector<1x8x32xf32>
    %430 = vector.shape_cast %429 : vector<1x8x32xf32> to vector<8x32xf32>
    %431 = arith.index_cast %c6_i32 : i32 to index
    %c0_148 = arith.constant 0 : index
    %c0_149 = arith.constant 0 : index
    %432 = vector.load %arg1[%431, %c0_148, %c0_149] : memref<8x8x1xf32, #tpu.memory_space<vmem>>, vector<1x8x1xf32>
    %433 = vector.shape_cast %432 : vector<1x8x1xf32> to vector<8x1xf32>
    %434 = arith.index_cast %c6_i32 : i32 to index
    %c0_150 = arith.constant 0 : index
    %c0_151 = arith.constant 0 : index
    %435 = vector.load %arg2[%434, %c0_150, %c0_151] : memref<8x8x8xf32, #tpu.memory_space<vmem>>, vector<1x8x8xf32>
    %436 = vector.shape_cast %435 : vector<1x8x8xf32> to vector<8x8xf32>
    %437 = arith.index_cast %c6_i32 : i32 to index
    %c0_152 = arith.constant 0 : index
    %c0_153 = arith.constant 0 : index
    %438 = vector.load %arg3[%437, %c0_152, %c0_153] : memref<8x8x8xf32, #tpu.memory_space<vmem>>, vector<1x8x8xf32>
    %439 = vector.shape_cast %438 : vector<1x8x8xf32> to vector<8x8xf32>
    %c0_154 = arith.constant 0 : index
    %c0_155 = arith.constant 0 : index
    %c0_156 = arith.constant 0 : index
    %440 = vector.load %arg6[%c0_154, %c0_155, %c0_156] : memref<8x8x64xf32, #tpu.memory_space<vmem>>, vector<8x8x64xf32>
    %441 = vector.shape_cast %436 : vector<8x8xf32> to vector<8x8x1xf32>
    %442 = vector.broadcast %441 : vector<8x8x1xf32> to vector<8x8x64xf32>
    %443 = arith.mulf %442, %440 : vector<8x8x64xf32>
    %cst_157 = arith.constant dense<0.000000e+00> : vector<8x64xf32>
    %444 = vector.multi_reduction <add>, %443, %cst_157 [0] : vector<8x8x64xf32> to vector<8x64xf32>
    %445 = vector.shape_cast %439 : vector<8x8xf32> to vector<8x8x1xf32>
    %446 = vector.broadcast %445 : vector<8x8x1xf32> to vector<8x8x64xf32>
    %447 = arith.mulf %446, %440 : vector<8x8x64xf32>
    %cst_158 = arith.constant dense<0.000000e+00> : vector<8x64xf32>
    %448 = vector.multi_reduction <add>, %447, %cst_158 [0] : vector<8x8x64xf32> to vector<8x64xf32>
    %449 = vector.extract_strided_slice %444 {offsets = [0, 0], sizes = [8, 32], strides = [1, 1]} : vector<8x64xf32> to vector<8x32xf32>
    %450 = vector.extract_strided_slice %444 {offsets = [0, 32], sizes = [8, 32], strides = [1, 1]} : vector<8x64xf32> to vector<8x32xf32>
    %451 = vector.extract_strided_slice %448 {offsets = [0, 0], sizes = [8, 32], strides = [1, 1]} : vector<8x64xf32> to vector<8x32xf32>
    %452 = vector.extract_strided_slice %448 {offsets = [0, 32], sizes = [8, 32], strides = [1, 1]} : vector<8x64xf32> to vector<8x32xf32>
    %453 = tpu.concatenate %430, %449, %451 in 1 : vector<8x32xf32>, vector<8x32xf32>, vector<8x32xf32> -> vector<8x96xf32>
    %c0_159 = arith.constant 0 : index
    %c0_160 = arith.constant 0 : index
    %454 = vector.load %arg4[%c0_159, %c0_160] : memref<96x160xf32, #tpu.memory_space<vmem>>, vector<96x160xf32>
    %cst_161 = arith.constant dense<0.000000e+00> : vector<8x160xf32>
    %455 = tpu.matmul %453, %454, %cst_161 {dimension_numbers = #tpu.dot_dimension_numbers<[1], [0], [0], [1], [0, 0, 1, 1], [], []>} : vector<8x96xf32>, vector<96x160xf32>, vector<8x160xf32> -> vector<8x160xf32>
    %c0_162 = arith.constant 0 : index
    %c0_163 = arith.constant 0 : index
    %456 = vector.load %arg5[%c0_162, %c0_163] : memref<1x160xf32, #tpu.memory_space<vmem>>, vector<1x160xf32>
    %457 = vector.broadcast %456 : vector<1x160xf32> to vector<8x160xf32>
    %458 = arith.addf %455, %457 : vector<8x160xf32>
    %459 = vector.extract_strided_slice %458 {offsets = [0, 0], sizes = [8, 32], strides = [1, 1]} : vector<8x160xf32> to vector<8x32xf32>
    %460 = math.tanh %459 : vector<8x32xf32>
    %461 = vector.extract_strided_slice %458 {offsets = [0, 32], sizes = [8, 32], strides = [1, 1]} : vector<8x160xf32> to vector<8x32xf32>
    %462 = arith.negf %461 : vector<8x32xf32>
    %463 = math.exp %462 : vector<8x32xf32>
    %cst_164 = arith.constant 1.000000e+00 : f32
    %464 = vector.broadcast %cst_164 : f32 to vector<8x32xf32>
    %465 = arith.addf %464, %463 : vector<8x32xf32>
    %466 = arith.divf %464, %465 : vector<8x32xf32>
    %467 = vector.extract_strided_slice %458 {offsets = [0, 64], sizes = [8, 32], strides = [1, 1]} : vector<8x160xf32> to vector<8x32xf32>
    %468 = arith.negf %467 : vector<8x32xf32>
    %469 = math.exp %468 : vector<8x32xf32>
    %cst_165 = arith.constant 1.000000e+00 : f32
    %470 = vector.broadcast %cst_165 : f32 to vector<8x32xf32>
    %471 = arith.addf %470, %469 : vector<8x32xf32>
    %472 = arith.divf %470, %471 : vector<8x32xf32>
    %473 = vector.extract_strided_slice %458 {offsets = [0, 96], sizes = [8, 32], strides = [1, 1]} : vector<8x160xf32> to vector<8x32xf32>
    %474 = arith.negf %473 : vector<8x32xf32>
    %475 = math.exp %474 : vector<8x32xf32>
    %cst_166 = arith.constant 1.000000e+00 : f32
    %476 = vector.broadcast %cst_166 : f32 to vector<8x32xf32>
    %477 = arith.addf %476, %475 : vector<8x32xf32>
    %478 = arith.divf %476, %477 : vector<8x32xf32>
    %479 = vector.extract_strided_slice %458 {offsets = [0, 128], sizes = [8, 32], strides = [1, 1]} : vector<8x160xf32> to vector<8x32xf32>
    %480 = arith.negf %479 : vector<8x32xf32>
    %481 = math.exp %480 : vector<8x32xf32>
    %cst_167 = arith.constant 1.000000e+00 : f32
    %482 = vector.broadcast %cst_167 : f32 to vector<8x32xf32>
    %483 = arith.addf %482, %481 : vector<8x32xf32>
    %484 = arith.divf %482, %483 : vector<8x32xf32>
    %485 = arith.mulf %466, %460 : vector<8x32xf32>
    %486 = arith.mulf %472, %450 : vector<8x32xf32>
    %487 = arith.addf %485, %486 : vector<8x32xf32>
    %488 = arith.mulf %478, %452 : vector<8x32xf32>
    %489 = arith.addf %487, %488 : vector<8x32xf32>
    %490 = math.tanh %489 : vector<8x32xf32>
    %491 = arith.mulf %484, %490 : vector<8x32xf32>
    %492 = tpu.concatenate %491, %489 in 1 : vector<8x32xf32>, vector<8x32xf32> -> vector<8x64xf32>
    %493 = vector.broadcast %433 : vector<8x1xf32> to vector<8x64xf32>
    %494 = arith.mulf %493, %492 : vector<8x64xf32>
    %495 = arith.index_cast %c6_i32 : i32 to index
    %c0_168 = arith.constant 0 : index
    %c0_169 = arith.constant 0 : index
    %496 = vector.load %arg6[%495, %c0_168, %c0_169] : memref<8x8x64xf32, #tpu.memory_space<vmem>>, vector<1x8x64xf32>
    %497 = vector.shape_cast %496 : vector<1x8x64xf32> to vector<8x64xf32>
    %498 = vector.shape_cast %494 : vector<8x64xf32> to vector<1x8x64xf32>
    tpu.vector_store %arg6[%495, %c0_168, %c0_169], %498 {strides = array<i32>} : memref<8x8x64xf32, #tpu.memory_space<vmem>>, vector<1x8x64xf32>,
    %c7_i32 = arith.constant 7 : i32
    %499 = arith.index_cast %c7_i32 : i32 to index
    %c0_170 = arith.constant 0 : index
    %c0_171 = arith.constant 0 : index
    %500 = vector.load %arg0[%499, %c0_170, %c0_171] : memref<8x8x32xf32, #tpu.memory_space<vmem>>, vector<1x8x32xf32>
    %501 = vector.shape_cast %500 : vector<1x8x32xf32> to vector<8x32xf32>
    %502 = arith.index_cast %c7_i32 : i32 to index
    %c0_172 = arith.constant 0 : index
    %c0_173 = arith.constant 0 : index
    %503 = vector.load %arg1[%502, %c0_172, %c0_173] : memref<8x8x1xf32, #tpu.memory_space<vmem>>, vector<1x8x1xf32>
    %504 = vector.shape_cast %503 : vector<1x8x1xf32> to vector<8x1xf32>
    %505 = arith.index_cast %c7_i32 : i32 to index
    %c0_174 = arith.constant 0 : index
    %c0_175 = arith.constant 0 : index
    %506 = vector.load %arg2[%505, %c0_174, %c0_175] : memref<8x8x8xf32, #tpu.memory_space<vmem>>, vector<1x8x8xf32>
    %507 = vector.shape_cast %506 : vector<1x8x8xf32> to vector<8x8xf32>
    %508 = arith.index_cast %c7_i32 : i32 to index
    %c0_176 = arith.constant 0 : index
    %c0_177 = arith.constant 0 : index
    %509 = vector.load %arg3[%508, %c0_176, %c0_177] : memref<8x8x8xf32, #tpu.memory_space<vmem>>, vector<1x8x8xf32>
    %510 = vector.shape_cast %509 : vector<1x8x8xf32> to vector<8x8xf32>
    %c0_178 = arith.constant 0 : index
    %c0_179 = arith.constant 0 : index
    %c0_180 = arith.constant 0 : index
    %511 = vector.load %arg6[%c0_178, %c0_179, %c0_180] : memref<8x8x64xf32, #tpu.memory_space<vmem>>, vector<8x8x64xf32>
    %512 = vector.shape_cast %507 : vector<8x8xf32> to vector<8x8x1xf32>
    %513 = vector.broadcast %512 : vector<8x8x1xf32> to vector<8x8x64xf32>
    %514 = arith.mulf %513, %511 : vector<8x8x64xf32>
    %cst_181 = arith.constant dense<0.000000e+00> : vector<8x64xf32>
    %515 = vector.multi_reduction <add>, %514, %cst_181 [0] : vector<8x8x64xf32> to vector<8x64xf32>
    %516 = vector.shape_cast %510 : vector<8x8xf32> to vector<8x8x1xf32>
    %517 = vector.broadcast %516 : vector<8x8x1xf32> to vector<8x8x64xf32>
    %518 = arith.mulf %517, %511 : vector<8x8x64xf32>
    %cst_182 = arith.constant dense<0.000000e+00> : vector<8x64xf32>
    %519 = vector.multi_reduction <add>, %518, %cst_182 [0] : vector<8x8x64xf32> to vector<8x64xf32>
    %520 = vector.extract_strided_slice %515 {offsets = [0, 0], sizes = [8, 32], strides = [1, 1]} : vector<8x64xf32> to vector<8x32xf32>
    %521 = vector.extract_strided_slice %515 {offsets = [0, 32], sizes = [8, 32], strides = [1, 1]} : vector<8x64xf32> to vector<8x32xf32>
    %522 = vector.extract_strided_slice %519 {offsets = [0, 0], sizes = [8, 32], strides = [1, 1]} : vector<8x64xf32> to vector<8x32xf32>
    %523 = vector.extract_strided_slice %519 {offsets = [0, 32], sizes = [8, 32], strides = [1, 1]} : vector<8x64xf32> to vector<8x32xf32>
    %524 = tpu.concatenate %501, %520, %522 in 1 : vector<8x32xf32>, vector<8x32xf32>, vector<8x32xf32> -> vector<8x96xf32>
    %c0_183 = arith.constant 0 : index
    %c0_184 = arith.constant 0 : index
    %525 = vector.load %arg4[%c0_183, %c0_184] : memref<96x160xf32, #tpu.memory_space<vmem>>, vector<96x160xf32>
    %cst_185 = arith.constant dense<0.000000e+00> : vector<8x160xf32>
    %526 = tpu.matmul %524, %525, %cst_185 {dimension_numbers = #tpu.dot_dimension_numbers<[1], [0], [0], [1], [0, 0, 1, 1], [], []>} : vector<8x96xf32>, vector<96x160xf32>, vector<8x160xf32> -> vector<8x160xf32>
    %c0_186 = arith.constant 0 : index
    %c0_187 = arith.constant 0 : index
    %527 = vector.load %arg5[%c0_186, %c0_187] : memref<1x160xf32, #tpu.memory_space<vmem>>, vector<1x160xf32>
    %528 = vector.broadcast %527 : vector<1x160xf32> to vector<8x160xf32>
    %529 = arith.addf %526, %528 : vector<8x160xf32>
    %530 = vector.extract_strided_slice %529 {offsets = [0, 0], sizes = [8, 32], strides = [1, 1]} : vector<8x160xf32> to vector<8x32xf32>
    %531 = math.tanh %530 : vector<8x32xf32>
    %532 = vector.extract_strided_slice %529 {offsets = [0, 32], sizes = [8, 32], strides = [1, 1]} : vector<8x160xf32> to vector<8x32xf32>
    %533 = arith.negf %532 : vector<8x32xf32>
    %534 = math.exp %533 : vector<8x32xf32>
    %cst_188 = arith.constant 1.000000e+00 : f32
    %535 = vector.broadcast %cst_188 : f32 to vector<8x32xf32>
    %536 = arith.addf %535, %534 : vector<8x32xf32>
    %537 = arith.divf %535, %536 : vector<8x32xf32>
    %538 = vector.extract_strided_slice %529 {offsets = [0, 64], sizes = [8, 32], strides = [1, 1]} : vector<8x160xf32> to vector<8x32xf32>
    %539 = arith.negf %538 : vector<8x32xf32>
    %540 = math.exp %539 : vector<8x32xf32>
    %cst_189 = arith.constant 1.000000e+00 : f32
    %541 = vector.broadcast %cst_189 : f32 to vector<8x32xf32>
    %542 = arith.addf %541, %540 : vector<8x32xf32>
    %543 = arith.divf %541, %542 : vector<8x32xf32>
    %544 = vector.extract_strided_slice %529 {offsets = [0, 96], sizes = [8, 32], strides = [1, 1]} : vector<8x160xf32> to vector<8x32xf32>
    %545 = arith.negf %544 : vector<8x32xf32>
    %546 = math.exp %545 : vector<8x32xf32>
    %cst_190 = arith.constant 1.000000e+00 : f32
    %547 = vector.broadcast %cst_190 : f32 to vector<8x32xf32>
    %548 = arith.addf %547, %546 : vector<8x32xf32>
    %549 = arith.divf %547, %548 : vector<8x32xf32>
    %550 = vector.extract_strided_slice %529 {offsets = [0, 128], sizes = [8, 32], strides = [1, 1]} : vector<8x160xf32> to vector<8x32xf32>
    %551 = arith.negf %550 : vector<8x32xf32>
    %552 = math.exp %551 : vector<8x32xf32>
    %cst_191 = arith.constant 1.000000e+00 : f32
    %553 = vector.broadcast %cst_191 : f32 to vector<8x32xf32>
    %554 = arith.addf %553, %552 : vector<8x32xf32>
    %555 = arith.divf %553, %554 : vector<8x32xf32>
    %556 = arith.mulf %537, %531 : vector<8x32xf32>
    %557 = arith.mulf %543, %521 : vector<8x32xf32>
    %558 = arith.addf %556, %557 : vector<8x32xf32>
    %559 = arith.mulf %549, %523 : vector<8x32xf32>
    %560 = arith.addf %558, %559 : vector<8x32xf32>
    %561 = math.tanh %560 : vector<8x32xf32>
    %562 = arith.mulf %555, %561 : vector<8x32xf32>
    %563 = tpu.concatenate %562, %560 in 1 : vector<8x32xf32>, vector<8x32xf32> -> vector<8x64xf32>
    %564 = vector.broadcast %504 : vector<8x1xf32> to vector<8x64xf32>
    %565 = arith.mulf %564, %563 : vector<8x64xf32>
    %566 = arith.index_cast %c7_i32 : i32 to index
    %c0_192 = arith.constant 0 : index
    %c0_193 = arith.constant 0 : index
    %567 = vector.load %arg6[%566, %c0_192, %c0_193] : memref<8x8x64xf32, #tpu.memory_space<vmem>>, vector<1x8x64xf32>
    %568 = vector.shape_cast %567 : vector<1x8x64xf32> to vector<8x64xf32>
    %569 = vector.shape_cast %565 : vector<8x64xf32> to vector<1x8x64xf32>
    tpu.vector_store %arg6[%566, %c0_192, %c0_193], %569 {strides = array<i32>} : memref<8x8x64xf32, #tpu.memory_space<vmem>>, vector<1x8x64xf32>,
    %c8_i32 = arith.constant 8 : i32
    return
  }
}

</mosaic_0001>

<llo_original>
// kernel: binary_tree_lstm_forward.1
$region0: #{binary_tree_lstm_forward.1}
  #allocation0 [shape = 'u32[]', space=smem, size = 0x4, offset = 0x4, fixed_abs, tag = 'smem constant byte address 0x4 - core index']
  #allocation1 [shape = 'u32[144,128]{1,0:T(1,128)}', space=vmem, size = 0x12000, scoped, tag = 'internal scratch']
  %s0 = inlined_call_operand.vmem [shape: f32[8,8,32], index: 0, kind: input, shape index: {}]
  %s1 = inlined_call_operand.vmem [shape: f32[8,8,1], index: 1, kind: input, shape index: {}]
  %s2 = inlined_call_operand.vmem [shape: f32[8,8,8], index: 2, kind: input, shape index: {}]
  %s3 = inlined_call_operand.vmem [shape: f32[8,8,8], index: 3, kind: input, shape index: {}]
  %s4 = inlined_call_operand.vmem [shape: f32[96,160], index: 4, kind: input, shape index: {}]
  %s5 = inlined_call_operand.vmem [shape: f32[1,160], index: 5, kind: input, shape index: {}]
  %s6 = inlined_call_operand.vmem [shape: f32[8,8,64], index: 6, kind: output, shape index: {}]
  %s7 = sld [smem:[#allocation0]]
  $region34: #{binary_tree_lstm_forward.1} parent=0
    _
  %s9 = ssub.s32 1, %s7
  %s10 = scalar_select 0, %s9, %s7
  // Predicated region
  $region2: #{binary_tree_lstm_forward.1} parent=0 // pred_check
    _
  $region3: #{binary_tree_lstm_forward.1} parent=0 // pred_check_branch
    %12 = sbr.rel (0) target = $region5
  $region4: #{binary_tree_lstm_forward.1} parent=0 // pred_region
    _
  $region5: #{binary_tree_lstm_forward.1} parent=0 // pred_fallthru
    _
  // Predicated region
  $region6: #{binary_tree_lstm_forward.1} parent=0 // pred_check
    _
  $region7: #{binary_tree_lstm_forward.1} parent=0 // pred_check_branch
    %14 = sbr.rel (0) target = $region9
  $region8: #{binary_tree_lstm_forward.1} parent=0 // pred_region
    _
  $region9: #{binary_tree_lstm_forward.1} parent=0 // pred_fallthru
    _
  // Predicated region
  $region10: #{binary_tree_lstm_forward.1} parent=0 // pred_check
    _
  $region11: #{binary_tree_lstm_forward.1} parent=0 // pred_check_branch
    %16 = sbr.rel (0) target = $region13
  $region12: #{binary_tree_lstm_forward.1} parent=0 // pred_region
    _
  $region13: #{binary_tree_lstm_forward.1} parent=0 // pred_fallthru
    _
  // Predicated region
  $region14: #{binary_tree_lstm_forward.1} parent=0 // pred_check
    _
  $region15: #{binary_tree_lstm_forward.1} parent=0 // pred_check_branch
    %18 = sbr.rel (0) target = $region17
  $region16: #{binary_tree_lstm_forward.1} parent=0 // pred_region
    _
  $region17: #{binary_tree_lstm_forward.1} parent=0 // pred_fallthru
    _
  // Predicated region
  $region18: #{binary_tree_lstm_forward.1} parent=0 // pred_check
    _
  $region19: #{binary_tree_lstm_forward.1} parent=0 // pred_check_branch
    %20 = sbr.rel (0) target = $region21
  $region20: #{binary_tree_lstm_forward.1} parent=0 // pred_region
    _
  $region21: #{binary_tree_lstm_forward.1} parent=0 // pred_fallthru
    _
  // Predicated region
  $region22: #{binary_tree_lstm_forward.1} parent=0 // pred_check
    _
  $region23: #{binary_tree_lstm_forward.1} parent=0 // pred_check_branch
    %22 = sbr.rel (0) target = $region25
  $region24: #{binary_tree_lstm_forward.1} parent=0 // pred_region
    _
  $region25: #{binary_tree_lstm_forward.1} parent=0 // pred_fallthru
    _
  %vm23 = vcmask 523264
  %24 = vst.msk [vmem:[%s6] sm:$0xff] %vm23, 0.0
  %25 = vst.msk [vmem:[%s6 + $0x8] sm:$0xff] %vm23, 0.0
  %26 = vst.msk [vmem:[%s6 + $0x10] sm:$0xff] %vm23, 0.0
  %27 = vst.msk [vmem:[%s6 + $0x18] sm:$0xff] %vm23, 0.0
  %28 = vst.msk [vmem:[%s6 + $0x20] sm:$0xff] %vm23, 0.0
  %29 = vst.msk [vmem:[%s6 + $0x28] sm:$0xff] %vm23, 0.0
  %30 = vst.msk [vmem:[%s6 + $0x30] sm:$0xff] %vm23, 0.0
  %31 = vst.msk [vmem:[%s6 + $0x38] sm:$0xff] %vm23, 0.0
  %v32 = vld [vmem:[%s0] sm:$0xff]
  %v33 = vld [vmem:[%s1] sm:$0xff]
  %v34 = vld [vmem:[%s2] sm:$0xff]
  %v35 = vld [vmem:[%s3] sm:$0xff]
  %v36 = vld [vmem:[%s6] sm:$0xff]
  %v37 = vld [vmem:[%s6 + $0x8] sm:$0xff]
  %v38 = vld [vmem:[%s6 + $0x10] sm:$0xff]
  %v39 = vld [vmem:[%s6 + $0x18] sm:$0xff]
  %v40 = vld [vmem:[%s6 + $0x20] sm:$0xff]
  %v41 = vld [vmem:[%s6 + $0x28] sm:$0xff]
  %v42 = vld [vmem:[%s6 + $0x30] sm:$0xff]
  %v43 = vld [vmem:[%s6 + $0x38] sm:$0xff]
  %v44 = vlaneseq
  %v45 = vshrl.u32 %v44, 7
  %v46 = vsub.s32 0, %v45
  %v47 = vrot.slane %v34, %v46
  %49 = vbcast.lane.b32.xlu0 %v47, 256
  %v50 = vpop.permute.xlu0 %49
  %v51 = vlaneseq
  %v52 = vshrl.u32 %v51, 7
  %v53 = vsub.s32 1, %v52
  %v54 = vrot.slane %v34, %v53
  %56 = vbcast.lane.b32.xlu0 %v54, 256
  %v57 = vpop.permute.xlu0 %56
  %v58 = vlaneseq
  %v59 = vshrl.u32 %v58, 7
  %v60 = vsub.s32 2, %v59
  %v61 = vrot.slane %v34, %v60
  %63 = vbcast.lane.b32.xlu0 %v61, 256
  %v64 = vpop.permute.xlu0 %63
  %v65 = vlaneseq
  %v66 = vshrl.u32 %v65, 7
  %v67 = vsub.s32 3, %v66
  %v68 = vrot.slane %v34, %v67
  %70 = vbcast.lane.b32.xlu0 %v68, 256
  %v71 = vpop.permute.xlu0 %70
  %v72 = vlaneseq
  %v73 = vshrl.u32 %v72, 7
  %v74 = vsub.s32 4, %v73
  %v75 = vrot.slane %v34, %v74
  %77 = vbcast.lane.b32.xlu0 %v75, 256
  %v78 = vpop.permute.xlu0 %77
  %v79 = vlaneseq
  %v80 = vshrl.u32 %v79, 7
  %v81 = vsub.s32 5, %v80
  %v82 = vrot.slane %v34, %v81
  %84 = vbcast.lane.b32.xlu0 %v82, 256
  %v85 = vpop.permute.xlu0 %84
  %v86 = vlaneseq
  %v87 = vshrl.u32 %v86, 7
  %v88 = vsub.s32 6, %v87
  %v89 = vrot.slane %v34, %v88
  %91 = vbcast.lane.b32.xlu0 %v89, 256
  %v92 = vpop.permute.xlu0 %91
  %v93 = vlaneseq
  %v94 = vshrl.u32 %v93, 7
  %v95 = vsub.s32 7, %v94
  %v96 = vrot.slane %v34, %v95
  %98 = vbcast.lane.b32.xlu0 %v96, 256
  %v99 = vpop.permute.xlu0 %98
  %v100 = vmul.f32 %v50, %v36
  %v101 = vmul.f32 %v57, %v37
  %v102 = vmul.f32 %v64, %v38
  %v103 = vmul.f32 %v71, %v39
  %v104 = vmul.f32 %v78, %v40
  %v105 = vmul.f32 %v85, %v41
  %v106 = vmul.f32 %v92, %v42
  %v107 = vmul.f32 %v99, %v43
  %v108 = vsel %vm23, %v100, 0.0
  %v109 = vsel %vm23, %v101, 0.0
  %v110 = vadd.f32 %v108, %v109
  %v111 = vsel %vm23, %v102, 0.0
  %v112 = vadd.f32 %v110, %v111
  %v113 = vsel %vm23, %v103, 0.0
  %v114 = vadd.f32 %v112, %v113
  %v115 = vsel %vm23, %v104, 0.0
  %v116 = vadd.f32 %v114, %v115
  %v117 = vsel %vm23, %v105, 0.0
  %v118 = vadd.f32 %v116, %v117
  %v119 = vsel %vm23, %v106, 0.0
  %v120 = vadd.f32 %v118, %v119
  %v121 = vsel %vm23, %v107, 0.0
  %v122 = vadd.f32 %v120, %v121
  %v123 = vlaneseq
  %v124 = vshrl.u32 %v123, 7
  %v125 = vsub.s32 0, %v124
  %v126 = vrot.slane %v35, %v125
  %128 = vbcast.lane.b32.xlu0 %v126, 256
  %v129 = vpop.permute.xlu0 %128
  %v130 = vlaneseq
  %v131 = vshrl.u32 %v130, 7
  %v132 = vsub.s32 1, %v131
  %v133 = vrot.slane %v35, %v132
  %135 = vbcast.lane.b32.xlu0 %v133, 256
  %v136 = vpop.permute.xlu0 %135
  %v137 = vlaneseq
  %v138 = vshrl.u32 %v137, 7
  %v139 = vsub.s32 2, %v138
  %v140 = vrot.slane %v35, %v139
  %142 = vbcast.lane.b32.xlu0 %v140, 256
  %v143 = vpop.permute.xlu0 %142
  %v144 = vlaneseq
  %v145 = vshrl.u32 %v144, 7
  %v146 = vsub.s32 3, %v145
  %v147 = vrot.slane %v35, %v146
  %149 = vbcast.lane.b32.xlu0 %v147, 256
  %v150 = vpop.permute.xlu0 %149
  %v151 = vlaneseq
  %v152 = vshrl.u32 %v151, 7
  %v153 = vsub.s32 4, %v152
  %v154 = vrot.slane %v35, %v153
  %156 = vbcast.lane.b32.xlu0 %v154, 256
  %v157 = vpop.permute.xlu0 %156
  %v158 = vlaneseq
  %v159 = vshrl.u32 %v158, 7
  %v160 = vsub.s32 5, %v159
  %v161 = vrot.slane %v35, %v160
  %163 = vbcast.lane.b32.xlu0 %v161, 256
  %v164 = vpop.permute.xlu0 %163
  %v165 = vlaneseq
  %v166 = vshrl.u32 %v165, 7
  %v167 = vsub.s32 6, %v166
  %v168 = vrot.slane %v35, %v167
  %170 = vbcast.lane.b32.xlu0 %v168, 256
  %v171 = vpop.permute.xlu0 %170
  %v172 = vlaneseq
  %v173 = vshrl.u32 %v172, 7
  %v174 = vsub.s32 7, %v173
  %v175 = vrot.slane %v35, %v174
  %177 = vbcast.lane.b32.xlu0 %v175, 256
  %v178 = vpop.permute.xlu0 %177
  %v179 = vmul.f32 %v129, %v36
  %v180 = vmul.f32 %v136, %v37
  %v181 = vmul.f32 %v143, %v38
  %v182 = vmul.f32 %v150, %v39
  %v183 = vmul.f32 %v157, %v40
  %v184 = vmul.f32 %v164, %v41
  %v185 = vmul.f32 %v171, %v42
  %v186 = vmul.f32 %v178, %v43
  %v187 = vsel %vm23, %v179, 0.0
  %v188 = vsel %vm23, %v180, 0.0
  %v189 = vadd.f32 %v187, %v188
  %v190 = vsel %vm23, %v181, 0.0
  %v191 = vadd.f32 %v189, %v190
  %v192 = vsel %vm23, %v182, 0.0
  %v193 = vadd.f32 %v191, %v192
  %v194 = vsel %vm23, %v183, 0.0
  %v195 = vadd.f32 %v193, %v194
  %v196 = vsel %vm23, %v184, 0.0
  %v197 = vadd.f32 %v195, %v196
  %v198 = vsel %vm23, %v185, 0.0
  %v199 = vadd.f32 %v197, %v198
  %v200 = vsel %vm23, %v186, 0.0
  %v201 = vadd.f32 %v199, %v200
  %203 = vrot.lane.b32.xlu0 %v122, 32
  %v204 = vpop.permute.xlu0 %203
  %207 = vrot.lane.b32.xlu0 %v201, 64
  %v208 = vpop.permute.xlu0 %207
  %vm210 = vcmask 261120
  %v211 = vsel %vm210, %v32, %v204
  %v212 = vsel %vm23, %v211, %v208
  %v213 = vld [vmem:[%s4] sm:$0xff]
  %v214 = vld [vmem:[%s4 + $0x8] sm:$0xff]
  %v215 = vld [vmem:[%s4 + $0x10] sm:$0xff]
  %v216 = vld [vmem:[%s4 + $0x18] sm:$0xff]
  %v217 = vld [vmem:[%s4 + $0x20] sm:$0xff]
  %v218 = vld [vmem:[%s4 + $0x28] sm:$0xff]
  %v219 = vld [vmem:[%s4 + $0x30] sm:$0xff]
  %v220 = vld [vmem:[%s4 + $0x38] sm:$0xff]
  %v221 = vld [vmem:[%s4 + $0x40] sm:$0xff]
  %v222 = vld [vmem:[%s4 + $0x48] sm:$0xff]
  %v223 = vld [vmem:[%s4 + $0x50] sm:$0xff]
  %v224 = vld [vmem:[%s4 + $0x58] sm:$0xff]
  %v225 = vld [vmem:[%s4 + $0x60] sm:$0xff]
  %v226 = vld [vmem:[%s4 + $0x68] sm:$0xff]
  %v227 = vld [vmem:[%s4 + $0x70] sm:$0xff]
  %v228 = vld [vmem:[%s4 + $0x78] sm:$0xff]
  %v229 = vld [vmem:[%s4 + $0x80] sm:$0xff]
  %v230 = vld [vmem:[%s4 + $0x88] sm:$0xff]
  %v231 = vld [vmem:[%s4 + $0x90] sm:$0xff]
  %v232 = vld [vmem:[%s4 + $0x98] sm:$0xff]
  %v233 = vld [vmem:[%s4 + $0xa0] sm:$0xff]
  %v234 = vld [vmem:[%s4 + $0xa8] sm:$0xff]
  %v235 = vld [vmem:[%s4 + $0xb0] sm:$0xff]
  %v236 = vld [vmem:[%s4 + $0xb8] sm:$0xff]
  %v237 = vld [vmem:[%s5] sm:$0x3]
  %v239 = vlaneseq
  %v240 = vshrl.u32 %v239, 7
  %v241 = vsub.s32 0, %v240
  %v242 = vrot.slane %v237, %v241
  %v243 = vlaneseq
  %v244 = vshrl.u32 %v243, 7
  %v245 = vsub.s32 1, %v244
  %v246 = vrot.slane %v237, %v245
  %vm249 = vcmask 785408
  %v251 = vsel %vm249, %v212, 0
  %253 = vmatprep.subr.mxu0 %v214
  %254 = vmatpush1.msra.mxu0 %v213
  %255 = vmatprep.subr.mxu0 %v216
  %256 = vmatpush1.msra.mxu0 %v215
  %257 = vmatprep.subr.mxu0 %v218
  %258 = vmatpush1.msra.mxu0 %v217
  %259 = vmatprep.subr.mxu0 %v220
  %260 = vmatpush1.msra.mxu0 %v219
  %261 = vmatprep.subr.mxu0 %v222
  %262 = vmatpush1.msra.mxu0 %v221
  %263 = vmatprep.subr.mxu0 %v224
  %264 = vmatpush1.msra.mxu0 %v223
  %265 = vmatprep.subr.mxu0 %v226
  %266 = vmatpush1.msra.mxu0 %v225
  %267 = vmatprep.subr.mxu0 %v228
  %268 = vmatpush1.msra.mxu0 %v227
  %269 = vmatprep.subr.mxu0 %v230
  %270 = vmatpush1.msra.mxu0 %v229
  %271 = vmatprep.subr.mxu0 %v232
  %272 = vmatpush1.msra.mxu0 %v231
  %273 = vmatprep.subr.mxu0 %v234
  %274 = vmatpush1.msra.mxu0 %v233
  %275 = vmatprep.subr.mxu0 %v236
  %276 = vmatpush1.msra.mxu0 %v235
  %277 = vmatprep.subr.mxu0 0.0
  %278 = vmatpush1.msra.mxu0 0.0
  %279 = vmatprep.subr.mxu0 0.0
  %280 = vmatpush1.msra.mxu0 0.0
  %281 = vmatprep.subr.mxu0 0.0
  %282 = vmatpush1.msra.mxu0 0.0
  %283 = vmatprep.subr.mxu0 0.0
  %284 = vmatpush1.msra.mxu0 0.0
  %285 = vmatprep.subr.mxu0 0.0
  %286 = vmatpush1.msra.mxu0 0.0
  %287 = vmatprep.subr.mxu0 0.0
  %288 = vmatpush1.msra.mxu0 0.0
  %289 = vmatprep.subr.mxu0 0.0
  %290 = vmatpush1.msra.mxu0 0.0
  %291 = vmatprep.subr.mxu0 0.0
  %292 = vmatpush1.msra.mxu0 0.0
  %293 = vmatprep.subr.mxu0 0.0
  %294 = vmatpush1.msra.mxu0 0.0
  %295 = vmatprep.subr.mxu0 0.0
  %296 = vmatpush1.msra.mxu0 0.0
  %297 = vmatprep.subr.mxu0 0.0
  %298 = vmatpush1.msra.mxu0 0.0
  %299 = vmatprep.subr.mxu0 0.0
  %300 = vmatpush1.msra.mxu0 0.0
  %301 = vmatprep.subr.mxu0 0.0
  %302 = vmatpush1.msra.mxu0 0.0
  %303 = vmatprep.subr.mxu0 0.0
  %304 = vmatpush1.msra.mxu0 0.0
  %305 = vmatprep.subr.mxu0 0.0
  %306 = vmatpush1.msra.mxu0 0.0
  %307 = vmatprep.subr.mxu0 0.0
  %308 = vmatpush1.msra.mxu0 0.0
  %309 = vmatprep.subr.mxu0 0.0
  %310 = vmatpush1.msra.mxu0 0.0
  %311 = vmatprep.subr.mxu0 0.0
  %312 = vmatpush1.msra.mxu0 0.0
  %313 = vmatprep.subr.mxu0 0.0
  %314 = vmatpush1.msra.mxu0 0.0
  %315 = vmatprep.subr.mxu0 0.0
  %316 = vmatpush1.msra.mxu0 0.0
  %317 = vmatprep.mubr.f32.mxu0 0.0
  %318 = vmatmul.mubr.f32.gmra.mrb[0].mxu0 %v251
  %v319 = vpop.f32.mrb[0].mxu0
  %v320 = vadd.f32 %v242, %v319
  %v321 = vpop.f32.mrb[0].mxu0
  %v322 = vadd.f32 %v246, %v321
  %323 = vdwg.mxu0
  %v324 = vtanh.pop %v320
  %v325 = vxor.u32 %v320, 2147483648
  %v326 = vmul.f32 %v325, 1.442695
  %v327 = vpow.pop %v326
  %v328 = vadd.f32 %v327, 1.0
  %v329 = vrcp.pop %v328
  %v330 = vmul.f32 1.0, %v329
  %v331 = vxor.u32 %v322, 2147483648
  %v332 = vmul.f32 %v331, 1.442695
  %v333 = vpow.pop %v332
  %v334 = vadd.f32 %v333, 1.0
  %v335 = vrcp.pop %v334
  %v336 = vmul.f32 1.0, %v335
  %338 = vrot.lane.b32.xlu0 %v324, 32
  %v339 = vpop.permute.xlu0 %338
  %v341 = vmul.f32 %v330, %v339
  %v342 = vmul.f32 %v330, %v204
  %344 = vrot.lane.b32.xlu0 %v342, 96
  %v345 = vpop.permute.xlu0 %344
  %v347 = vadd.f32 %v341, %v345
  %v348 = vmul.f32 %v330, %v208
  %350 = vrot.lane.b32.xlu0 %v348, 64
  %v351 = vpop.permute.xlu0 %350
  %v353 = vadd.f32 %v347, %v351
  %v354 = vtanh.pop %v353
  %356 = vrot.lane.b32.xlu0 %v354, 96
  %v357 = vpop.permute.xlu0 %356
  %v359 = vmul.f32 %v336, %v357
  %v360 = vsel %vm210, %v359, %v353
  %362 = vset.pattern.permute.xlu0 0
  %363 = vperm.xlu0 %362, %v33
  %v364 = vpop.permute.xlu0 %363
  %v366 = vmul.f32 %v364, %v360
  %367 = vst.msk [vmem:[%s6] sm:$0xff] %vm23, %v366
  %s368 = scalar_lea.vmem %s0, 8
  %v369 = vld [vmem:[%s368] sm:$0xff]
  %s370 = scalar_lea.vmem %s1, 8
  %v371 = vld [vmem:[%s370] sm:$0xff]
  %s372 = scalar_lea.vmem %s2, 8
  %v373 = vld [vmem:[%s372] sm:$0xff]
  %s374 = scalar_lea.vmem %s3, 8
  %v375 = vld [vmem:[%s374] sm:$0xff]
  %v376 = vld [vmem:[%s6] sm:$0xff]
  %v377 = vld [vmem:[%s6 + $0x8] sm:$0xff]
  %v378 = vld [vmem:[%s6 + $0x10] sm:$0xff]
  %v379 = vld [vmem:[%s6 + $0x18] sm:$0xff]
  %v380 = vld [vmem:[%s6 + $0x20] sm:$0xff]
  %v381 = vld [vmem:[%s6 + $0x28] sm:$0xff]
  %v382 = vld [vmem:[%s6 + $0x30] sm:$0xff]
  %v383 = vld [vmem:[%s6 + $0x38] sm:$0xff]
  %v384 = vlaneseq
  %v385 = vshrl.u32 %v384, 7
  %v386 = vsub.s32 0, %v385
  %v387 = vrot.slane %v373, %v386
  %389 = vbcast.lane.b32.xlu0 %v387, 256
  %v390 = vpop.permute.xlu0 %389
  %v391 = vlaneseq
  %v392 = vshrl.u32 %v391, 7
  %v393 = vsub.s32 1, %v392
  %v394 = vrot.slane %v373, %v393
  %396 = vbcast.lane.b32.xlu0 %v394, 256
  %v397 = vpop.permute.xlu0 %396
  %v398 = vlaneseq
  %v399 = vshrl.u32 %v398, 7
  %v400 = vsub.s32 2, %v399
  %v401 = vrot.slane %v373, %v400
  %403 = vbcast.lane.b32.xlu0 %v401, 256
  %v404 = vpop.permute.xlu0 %403
  %v405 = vlaneseq
  %v406 = vshrl.u32 %v405, 7
  %v407 = vsub.s32 3, %v406
  %v408 = vrot.slane %v373, %v407
  %410 = vbcast.lane.b32.xlu0 %v408, 256
  %v411 = vpop.permute.xlu0 %410
  %v412 = vlaneseq
  %v413 = vshrl.u32 %v412, 7
  %v414 = vsub.s32 4, %v413
  %v415 = vrot.slane %v373, %v414
  %417 = vbcast.lane.b32.xlu0 %v415, 256
  %v418 = vpop.permute.xlu0 %417
  %v419 = vlaneseq
  %v420 = vshrl.u32 %v419, 7
  %v421 = vsub.s32 5, %v420
  %v422 = vrot.slane %v373, %v421
  %424 = vbcast.lane.b32.xlu0 %v422, 256
  %v425 = vpop.permute.xlu0 %424
  %v426 = vlaneseq
  %v427 = vshrl.u32 %v426, 7
  %v428 = vsub.s32 6, %v427
  %v429 = vrot.slane %v373, %v428
  %431 = vbcast.lane.b32.xlu0 %v429, 256
  %v432 = vpop.permute.xlu0 %431
  %v433 = vlaneseq
  %v434 = vshrl.u32 %v433, 7
  %v435 = vsub.s32 7, %v434
  %v436 = vrot.slane %v373, %v435
  %438 = vbcast.lane.b32.xlu0 %v436, 256
  %v439 = vpop.permute.xlu0 %438
  %v440 = vmul.f32 %v390, %v376
  %v441 = vmul.f32 %v397, %v377
  %v442 = vmul.f32 %v404, %v378
  %v443 = vmul.f32 %v411, %v379
  %v444 = vmul.f32 %v418, %v380
  %v445 = vmul.f32 %v425, %v381
  %v446 = vmul.f32 %v432, %v382
  %v447 = vmul.f32 %v439, %v383
  %v448 = vsel %vm23, %v440, 0.0
  %v449 = vsel %vm23, %v441, 0.0
  %v450 = vadd.f32 %v448, %v449
  %v451 = vsel %vm23, %v442, 0.0
  %v452 = vadd.f32 %v450, %v451
  %v453 = vsel %vm23, %v443, 0.0
  %v454 = vadd.f32 %v452, %v453
  %v455 = vsel %vm23, %v444, 0.0
  %v456 = vadd.f32 %v454, %v455
  %v457 = vsel %vm23, %v445, 0.0
  %v458 = vadd.f32 %v456, %v457
  %v459 = vsel %vm23, %v446, 0.0
  %v460 = vadd.f32 %v458, %v459
  %v461 = vsel %vm23, %v447, 0.0
  %v462 = vadd.f32 %v460, %v461
  %v463 = vlaneseq
  %v464 = vshrl.u32 %v463, 7
  %v465 = vsub.s32 0, %v464
  %v466 = vrot.slane %v375, %v465
  %468 = vbcast.lane.b32.xlu0 %v466, 256
  %v469 = vpop.permute.xlu0 %468
  %v470 = vlaneseq
  %v471 = vshrl.u32 %v470, 7
  %v472 = vsub.s32 1, %v471
  %v473 = vrot.slane %v375, %v472
  %475 = vbcast.lane.b32.xlu0 %v473, 256
  %v476 = vpop.permute.xlu0 %475
  %v477 = vlaneseq
  %v478 = vshrl.u32 %v477, 7
  %v479 = vsub.s32 2, %v478
  %v480 = vrot.slane %v375, %v479
  %482 = vbcast.lane.b32.xlu0 %v480, 256
  %v483 = vpop.permute.xlu0 %482
  %v484 = vlaneseq
  %v485 = vshrl.u32 %v484, 7
  %v486 = vsub.s32 3, %v485
  %v487 = vrot.slane %v375, %v486
  %489 = vbcast.lane.b32.xlu0 %v487, 256
  %v490 = vpop.permute.xlu0 %489
  %v491 = vlaneseq
  %v492 = vshrl.u32 %v491, 7
  %v493 = vsub.s32 4, %v492
  %v494 = vrot.slane %v375, %v493
  %496 = vbcast.lane.b32.xlu0 %v494, 256
  %v497 = vpop.permute.xlu0 %496
  %v498 = vlaneseq
  %v499 = vshrl.u32 %v498, 7
  %v500 = vsub.s32 5, %v499
  %v501 = vrot.slane %v375, %v500
  %503 = vbcast.lane.b32.xlu0 %v501, 256
  %v504 = vpop.permute.xlu0 %503
  %v505 = vlaneseq
  %v506 = vshrl.u32 %v505, 7
  %v507 = vsub.s32 6, %v506
  %v508 = vrot.slane %v375, %v507
  %510 = vbcast.lane.b32.xlu0 %v508, 256
  %v511 = vpop.permute.xlu0 %510
  %v512 = vlaneseq
  %v513 = vshrl.u32 %v512, 7
  %v514 = vsub.s32 7, %v513
  %v515 = vrot.slane %v375, %v514
  %517 = vbcast.lane.b32.xlu0 %v515, 256
  %v518 = vpop.permute.xlu0 %517
  %v519 = vmul.f32 %v469, %v376
  %v520 = vmul.f32 %v476, %v377
  %v521 = vmul.f32 %v483, %v378
  %v522 = vmul.f32 %v490, %v379
  %v523 = vmul.f32 %v497, %v380
  %v524 = vmul.f32 %v504, %v381
  %v525 = vmul.f32 %v511, %v382
  %v526 = vmul.f32 %v518, %v383
  %v527 = vsel %vm23, %v519, 0.0
  %v528 = vsel %vm23, %v520, 0.0
  %v529 = vadd.f32 %v527, %v528
  %v530 = vsel %vm23, %v521, 0.0
  %v531 = vadd.f32 %v529, %v530
  %v532 = vsel %vm23, %v522, 0.0
  %v533 = vadd.f32 %v531, %v532
  %v534 = vsel %vm23, %v523, 0.0
  %v535 = vadd.f32 %v533, %v534
  %v536 = vsel %vm23, %v524, 0.0
  %v537 = vadd.f32 %v535, %v536
  %v538 = vsel %vm23, %v525, 0.0
  %v539 = vadd.f32 %v537, %v538
  %v540 = vsel %vm23, %v526, 0.0
  %v541 = vadd.f32 %v539, %v540
  %543 = vrot.lane.b32.xlu0 %v462, 32
  %v544 = vpop.permute.xlu0 %543
  %547 = vrot.lane.b32.xlu0 %v541, 64
  %v548 = vpop.permute.xlu0 %547
  %v550 = vsel %vm210, %v369, %v544
  %v551 = vsel %vm23, %v550, %v548
  %v552 = vld [vmem:[%s4] sm:$0xff]
  %v553 = vld [vmem:[%s4 + $0x8] sm:$0xff]
  %v554 = vld [vmem:[%s4 + $0x10] sm:$0xff]
  %v555 = vld [vmem:[%s4 + $0x18] sm:$0xff]
  %v556 = vld [vmem:[%s4 + $0x20] sm:$0xff]
  %v557 = vld [vmem:[%s4 + $0x28] sm:$0xff]
  %v558 = vld [vmem:[%s4 + $0x30] sm:$0xff]
  %v559 = vld [vmem:[%s4 + $0x38] sm:$0xff]
  %v560 = vld [vmem:[%s4 + $0x40] sm:$0xff]
  %v561 = vld [vmem:[%s4 + $0x48] sm:$0xff]
  %v562 = vld [vmem:[%s4 + $0x50] sm:$0xff]
  %v563 = vld [vmem:[%s4 + $0x58] sm:$0xff]
  %v564 = vld [vmem:[%s4 + $0x60] sm:$0xff]
  %v565 = vld [vmem:[%s4 + $0x68] sm:$0xff]
  %v566 = vld [vmem:[%s4 + $0x70] sm:$0xff]
  %v567 = vld [vmem:[%s4 + $0x78] sm:$0xff]
  %v568 = vld [vmem:[%s4 + $0x80] sm:$0xff]
  %v569 = vld [vmem:[%s4 + $0x88] sm:$0xff]
  %v570 = vld [vmem:[%s4 + $0x90] sm:$0xff]
  %v571 = vld [vmem:[%s4 + $0x98] sm:$0xff]
  %v572 = vld [vmem:[%s4 + $0xa0] sm:$0xff]
  %v573 = vld [vmem:[%s4 + $0xa8] sm:$0xff]
  %v574 = vld [vmem:[%s4 + $0xb0] sm:$0xff]
  %v575 = vld [vmem:[%s4 + $0xb8] sm:$0xff]
  %v576 = vld [vmem:[%s5] sm:$0x3]
  %v578 = vlaneseq
  %v579 = vshrl.u32 %v578, 7
  %v580 = vsub.s32 0, %v579
  %v581 = vrot.slane %v576, %v580
  %v582 = vlaneseq
  %v583 = vshrl.u32 %v582, 7
  %v584 = vsub.s32 1, %v583
  %v585 = vrot.slane %v576, %v584
  %v589 = vsel %vm249, %v551, 0
  %591 = vmatprep.subr.mxu0 %v553
  %592 = vmatpush1.msra.mxu0 %v552
  %593 = vmatprep.subr.mxu0 %v555
  %594 = vmatpush1.msra.mxu0 %v554
  %595 = vmatprep.subr.mxu0 %v557
  %596 = vmatpush1.msra.mxu0 %v556
  %597 = vmatprep.subr.mxu0 %v559
  %598 = vmatpush1.msra.mxu0 %v558
  %599 = vmatprep.subr.mxu0 %v561
  %600 = vmatpush1.msra.mxu0 %v560
  %601 = vmatprep.subr.mxu0 %v563
  %602 = vmatpush1.msra.mxu0 %v562
  %603 = vmatprep.subr.mxu0 %v565
  %604 = vmatpush1.msra.mxu0 %v564
  %605 = vmatprep.subr.mxu0 %v567
  %606 = vmatpush1.msra.mxu0 %v566
  %607 = vmatprep.subr.mxu0 %v569
  %608 = vmatpush1.msra.mxu0 %v568
  %609 = vmatprep.subr.mxu0 %v571
  %610 = vmatpush1.msra.mxu0 %v570
  %611 = vmatprep.subr.mxu0 %v573
  %612 = vmatpush1.msra.mxu0 %v572
  %613 = vmatprep.subr.mxu0 %v575
  %614 = vmatpush1.msra.mxu0 %v574
  %615 = vmatprep.subr.mxu0 0.0
  %616 = vmatpush1.msra.mxu0 0.0
  %617 = vmatprep.subr.mxu0 0.0
  %618 = vmatpush1.msra.mxu0 0.0
  %619 = vmatprep.subr.mxu0 0.0
  %620 = vmatpush1.msra.mxu0 0.0
  %621 = vmatprep.subr.mxu0 0.0
  %622 = vmatpush1.msra.mxu0 0.0
  %623 = vmatprep.subr.mxu0 0.0
  %624 = vmatpush1.msra.mxu0 0.0
  %625 = vmatprep.subr.mxu0 0.0
  %626 = vmatpush1.msra.mxu0 0.0
  %627 = vmatprep.subr.mxu0 0.0
  %628 = vmatpush1.msra.mxu0 0.0
  %629 = vmatprep.subr.mxu0 0.0
  %630 = vmatpush1.msra.mxu0 0.0
  %631 = vmatprep.subr.mxu0 0.0
  %632 = vmatpush1.msra.mxu0 0.0
  %633 = vmatprep.subr.mxu0 0.0
  %634 = vmatpush1.msra.mxu0 0.0
  %635 = vmatprep.subr.mxu0 0.0
  %636 = vmatpush1.msra.mxu0 0.0
  %637 = vmatprep.subr.mxu0 0.0
  %638 = vmatpush1.msra.mxu0 0.0
  %639 = vmatprep.subr.mxu0 0.0
  %640 = vmatpush1.msra.mxu0 0.0
  %641 = vmatprep.subr.mxu0 0.0
  %642 = vmatpush1.msra.mxu0 0.0
  %643 = vmatprep.subr.mxu0 0.0
  %644 = vmatpush1.msra.mxu0 0.0
  %645 = vmatprep.subr.mxu0 0.0
  %646 = vmatpush1.msra.mxu0 0.0
  %647 = vmatprep.subr.mxu0 0.0
  %648 = vmatpush1.msra.mxu0 0.0
  %649 = vmatprep.subr.mxu0 0.0
  %650 = vmatpush1.msra.mxu0 0.0
  %651 = vmatprep.subr.mxu0 0.0
  %652 = vmatpush1.msra.mxu0 0.0
  %653 = vmatprep.subr.mxu0 0.0
  %654 = vmatpush1.msra.mxu0 0.0
  %655 = vmatprep.mubr.f32.mxu0 0.0
  %656 = vmatmul.mubr.f32.gmra.mrb[0].mxu0 %v589
  %v657 = vpop.f32.mrb[0].mxu0
  %v658 = vadd.f32 %v581, %v657
  %v659 = vpop.f32.mrb[0].mxu0
  %v660 = vadd.f32 %v585, %v659
  %661 = vdwg.mxu0
  %v662 = vtanh.pop %v658
  %v663 = vxor.u32 %v658, 2147483648
  %v664 = vmul.f32 %v663, 1.442695
  %v665 = vpow.pop %v664
  %v666 = vadd.f32 %v665, 1.0
  %v667 = vrcp.pop %v666
  %v668 = vmul.f32 1.0, %v667
  %v669 = vxor.u32 %v660, 2147483648
  %v670 = vmul.f32 %v669, 1.442695
  %v671 = vpow.pop %v670
  %v672 = vadd.f32 %v671, 1.0
  %v673 = vrcp.pop %v672
  %v674 = vmul.f32 1.0, %v673
  %676 = vrot.lane.b32.xlu0 %v662, 32
  %v677 = vpop.permute.xlu0 %676
  %v679 = vmul.f32 %v668, %v677
  %v680 = vmul.f32 %v668, %v544
  %682 = vrot.lane.b32.xlu0 %v680, 96
  %v683 = vpop.permute.xlu0 %682
  %v685 = vadd.f32 %v679, %v683
  %v686 = vmul.f32 %v668, %v548
  %688 = vrot.lane.b32.xlu0 %v686, 64
  %v689 = vpop.permute.xlu0 %688
  %v691 = vadd.f32 %v685, %v689
  %v692 = vtanh.pop %v691
  %694 = vrot.lane.b32.xlu0 %v692, 96
  %v695 = vpop.permute.xlu0 %694
  %v697 = vmul.f32 %v674, %v695
  %v698 = vsel %vm210, %v697, %v691
  %700 = vset.pattern.permute.xlu0 0
  %701 = vperm.xlu0 %700, %v371
  %v702 = vpop.permute.xlu0 %701
  %v704 = vmul.f32 %v702, %v698
  %s705 = scalar_lea.vmem %s6, 8
  %706 = vst.msk [vmem:[%s705] sm:$0xff] %vm23, %v704
  %s707 = scalar_lea.vmem %s0, 16
  %v708 = vld [vmem:[%s707] sm:$0xff]
  %s709 = scalar_lea.vmem %s1, 16
  %v710 = vld [vmem:[%s709] sm:$0xff]
  %s711 = scalar_lea.vmem %s2, 16
  %v712 = vld [vmem:[%s711] sm:$0xff]
  %s713 = scalar_lea.vmem %s3, 16
  %v714 = vld [vmem:[%s713] sm:$0xff]
  %v715 = vld [vmem:[%s6] sm:$0xff]
  %v716 = vld [vmem:[%s6 + $0x8] sm:$0xff]
  %v717 = vld [vmem:[%s6 + $0x10] sm:$0xff]
  %v718 = vld [vmem:[%s6 + $0x18] sm:$0xff]
  %v719 = vld [vmem:[%s6 + $0x20] sm:$0xff]
  %v720 = vld [vmem:[%s6 + $0x28] sm:$0xff]
  %v721 = vld [vmem:[%s6 + $0x30] sm:$0xff]
  %v722 = vld [vmem:[%s6 + $0x38] sm:$0xff]
  %v723 = vlaneseq
  %v724 = vshrl.u32 %v723, 7
  %v725 = vsub.s32 0, %v724
  %v726 = vrot.slane %v712, %v725
  %728 = vbcast.lane.b32.xlu0 %v726, 256
  %v729 = vpop.permute.xlu0 %728
  %v730 = vlaneseq
  %v731 = vshrl.u32 %v730, 7
  %v732 = vsub.s32 1, %v731
  %v733 = vrot.slane %v712, %v732
  %735 = vbcast.lane.b32.xlu0 %v733, 256
  %v736 = vpop.permute.xlu0 %735
  %v737 = vlaneseq
  %v738 = vshrl.u32 %v737, 7
  %v739 = vsub.s32 2, %v738
  %v740 = vrot.slane %v712, %v739
  %742 = vbcast.lane.b32.xlu0 %v740, 256
  %v743 = vpop.permute.xlu0 %742
  %v744 = vlaneseq
  %v745 = vshrl.u32 %v744, 7
  %v746 = vsub.s32 3, %v745
  %v747 = vrot.slane %v712, %v746
  %749 = vbcast.lane.b32.xlu0 %v747, 256
  %v750 = vpop.permute.xlu0 %749
  %v751 = vlaneseq
  %v752 = vshrl.u32 %v751, 7
  %v753 = vsub.s32 4, %v752
  %v754 = vrot.slane %v712, %v753
  %756 = vbcast.lane.b32.xlu0 %v754, 256
  %v757 = vpop.permute.xlu0 %756
  %v758 = vlaneseq
  %v759 = vshrl.u32 %v758, 7
  %v760 = vsub.s32 5, %v759
  %v761 = vrot.slane %v712, %v760
  %763 = vbcast.lane.b32.xlu0 %v761, 256
  %v764 = vpop.permute.xlu0 %763
  %v765 = vlaneseq
  %v766 = vshrl.u32 %v765, 7
  %v767 = vsub.s32 6, %v766
  %v768 = vrot.slane %v712, %v767
  %770 = vbcast.lane.b32.xlu0 %v768, 256
  %v771 = vpop.permute.xlu0 %770
  %v772 = vlaneseq
  %v773 = vshrl.u32 %v772, 7
  %v774 = vsub.s32 7, %v773
  %v775 = vrot.slane %v712, %v774
  %777 = vbcast.lane.b32.xlu0 %v775, 256
  %v778 = vpop.permute.xlu0 %777
  %v779 = vmul.f32 %v729, %v715
  %v780 = vmul.f32 %v736, %v716
  %v781 = vmul.f32 %v743, %v717
  %v782 = vmul.f32 %v750, %v718
  %v783 = vmul.f32 %v757, %v719
  %v784 = vmul.f32 %v764, %v720
  %v785 = vmul.f32 %v771, %v721
  %v786 = vmul.f32 %v778, %v722
  %v787 = vsel %vm23, %v779, 0.0
  %v788 = vsel %vm23, %v780, 0.0
  %v789 = vadd.f32 %v787, %v788
  %v790 = vsel %vm23, %v781, 0.0
  %v791 = vadd.f32 %v789, %v790
  %v792 = vsel %vm23, %v782, 0.0
  %v793 = vadd.f32 %v791, %v792
  %v794 = vsel %vm23, %v783, 0.0
  %v795 = vadd.f32 %v793, %v794
  %v796 = vsel %vm23, %v784, 0.0
  %v797 = vadd.f32 %v795, %v796
  %v798 = vsel %vm23, %v785, 0.0
  %v799 = vadd.f32 %v797, %v798
  %v800 = vsel %vm23, %v786, 0.0
  %v801 = vadd.f32 %v799, %v800
  %v802 = vlaneseq
  %v803 = vshrl.u32 %v802, 7
  %v804 = vsub.s32 0, %v803
  %v805 = vrot.slane %v714, %v804
  %807 = vbcast.lane.b32.xlu0 %v805, 256
  %v808 = vpop.permute.xlu0 %807
  %v809 = vlaneseq
  %v810 = vshrl.u32 %v809, 7
  %v811 = vsub.s32 1, %v810
  %v812 = vrot.slane %v714, %v811
  %814 = vbcast.lane.b32.xlu0 %v812, 256
  %v815 = vpop.permute.xlu0 %814
  %v816 = vlaneseq
  %v817 = vshrl.u32 %v816, 7
  %v818 = vsub.s32 2, %v817
  %v819 = vrot.slane %v714, %v818
  %821 = vbcast.lane.b32.xlu0 %v819, 256
  %v822 = vpop.permute.xlu0 %821
  %v823 = vlaneseq
  %v824 = vshrl.u32 %v823, 7
  %v825 = vsub.s32 3, %v824
  %v826 = vrot.slane %v714, %v825
  %828 = vbcast.lane.b32.xlu0 %v826, 256
  %v829 = vpop.permute.xlu0 %828
  %v830 = vlaneseq
  %v831 = vshrl.u32 %v830, 7
  %v832 = vsub.s32 4, %v831
  %v833 = vrot.slane %v714, %v832
  %835 = vbcast.lane.b32.xlu0 %v833, 256
  %v836 = vpop.permute.xlu0 %835
  %v837 = vlaneseq
  %v838 = vshrl.u32 %v837, 7
  %v839 = vsub.s32 5, %v838
  %v840 = vrot.slane %v714, %v839
  %842 = vbcast.lane.b32.xlu0 %v840, 256
  %v843 = vpop.permute.xlu0 %842
  %v844 = vlaneseq
  %v845 = vshrl.u32 %v844, 7
  %v846 = vsub.s32 6, %v845
  %v847 = vrot.slane %v714, %v846
  %849 = vbcast.lane.b32.xlu0 %v847, 256
  %v850 = vpop.permute.xlu0 %849
  %v851 = vlaneseq
  %v852 = vshrl.u32 %v851, 7
  %v853 = vsub.s32 7, %v852
  %v854 = vrot.slane %v714, %v853
  %856 = vbcast.lane.b32.xlu0 %v854, 256
  %v857 = vpop.permute.xlu0 %856
  %v858 = vmul.f32 %v808, %v715
  %v859 = vmul.f32 %v815, %v716
  %v860 = vmul.f32 %v822, %v717
  %v861 = vmul.f32 %v829, %v718
  %v862 = vmul.f32 %v836, %v719
  %v863 = vmul.f32 %v843, %v720
  %v864 = vmul.f32 %v850, %v721
  %v865 = vmul.f32 %v857, %v722
  %v866 = vsel %vm23, %v858, 0.0
  %v867 = vsel %vm23, %v859, 0.0
  %v868 = vadd.f32 %v866, %v867
  %v869 = vsel %vm23, %v860, 0.0
  %v870 = vadd.f32 %v868, %v869
  %v871 = vsel %vm23, %v861, 0.0
  %v872 = vadd.f32 %v870, %v871
  %v873 = vsel %vm23, %v862, 0.0
  %v874 = vadd.f32 %v872, %v873
  %v875 = vsel %vm23, %v863, 0.0
  %v876 = vadd.f32 %v874, %v875
  %v877 = vsel %vm23, %v864, 0.0
  %v878 = vadd.f32 %v876, %v877
  %v879 = vsel %vm23, %v865, 0.0
  %v880 = vadd.f32 %v878, %v879
  %882 = vrot.lane.b32.xlu0 %v801, 32
  %v883 = vpop.permute.xlu0 %882
  %886 = vrot.lane.b32.xlu0 %v880, 64
  %v887 = vpop.permute.xlu0 %886
  %v889 = vsel %vm210, %v708, %v883
  %v890 = vsel %vm23, %v889, %v887
  %v891 = vld [vmem:[%s4] sm:$0xff]
  %v892 = vld [vmem:[%s4 + $0x8] sm:$0xff]
  %v893 = vld [vmem:[%s4 + $0x10] sm:$0xff]
  %v894 = vld [vmem:[%s4 + $0x18] sm:$0xff]
  %v895 = vld [vmem:[%s4 + $0x20] sm:$0xff]
  %v896 = vld [vmem:[%s4 + $0x28] sm:$0xff]
  %v897 = vld [vmem:[%s4 + $0x30] sm:$0xff]
  %v898 = vld [vmem:[%s4 + $0x38] sm:$0xff]
  %v899 = vld [vmem:[%s4 + $0x40] sm:$0xff]
  %v900 = vld [vmem:[%s4 + $0x48] sm:$0xff]
  %v901 = vld [vmem:[%s4 + $0x50] sm:$0xff]
  %v902 = vld [vmem:[%s4 + $0x58] sm:$0xff]
  %v903 = vld [vmem:[%s4 + $0x60] sm:$0xff]
  %v904 = vld [vmem:[%s4 + $0x68] sm:$0xff]
  %v905 = vld [vmem:[%s4 + $0x70] sm:$0xff]
  %v906 = vld [vmem:[%s4 + $0x78] sm:$0xff]
  %v907 = vld [vmem:[%s4 + $0x80] sm:$0xff]
  %v908 = vld [vmem:[%s4 + $0x88] sm:$0xff]
  %v909 = vld [vmem:[%s4 + $0x90] sm:$0xff]
  %v910 = vld [vmem:[%s4 + $0x98] sm:$0xff]
  %v911 = vld [vmem:[%s4 + $0xa0] sm:$0xff]
  %v912 = vld [vmem:[%s4 + $0xa8] sm:$0xff]
  %v913 = vld [vmem:[%s4 + $0xb0] sm:$0xff]
  %v914 = vld [vmem:[%s4 + $0xb8] sm:$0xff]
  %v915 = vld [vmem:[%s5] sm:$0x3]
  %v917 = vlaneseq
  %v918 = vshrl.u32 %v917, 7
  %v919 = vsub.s32 0, %v918
  %v920 = vrot.slane %v915, %v919
  %v921 = vlaneseq
  %v922 = vshrl.u32 %v921, 7
  %v923 = vsub.s32 1, %v922
  %v924 = vrot.slane %v915, %v923
  %v928 = vsel %vm249, %v890, 0
  %930 = vmatprep.subr.mxu0 %v892
  %931 = vmatpush1.msra.mxu0 %v891
  %932 = vmatprep.subr.mxu0 %v894
  %933 = vmatpush1.msra.mxu0 %v893
  %934 = vmatprep.subr.mxu0 %v896
  %935 = vmatpush1.msra.mxu0 %v895
  %936 = vmatprep.subr.mxu0 %v898
  %937 = vmatpush1.msra.mxu0 %v897
  %938 = vmatprep.subr.mxu0 %v900
  %939 = vmatpush1.msra.mxu0 %v899
  %940 = vmatprep.subr.mxu0 %v902
  %941 = vmatpush1.msra.mxu0 %v901
  %942 = vmatprep.subr.mxu0 %v904
  %943 = vmatpush1.msra.mxu0 %v903
  %944 = vmatprep.subr.mxu0 %v906
  %945 = vmatpush1.msra.mxu0 %v905
  %946 = vmatprep.subr.mxu0 %v908
  %947 = vmatpush1.msra.mxu0 %v907
  %948 = vmatprep.subr.mxu0 %v910
  %949 = vmatpush1.msra.mxu0 %v909
  %950 = vmatprep.subr.mxu0 %v912
  %951 = vmatpush1.msra.mxu0 %v911
  %952 = vmatprep.subr.mxu0 %v914
  %953 = vmatpush1.msra.mxu0 %v913
  %954 = vmatprep.subr.mxu0 0.0
  %955 = vmatpush1.msra.mxu0 0.0
  %956 = vmatprep.subr.mxu0 0.0
  %957 = vmatpush1.msra.mxu0 0.0
  %958 = vmatprep.subr.mxu0 0.0
  %959 = vmatpush1.msra.mxu0 0.0
  %960 = vmatprep.subr.mxu0 0.0
  %961 = vmatpush1.msra.mxu0 0.0
  %962 = vmatprep.subr.mxu0 0.0
  %963 = vmatpush1.msra.mxu0 0.0
  %964 = vmatprep.subr.mxu0 0.0
  %965 = vmatpush1.msra.mxu0 0.0
  %966 = vmatprep.subr.mxu0 0.0
  %967 = vmatpush1.msra.mxu0 0.0
  %968 = vmatprep.subr.mxu0 0.0
  %969 = vmatpush1.msra.mxu0 0.0
  %970 = vmatprep.subr.mxu0 0.0
  %971 = vmatpush1.msra.mxu0 0.0
  %972 = vmatprep.subr.mxu0 0.0
  %973 = vmatpush1.msra.mxu0 0.0
  %974 = vmatprep.subr.mxu0 0.0
  %975 = vmatpush1.msra.mxu0 0.0
  %976 = vmatprep.subr.mxu0 0.0
  %977 = vmatpush1.msra.mxu0 0.0
  %978 = vmatprep.subr.mxu0 0.0
  %979 = vmatpush1.msra.mxu0 0.0
  %980 = vmatprep.subr.mxu0 0.0
  %981 = vmatpush1.msra.mxu0 0.0
  %982 = vmatprep.subr.mxu0 0.0
  %983 = vmatpush1.msra.mxu0 0.0
  %984 = vmatprep.subr.mxu0 0.0
  %985 = vmatpush1.msra.mxu0 0.0
  %986 = vmatprep.subr.mxu0 0.0
  %987 = vmatpush1.msra.mxu0 0.0
  %988 = vmatprep.subr.mxu0 0.0
  %989 = vmatpush1.msra.mxu0 0.0
  %990 = vmatprep.subr.mxu0 0.0
  %991 = vmatpush1.msra.mxu0 0.0
  %992 = vmatprep.subr.mxu0 0.0
  %993 = vmatpush1.msra.mxu0 0.0
  %994 = vmatprep.mubr.f32.mxu0 0.0
  %995 = vmatmul.mubr.f32.gmra.mrb[0].mxu0 %v928
  %v996 = vpop.f32.mrb[0].mxu0
  %v997 = vadd.f32 %v920, %v996
  %v998 = vpop.f32.mrb[0].mxu0
  %v999 = vadd.f32 %v924, %v998
  %1000 = vdwg.mxu0
  %v1001 = vtanh.pop %v997
  %v1002 = vxor.u32 %v997, 2147483648
  %v1003 = vmul.f32 %v1002, 1.442695
  %v1004 = vpow.pop %v1003
  %v1005 = vadd.f32 %v1004, 1.0
  %v1006 = vrcp.pop %v1005
  %v1007 = vmul.f32 1.0, %v1006
  %v1008 = vxor.u32 %v999, 2147483648
  %v1009 = vmul.f32 %v1008, 1.442695
  %v1010 = vpow.pop %v1009
  %v1011 = vadd.f32 %v1010, 1.0
  %v1012 = vrcp.pop %v1011
  %v1013 = vmul.f32 1.0, %v1012
  %1015 = vrot.lane.b32.xlu0 %v1001, 32
  %v1016 = vpop.permute.xlu0 %1015
  %v1018 = vmul.f32 %v1007, %v1016
  %v1019 = vmul.f32 %v1007, %v883
  %1021 = vrot.lane.b32.xlu0 %v1019, 96
  %v1022 = vpop.permute.xlu0 %1021
  %v1024 = vadd.f32 %v1018, %v1022
  %v1025 = vmul.f32 %v1007, %v887
  %1027 = vrot.lane.b32.xlu0 %v1025, 64
  %v1028 = vpop.permute.xlu0 %1027
  %v1030 = vadd.f32 %v1024, %v1028
  %v1031 = vtanh.pop %v1030
  %1033 = vrot.lane.b32.xlu0 %v1031, 96
  %v1034 = vpop.permute.xlu0 %1033
  %v1036 = vmul.f32 %v1013, %v1034
  %v1037 = vsel %vm210, %v1036, %v1030
  %1039 = vset.pattern.permute.xlu0 0
  %1040 = vperm.xlu0 %1039, %v710
  %v1041 = vpop.permute.xlu0 %1040
  %v1043 = vmul.f32 %v1041, %v1037
  %s1044 = scalar_lea.vmem %s6, 16
  %1045 = vst.msk [vmem:[%s1044] sm:$0xff] %vm23, %v1043
  %s1046 = scalar_lea.vmem %s0, 24
  %v1047 = vld [vmem:[%s1046] sm:$0xff]
  %s1048 = scalar_lea.vmem %s1, 24
  %v1049 = vld [vmem:[%s1048] sm:$0xff]
  %s1050 = scalar_lea.vmem %s2, 24
  %v1051 = vld [vmem:[%s1050] sm:$0xff]
  %s1052 = scalar_lea.vmem %s3, 24
  %v1053 = vld [vmem:[%s1052] sm:$0xff]
  %v1054 = vld [vmem:[%s6] sm:$0xff]
  %v1055 = vld [vmem:[%s6 + $0x8] sm:$0xff]
  %v1056 = vld [vmem:[%s6 + $0x10] sm:$0xff]
  %v1057 = vld [vmem:[%s6 + $0x18] sm:$0xff]
  %v1058 = vld [vmem:[%s6 + $0x20] sm:$0xff]
  %v1059 = vld [vmem:[%s6 + $0x28] sm:$0xff]
  %v1060 = vld [vmem:[%s6 + $0x30] sm:$0xff]
  %v1061 = vld [vmem:[%s6 + $0x38] sm:$0xff]
  %v1062 = vlaneseq
  %v1063 = vshrl.u32 %v1062, 7
  %v1064 = vsub.s32 0, %v1063
  %v1065 = vrot.slane %v1051, %v1064
  %1067 = vbcast.lane.b32.xlu0 %v1065, 256
  %v1068 = vpop.permute.xlu0 %1067
  %v1069 = vlaneseq
  %v1070 = vshrl.u32 %v1069, 7
  %v1071 = vsub.s32 1, %v1070
  %v1072 = vrot.slane %v1051, %v1071
  %1074 = vbcast.lane.b32.xlu0 %v1072, 256
  %v1075 = vpop.permute.xlu0 %1074
  %v1076 = vlaneseq
  %v1077 = vshrl.u32 %v1076, 7
  %v1078 = vsub.s32 2, %v1077
  %v1079 = vrot.slane %v1051, %v1078
  %1081 = vbcast.lane.b32.xlu0 %v1079, 256
  %v1082 = vpop.permute.xlu0 %1081
  %v1083 = vlaneseq
  %v1084 = vshrl.u32 %v1083, 7
  %v1085 = vsub.s32 3, %v1084
  %v1086 = vrot.slane %v1051, %v1085
  %1088 = vbcast.lane.b32.xlu0 %v1086, 256
  %v1089 = vpop.permute.xlu0 %1088
  %v1090 = vlaneseq
  %v1091 = vshrl.u32 %v1090, 7
  %v1092 = vsub.s32 4, %v1091
  %v1093 = vrot.slane %v1051, %v1092
  %1095 = vbcast.lane.b32.xlu0 %v1093, 256
  %v1096 = vpop.permute.xlu0 %1095
  %v1097 = vlaneseq
  %v1098 = vshrl.u32 %v1097, 7
  %v1099 = vsub.s32 5, %v1098
  %v1100 = vrot.slane %v1051, %v1099
  %1102 = vbcast.lane.b32.xlu0 %v1100, 256
  %v1103 = vpop.permute.xlu0 %1102
  %v1104 = vlaneseq
  %v1105 = vshrl.u32 %v1104, 7
  %v1106 = vsub.s32 6, %v1105
  %v1107 = vrot.slane %v1051, %v1106
  %1109 = vbcast.lane.b32.xlu0 %v1107, 256
  %v1110 = vpop.permute.xlu0 %1109
  %v1111 = vlaneseq
  %v1112 = vshrl.u32 %v1111, 7
  %v1113 = vsub.s32 7, %v1112
  %v1114 = vrot.slane %v1051, %v1113
  %1116 = vbcast.lane.b32.xlu0 %v1114, 256
  %v1117 = vpop.permute.xlu0 %1116
  %v1118 = vmul.f32 %v1068, %v1054
  %v1119 = vmul.f32 %v1075, %v1055
  %v1120 = vmul.f32 %v1082, %v1056
  %v1121 = vmul.f32 %v1089, %v1057
  %v1122 = vmul.f32 %v1096, %v1058
  %v1123 = vmul.f32 %v1103, %v1059
  %v1124 = vmul.f32 %v1110, %v1060
  %v1125 = vmul.f32 %v1117, %v1061
  %v1126 = vsel %vm23, %v1118, 0.0
  %v1127 = vsel %vm23, %v1119, 0.0
  %v1128 = vadd.f32 %v1126, %v1127
  %v1129 = vsel %vm23, %v1120, 0.0
  %v1130 = vadd.f32 %v1128, %v1129
  %v1131 = vsel %vm23, %v1121, 0.0
  %v1132 = vadd.f32 %v1130, %v1131
  %v1133 = vsel %vm23, %v1122, 0.0
  %v1134 = vadd.f32 %v1132, %v1133
  %v1135 = vsel %vm23, %v1123, 0.0
  %v1136 = vadd.f32 %v1134, %v1135
  %v1137 = vsel %vm23, %v1124, 0.0
  %v1138 = vadd.f32 %v1136, %v1137
  %v1139 = vsel %vm23, %v1125, 0.0
  %v1140 = vadd.f32 %v1138, %v1139
  %v1141 = vlaneseq
  %v1142 = vshrl.u32 %v1141, 7
  %v1143 = vsub.s32 0, %v1142
  %v1144 = vrot.slane %v1053, %v1143
  %1146 = vbcast.lane.b32.xlu0 %v1144, 256
  %v1147 = vpop.permute.xlu0 %1146
  %v1148 = vlaneseq
  %v1149 = vshrl.u32 %v1148, 7
  %v1150 = vsub.s32 1, %v1149
  %v1151 = vrot.slane %v1053, %v1150
  %1153 = vbcast.lane.b32.xlu0 %v1151, 256
  %v1154 = vpop.permute.xlu0 %1153
  %v1155 = vlaneseq
  %v1156 = vshrl.u32 %v1155, 7
  %v1157 = vsub.s32 2, %v1156
  %v1158 = vrot.slane %v1053, %v1157
  %1160 = vbcast.lane.b32.xlu0 %v1158, 256
  %v1161 = vpop.permute.xlu0 %1160
  %v1162 = vlaneseq
  %v1163 = vshrl.u32 %v1162, 7
  %v1164 = vsub.s32 3, %v1163
  %v1165 = vrot.slane %v1053, %v1164
  %1167 = vbcast.lane.b32.xlu0 %v1165, 256
  %v1168 = vpop.permute.xlu0 %1167
  %v1169 = vlaneseq
  %v1170 = vshrl.u32 %v1169, 7
  %v1171 = vsub.s32 4, %v1170
  %v1172 = vrot.slane %v1053, %v1171
  %1174 = vbcast.lane.b32.xlu0 %v1172, 256
  %v1175 = vpop.permute.xlu0 %1174
  %v1176 = vlaneseq
  %v1177 = vshrl.u32 %v1176, 7
  %v1178 = vsub.s32 5, %v1177
  %v1179 = vrot.slane %v1053, %v1178
  %1181 = vbcast.lane.b32.xlu0 %v1179, 256
  %v1182 = vpop.permute.xlu0 %1181
  %v1183 = vlaneseq
  %v1184 = vshrl.u32 %v1183, 7
  %v1185 = vsub.s32 6, %v1184
  %v1186 = vrot.slane %v1053, %v1185
  %1188 = vbcast.lane.b32.xlu0 %v1186, 256
  %v1189 = vpop.permute.xlu0 %1188
  %v1190 = vlaneseq
  %v1191 = vshrl.u32 %v1190, 7
  %v1192 = vsub.s32 7, %v1191
  %v1193 = vrot.slane %v1053, %v1192
  %1195 = vbcast.lane.b32.xlu0 %v1193, 256
  %v1196 = vpop.permute.xlu0 %1195
  %v1197 = vmul.f32 %v1147, %v1054
  %v1198 = vmul.f32 %v1154, %v1055
  %v1199 = vmul.f32 %v1161, %v1056
  %v1200 = vmul.f32 %v1168, %v1057
  %v1201 = vmul.f32 %v1175, %v1058
  %v1202 = vmul.f32 %v1182, %v1059
  %v1203 = vmul.f32 %v1189, %v1060
  %v1204 = vmul.f32 %v1196, %v1061
  %v1205 = vsel %vm23, %v1197, 0.0
  %v1206 = vsel %vm23, %v1198, 0.0
  %v1207 = vadd.f32 %v1205, %v1206
  %v1208 = vsel %vm23, %v1199, 0.0
  %v1209 = vadd.f32 %v1207, %v1208
  %v1210 = vsel %vm23, %v1200, 0.0
  %v1211 = vadd.f32 %v1209, %v1210
  %v1212 = vsel %vm23, %v1201, 0.0
  %v1213 = vadd.f32 %v1211, %v1212
  %v1214 = vsel %vm23, %v1202, 0.0
  %v1215 = vadd.f32 %v1213, %v1214
  %v1216 = vsel %vm23, %v1203, 0.0
  %v1217 = vadd.f32 %v1215, %v1216
  %v1218 = vsel %vm23, %v1204, 0.0
  %v1219 = vadd.f32 %v1217, %v1218
  %1221 = vrot.lane.b32.xlu0 %v1140, 32
  %v1222 = vpop.permute.xlu0 %1221
  %1225 = vrot.lane.b32.xlu0 %v1219, 64
  %v1226 = vpop.permute.xlu0 %1225
  %v1228 = vsel %vm210, %v1047, %v1222
  %v1229 = vsel %vm23, %v1228, %v1226
  %v1230 = vld [vmem:[%s4] sm:$0xff]
  %v1231 = vld [vmem:[%s4 + $0x8] sm:$0xff]
  %v1232 = vld [vmem:[%s4 + $0x10] sm:$0xff]
  %v1233 = vld [vmem:[%s4 + $0x18] sm:$0xff]
  %v1234 = vld [vmem:[%s4 + $0x20] sm:$0xff]
  %v1235 = vld [vmem:[%s4 + $0x28] sm:$0xff]
  %v1236 = vld [vmem:[%s4 + $0x30] sm:$0xff]
  %v1237 = vld [vmem:[%s4 + $0x38] sm:$0xff]
  %v1238 = vld [vmem:[%s4 + $0x40] sm:$0xff]
  %v1239 = vld [vmem:[%s4 + $0x48] sm:$0xff]
  %v1240 = vld [vmem:[%s4 + $0x50] sm:$0xff]
  %v1241 = vld [vmem:[%s4 + $0x58] sm:$0xff]
  %v1242 = vld [vmem:[%s4 + $0x60] sm:$0xff]
  %v1243 = vld [vmem:[%s4 + $0x68] sm:$0xff]
  %v1244 = vld [vmem:[%s4 + $0x70] sm:$0xff]
  %v1245 = vld [vmem:[%s4 + $0x78] sm:$0xff]
  %v1246 = vld [vmem:[%s4 + $0x80] sm:$0xff]
  %v1247 = vld [vmem:[%s4 + $0x88] sm:$0xff]
  %v1248 = vld [vmem:[%s4 + $0x90] sm:$0xff]
  %v1249 = vld [vmem:[%s4 + $0x98] sm:$0xff]
  %v1250 = vld [vmem:[%s4 + $0xa0] sm:$0xff]
  %v1251 = vld [vmem:[%s4 + $0xa8] sm:$0xff]
  %v1252 = vld [vmem:[%s4 + $0xb0] sm:$0xff]
  %v1253 = vld [vmem:[%s4 + $0xb8] sm:$0xff]
  %v1254 = vld [vmem:[%s5] sm:$0x3]
  %v1256 = vlaneseq
  %v1257 = vshrl.u32 %v1256, 7
  %v1258 = vsub.s32 0, %v1257
  %v1259 = vrot.slane %v1254, %v1258
  %v1260 = vlaneseq
  %v1261 = vshrl.u32 %v1260, 7
  %v1262 = vsub.s32 1, %v1261
  %v1263 = vrot.slane %v1254, %v1262
  %v1267 = vsel %vm249, %v1229, 0
  %1269 = vmatprep.subr.mxu0 %v1231
  %1270 = vmatpush1.msra.mxu0 %v1230
  %1271 = vmatprep.subr.mxu0 %v1233
  %1272 = vmatpush1.msra.mxu0 %v1232
  %1273 = vmatprep.subr.mxu0 %v1235
  %1274 = vmatpush1.msra.mxu0 %v1234
  %1275 = vmatprep.subr.mxu0 %v1237
  %1276 = vmatpush1.msra.mxu0 %v1236
  %1277 = vmatprep.subr.mxu0 %v1239
  %1278 = vmatpush1.msra.mxu0 %v1238
  %1279 = vmatprep.subr.mxu0 %v1241
  %1280 = vmatpush1.msra.mxu0 %v1240
  %1281 = vmatprep.subr.mxu0 %v1243
  %1282 = vmatpush1.msra.mxu0 %v1242
  %1283 = vmatprep.subr.mxu0 %v1245
  %1284 = vmatpush1.msra.mxu0 %v1244
  %1285 = vmatprep.subr.mxu0 %v1247
  %1286 = vmatpush1.msra.mxu0 %v1246
  %1287 = vmatprep.subr.mxu0 %v1249
  %1288 = vmatpush1.msra.mxu0 %v1248
  %1289 = vmatprep.subr.mxu0 %v1251
  %1290 = vmatpush1.msra.mxu0 %v1250
  %1291 = vmatprep.subr.mxu0 %v1253
  %1292 = vmatpush1.msra.mxu0 %v1252
  %1293 = vmatprep.subr.mxu0 0.0
  %1294 = vmatpush1.msra.mxu0 0.0
  %1295 = vmatprep.subr.mxu0 0.0
  %1296 = vmatpush1.msra.mxu0 0.0
  %1297 = vmatprep.subr.mxu0 0.0
  %1298 = vmatpush1.msra.mxu0 0.0
  %1299 = vmatprep.subr.mxu0 0.0
  %1300 = vmatpush1.msra.mxu0 0.0
  %1301 = vmatprep.subr.mxu0 0.0
  %1302 = vmatpush1.msra.mxu0 0.0
  %1303 = vmatprep.subr.mxu0 0.0
  %1304 = vmatpush1.msra.mxu0 0.0
  %1305 = vmatprep.subr.mxu0 0.0
  %1306 = vmatpush1.msra.mxu0 0.0
  %1307 = vmatprep.subr.mxu0 0.0
  %1308 = vmatpush1.msra.mxu0 0.0
  %1309 = vmatprep.subr.mxu0 0.0
  %1310 = vmatpush1.msra.mxu0 0.0
  %1311 = vmatprep.subr.mxu0 0.0
  %1312 = vmatpush1.msra.mxu0 0.0
  %1313 = vmatprep.subr.mxu0 0.0
  %1314 = vmatpush1.msra.mxu0 0.0
  %1315 = vmatprep.subr.mxu0 0.0
  %1316 = vmatpush1.msra.mxu0 0.0
  %1317 = vmatprep.subr.mxu0 0.0
  %1318 = vmatpush1.msra.mxu0 0.0
  %1319 = vmatprep.subr.mxu0 0.0
  %1320 = vmatpush1.msra.mxu0 0.0
  %1321 = vmatprep.subr.mxu0 0.0
  %1322 = vmatpush1.msra.mxu0 0.0
  %1323 = vmatprep.subr.mxu0 0.0
  %1324 = vmatpush1.msra.mxu0 0.0
  %1325 = vmatprep.subr.mxu0 0.0
  %1326 = vmatpush1.msra.mxu0 0.0
  %1327 = vmatprep.subr.mxu0 0.0
  %1328 = vmatpush1.msra.mxu0 0.0
  %1329 = vmatprep.subr.mxu0 0.0
  %1330 = vmatpush1.msra.mxu0 0.0
  %1331 = vmatprep.subr.mxu0 0.0
  %1332 = vmatpush1.msra.mxu0 0.0
  %1333 = vmatprep.mubr.f32.mxu0 0.0
  %1334 = vmatmul.mubr.f32.gmra.mrb[0].mxu0 %v1267
  %v1335 = vpop.f32.mrb[0].mxu0
  %v1336 = vadd.f32 %v1259, %v1335
  %v1337 = vpop.f32.mrb[0].mxu0
  %v1338 = vadd.f32 %v1263, %v1337
  %1339 = vdwg.mxu0
  %v1340 = vtanh.pop %v1336
  %v1341 = vxor.u32 %v1336, 2147483648
  %v1342 = vmul.f32 %v1341, 1.442695
  %v1343 = vpow.pop %v1342
  %v1344 = vadd.f32 %v1343, 1.0
  %v1345 = vrcp.pop %v1344
  %v1346 = vmul.f32 1.0, %v1345
  %v1347 = vxor.u32 %v1338, 2147483648
  %v1348 = vmul.f32 %v1347, 1.442695
  %v1349 = vpow.pop %v1348
  %v1350 = vadd.f32 %v1349, 1.0
  %v1351 = vrcp.pop %v1350
  %v1352 = vmul.f32 1.0, %v1351
  %1354 = vrot.lane.b32.xlu0 %v1340, 32
  %v1355 = vpop.permute.xlu0 %1354
  %v1357 = vmul.f32 %v1346, %v1355
  %v1358 = vmul.f32 %v1346, %v1222
  %1360 = vrot.lane.b32.xlu0 %v1358, 96
  %v1361 = vpop.permute.xlu0 %1360
  %v1363 = vadd.f32 %v1357, %v1361
  %v1364 = vmul.f32 %v1346, %v1226
  %1366 = vrot.lane.b32.xlu0 %v1364, 64
  %v1367 = vpop.permute.xlu0 %1366
  %v1369 = vadd.f32 %v1363, %v1367
  %v1370 = vtanh.pop %v1369
  %1372 = vrot.lane.b32.xlu0 %v1370, 96
  %v1373 = vpop.permute.xlu0 %1372
  %v1375 = vmul.f32 %v1352, %v1373
  %v1376 = vsel %vm210, %v1375, %v1369
  %1378 = vset.pattern.permute.xlu0 0
  %1379 = vperm.xlu0 %1378, %v1049
  %v1380 = vpop.permute.xlu0 %1379
  %v1382 = vmul.f32 %v1380, %v1376
  %s1383 = scalar_lea.vmem %s6, 24
  %1384 = vst.msk [vmem:[%s1383] sm:$0xff] %vm23, %v1382
  %s1385 = scalar_lea.vmem %s0, 32
  %v1386 = vld [vmem:[%s1385] sm:$0xff]
  %s1387 = scalar_lea.vmem %s1, 32
  %v1388 = vld [vmem:[%s1387] sm:$0xff]
  %s1389 = scalar_lea.vmem %s2, 32
  %v1390 = vld [vmem:[%s1389] sm:$0xff]
  %s1391 = scalar_lea.vmem %s3, 32
  %v1392 = vld [vmem:[%s1391] sm:$0xff]
  %v1393 = vld [vmem:[%s6] sm:$0xff]
  %v1394 = vld [vmem:[%s6 + $0x8] sm:$0xff]
  %v1395 = vld [vmem:[%s6 + $0x10] sm:$0xff]
  %v1396 = vld [vmem:[%s6 + $0x18] sm:$0xff]
  %v1397 = vld [vmem:[%s6 + $0x20] sm:$0xff]
  %v1398 = vld [vmem:[%s6 + $0x28] sm:$0xff]
  %v1399 = vld [vmem:[%s6 + $0x30] sm:$0xff]
  %v1400 = vld [vmem:[%s6 + $0x38] sm:$0xff]
  %v1401 = vlaneseq
  %v1402 = vshrl.u32 %v1401, 7
  %v1403 = vsub.s32 0, %v1402
  %v1404 = vrot.slane %v1390, %v1403
  %1406 = vbcast.lane.b32.xlu0 %v1404, 256
  %v1407 = vpop.permute.xlu0 %1406
  %v1408 = vlaneseq
  %v1409 = vshrl.u32 %v1408, 7
  %v1410 = vsub.s32 1, %v1409
  %v1411 = vrot.slane %v1390, %v1410
  %1413 = vbcast.lane.b32.xlu0 %v1411, 256
  %v1414 = vpop.permute.xlu0 %1413
  %v1415 = vlaneseq
  %v1416 = vshrl.u32 %v1415, 7
  %v1417 = vsub.s32 2, %v1416
  %v1418 = vrot.slane %v1390, %v1417
  %1420 = vbcast.lane.b32.xlu0 %v1418, 256
  %v1421 = vpop.permute.xlu0 %1420
  %v1422 = vlaneseq
  %v1423 = vshrl.u32 %v1422, 7
  %v1424 = vsub.s32 3, %v1423
  %v1425 = vrot.slane %v1390, %v1424
  %1427 = vbcast.lane.b32.xlu0 %v1425, 256
  %v1428 = vpop.permute.xlu0 %1427
  %v1429 = vlaneseq
  %v1430 = vshrl.u32 %v1429, 7
  %v1431 = vsub.s32 4, %v1430
  %v1432 = vrot.slane %v1390, %v1431
  %1434 = vbcast.lane.b32.xlu0 %v1432, 256
  %v1435 = vpop.permute.xlu0 %1434
  %v1436 = vlaneseq
  %v1437 = vshrl.u32 %v1436, 7
  %v1438 = vsub.s32 5, %v1437
  %v1439 = vrot.slane %v1390, %v1438
  %1441 = vbcast.lane.b32.xlu0 %v1439, 256
  %v1442 = vpop.permute.xlu0 %1441
  %v1443 = vlaneseq
  %v1444 = vshrl.u32 %v1443, 7
  %v1445 = vsub.s32 6, %v1444
  %v1446 = vrot.slane %v1390, %v1445
  %1448 = vbcast.lane.b32.xlu0 %v1446, 256
  %v1449 = vpop.permute.xlu0 %1448
  %v1450 = vlaneseq
  %v1451 = vshrl.u32 %v1450, 7
  %v1452 = vsub.s32 7, %v1451
  %v1453 = vrot.slane %v1390, %v1452
  %1455 = vbcast.lane.b32.xlu0 %v1453, 256
  %v1456 = vpop.permute.xlu0 %1455
  %v1457 = vmul.f32 %v1407, %v1393
  %v1458 = vmul.f32 %v1414, %v1394
  %v1459 = vmul.f32 %v1421, %v1395
  %v1460 = vmul.f32 %v1428, %v1396
  %v1461 = vmul.f32 %v1435, %v1397
  %v1462 = vmul.f32 %v1442, %v1398
  %v1463 = vmul.f32 %v1449, %v1399
  %v1464 = vmul.f32 %v1456, %v1400
  %v1465 = vsel %vm23, %v1457, 0.0
  %v1466 = vsel %vm23, %v1458, 0.0
  %v1467 = vadd.f32 %v1465, %v1466
  %v1468 = vsel %vm23, %v1459, 0.0
  %v1469 = vadd.f32 %v1467, %v1468
  %v1470 = vsel %vm23, %v1460, 0.0
  %v1471 = vadd.f32 %v1469, %v1470
  %v1472 = vsel %vm23, %v1461, 0.0
  %v1473 = vadd.f32 %v1471, %v1472
  %v1474 = vsel %vm23, %v1462, 0.0
  %v1475 = vadd.f32 %v1473, %v1474
  %v1476 = vsel %vm23, %v1463, 0.0
  %v1477 = vadd.f32 %v1475, %v1476
  %v1478 = vsel %vm23, %v1464, 0.0
  %v1479 = vadd.f32 %v1477, %v1478
  %v1480 = vlaneseq
  %v1481 = vshrl.u32 %v1480, 7
  %v1482 = vsub.s32 0, %v1481
  %v1483 = vrot.slane %v1392, %v1482
  %1485 = vbcast.lane.b32.xlu0 %v1483, 256
  %v1486 = vpop.permute.xlu0 %1485
  %v1487 = vlaneseq
  %v1488 = vshrl.u32 %v1487, 7
  %v1489 = vsub.s32 1, %v1488
  %v1490 = vrot.slane %v1392, %v1489
  %1492 = vbcast.lane.b32.xlu0 %v1490, 256
  %v1493 = vpop.permute.xlu0 %1492
  %v1494 = vlaneseq
  %v1495 = vshrl.u32 %v1494, 7
  %v1496 = vsub.s32 2, %v1495
  %v1497 = vrot.slane %v1392, %v1496
  %1499 = vbcast.lane.b32.xlu0 %v1497, 256
  %v1500 = vpop.permute.xlu0 %1499
  %v1501 = vlaneseq
  %v1502 = vshrl.u32 %v1501, 7
  %v1503 = vsub.s32 3, %v1502
  %v1504 = vrot.slane %v1392, %v1503
  %1506 = vbcast.lane.b32.xlu0 %v1504, 256
  %v1507 = vpop.permute.xlu0 %1506
  %v1508 = vlaneseq
  %v1509 = vshrl.u32 %v1508, 7
  %v1510 = vsub.s32 4, %v1509
  %v1511 = vrot.slane %v1392, %v1510
  %1513 = vbcast.lane.b32.xlu0 %v1511, 256
  %v1514 = vpop.permute.xlu0 %1513
  %v1515 = vlaneseq
  %v1516 = vshrl.u32 %v1515, 7
  %v1517 = vsub.s32 5, %v1516
  %v1518 = vrot.slane %v1392, %v1517
  %1520 = vbcast.lane.b32.xlu0 %v1518, 256
  %v1521 = vpop.permute.xlu0 %1520
  %v1522 = vlaneseq
  %v1523 = vshrl.u32 %v1522, 7
  %v1524 = vsub.s32 6, %v1523
  %v1525 = vrot.slane %v1392, %v1524
  %1527 = vbcast.lane.b32.xlu0 %v1525, 256
  %v1528 = vpop.permute.xlu0 %1527
  %v1529 = vlaneseq
  %v1530 = vshrl.u32 %v1529, 7
  %v1531 = vsub.s32 7, %v1530
  %v1532 = vrot.slane %v1392, %v1531
  %1534 = vbcast.lane.b32.xlu0 %v1532, 256
  %v1535 = vpop.permute.xlu0 %1534
  %v1536 = vmul.f32 %v1486, %v1393
  %v1537 = vmul.f32 %v1493, %v1394
  %v1538 = vmul.f32 %v1500, %v1395
  %v1539 = vmul.f32 %v1507, %v1396
  %v1540 = vmul.f32 %v1514, %v1397
  %v1541 = vmul.f32 %v1521, %v1398
  %v1542 = vmul.f32 %v1528, %v1399
  %v1543 = vmul.f32 %v1535, %v1400
  %v1544 = vsel %vm23, %v1536, 0.0
  %v1545 = vsel %vm23, %v1537, 0.0
  %v1546 = vadd.f32 %v1544, %v1545
  %v1547 = vsel %vm23, %v1538, 0.0
  %v1548 = vadd.f32 %v1546, %v1547
  %v1549 = vsel %vm23, %v1539, 0.0
  %v1550 = vadd.f32 %v1548, %v1549
  %v1551 = vsel %vm23, %v1540, 0.0
  %v1552 = vadd.f32 %v1550, %v1551
  %v1553 = vsel %vm23, %v1541, 0.0
  %v1554 = vadd.f32 %v1552, %v1553
  %v1555 = vsel %vm23, %v1542, 0.0
  %v1556 = vadd.f32 %v1554, %v1555
  %v1557 = vsel %vm23, %v1543, 0.0
  %v1558 = vadd.f32 %v1556, %v1557
  %1560 = vrot.lane.b32.xlu0 %v1479, 32
  %v1561 = vpop.permute.xlu0 %1560
  %1564 = vrot.lane.b32.xlu0 %v1558, 64
  %v1565 = vpop.permute.xlu0 %1564
  %v1567 = vsel %vm210, %v1386, %v1561
  %v1568 = vsel %vm23, %v1567, %v1565
  %v1569 = vld [vmem:[%s4] sm:$0xff]
  %v1570 = vld [vmem:[%s4 + $0x8] sm:$0xff]
  %v1571 = vld [vmem:[%s4 + $0x10] sm:$0xff]
  %v1572 = vld [vmem:[%s4 + $0x18] sm:$0xff]
  %v1573 = vld [vmem:[%s4 + $0x20] sm:$0xff]
  %v1574 = vld [vmem:[%s4 + $0x28] sm:$0xff]
  %v1575 = vld [vmem:[%s4 + $0x30] sm:$0xff]
  %v1576 = vld [vmem:[%s4 + $0x38] sm:$0xff]
  %v1577 = vld [vmem:[%s4 + $0x40] sm:$0xff]
  %v1578 = vld [vmem:[%s4 + $0x48] sm:$0xff]
  %v1579 = vld [vmem:[%s4 + $0x50] sm:$0xff]
  %v1580 = vld [vmem:[%s4 + $0x58] sm:$0xff]
  %v1581 = vld [vmem:[%s4 + $0x60] sm:$0xff]
  %v1582 = vld [vmem:[%s4 + $0x68] sm:$0xff]
  %v1583 = vld [vmem:[%s4 + $0x70] sm:$0xff]
  %v1584 = vld [vmem:[%s4 + $0x78] sm:$0xff]
  %v1585 = vld [vmem:[%s4 + $0x80] sm:$0xff]
  %v1586 = vld [vmem:[%s4 + $0x88] sm:$0xff]
  %v1587 = vld [vmem:[%s4 + $0x90] sm:$0xff]
  %v1588 = vld [vmem:[%s4 + $0x98] sm:$0xff]
  %v1589 = vld [vmem:[%s4 + $0xa0] sm:$0xff]
  %v1590 = vld [vmem:[%s4 + $0xa8] sm:$0xff]
  %v1591 = vld [vmem:[%s4 + $0xb0] sm:$0xff]
  %v1592 = vld [vmem:[%s4 + $0xb8] sm:$0xff]
  %v1593 = vld [vmem:[%s5] sm:$0x3]
  %v1595 = vlaneseq
  %v1596 = vshrl.u32 %v1595, 7
  %v1597 = vsub.s32 0, %v1596
  %v1598 = vrot.slane %v1593, %v1597
  %v1599 = vlaneseq
  %v1600 = vshrl.u32 %v1599, 7
  %v1601 = vsub.s32 1, %v1600
  %v1602 = vrot.slane %v1593, %v1601
  %v1606 = vsel %vm249, %v1568, 0
  %1608 = vmatprep.subr.mxu0 %v1570
  %1609 = vmatpush1.msra.mxu0 %v1569
  %1610 = vmatprep.subr.mxu0 %v1572
  %1611 = vmatpush1.msra.mxu0 %v1571
  %1612 = vmatprep.subr.mxu0 %v1574
  %1613 = vmatpush1.msra.mxu0 %v1573
  %1614 = vmatprep.subr.mxu0 %v1576
  %1615 = vmatpush1.msra.mxu0 %v1575
  %1616 = vmatprep.subr.mxu0 %v1578
  %1617 = vmatpush1.msra.mxu0 %v1577
  %1618 = vmatprep.subr.mxu0 %v1580
  %1619 = vmatpush1.msra.mxu0 %v1579
  %1620 = vmatprep.subr.mxu0 %v1582
  %1621 = vmatpush1.msra.mxu0 %v1581
  %1622 = vmatprep.subr.mxu0 %v1584
  %1623 = vmatpush1.msra.mxu0 %v1583
  %1624 = vmatprep.subr.mxu0 %v1586
  %1625 = vmatpush1.msra.mxu0 %v1585
  %1626 = vmatprep.subr.mxu0 %v1588
  %1627 = vmatpush1.msra.mxu0 %v1587
  %1628 = vmatprep.subr.mxu0 %v1590
  %1629 = vmatpush1.msra.mxu0 %v1589
  %1630 = vmatprep.subr.mxu0 %v1592
  %1631 = vmatpush1.msra.mxu0 %v1591
  %1632 = vmatprep.subr.mxu0 0.0
  %1633 = vmatpush1.msra.mxu0 0.0
  %1634 = vmatprep.subr.mxu0 0.0
  %1635 = vmatpush1.msra.mxu0 0.0
  %1636 = vmatprep.subr.mxu0 0.0
  %1637 = vmatpush1.msra.mxu0 0.0
  %1638 = vmatprep.subr.mxu0 0.0
  %1639 = vmatpush1.msra.mxu0 0.0
  %1640 = vmatprep.subr.mxu0 0.0
  %1641 = vmatpush1.msra.mxu0 0.0
  %1642 = vmatprep.subr.mxu0 0.0
  %1643 = vmatpush1.msra.mxu0 0.0
  %1644 = vmatprep.subr.mxu0 0.0
  %1645 = vmatpush1.msra.mxu0 0.0
  %1646 = vmatprep.subr.mxu0 0.0
  %1647 = vmatpush1.msra.mxu0 0.0
  %1648 = vmatprep.subr.mxu0 0.0
  %1649 = vmatpush1.msra.mxu0 0.0
  %1650 = vmatprep.subr.mxu0 0.0
  %1651 = vmatpush1.msra.mxu0 0.0
  %1652 = vmatprep.subr.mxu0 0.0
  %1653 = vmatpush1.msra.mxu0 0.0
  %1654 = vmatprep.subr.mxu0 0.0
  %1655 = vmatpush1.msra.mxu0 0.0
  %1656 = vmatprep.subr.mxu0 0.0
  %1657 = vmatpush1.msra.mxu0 0.0
  %1658 = vmatprep.subr.mxu0 0.0
  %1659 = vmatpush1.msra.mxu0 0.0
  %1660 = vmatprep.subr.mxu0 0.0
  %1661 = vmatpush1.msra.mxu0 0.0
  %1662 = vmatprep.subr.mxu0 0.0
  %1663 = vmatpush1.msra.mxu0 0.0
  %1664 = vmatprep.subr.mxu0 0.0
  %1665 = vmatpush1.msra.mxu0 0.0
  %1666 = vmatprep.subr.mxu0 0.0
  %1667 = vmatpush1.msra.mxu0 0.0
  %1668 = vmatprep.subr.mxu0 0.0
  %1669 = vmatpush1.msra.mxu0 0.0
  %1670 = vmatprep.subr.mxu0 0.0
  %1671 = vmatpush1.msra.mxu0 0.0
  %1672 = vmatprep.mubr.f32.mxu0 0.0
  %1673 = vmatmul.mubr.f32.gmra.mrb[0].mxu0 %v1606
  %v1674 = vpop.f32.mrb[0].mxu0
  %v1675 = vadd.f32 %v1598, %v1674
  %v1676 = vpop.f32.mrb[0].mxu0
  %v1677 = vadd.f32 %v1602, %v1676
  %1678 = vdwg.mxu0
  %v1679 = vtanh.pop %v1675
  %v1680 = vxor.u32 %v1675, 2147483648
  %v1681 = vmul.f32 %v1680, 1.442695
  %v1682 = vpow.pop %v1681
  %v1683 = vadd.f32 %v1682, 1.0
  %v1684 = vrcp.pop %v1683
  %v1685 = vmul.f32 1.0, %v1684
  %v1686 = vxor.u32 %v1677, 2147483648
  %v1687 = vmul.f32 %v1686, 1.442695
  %v1688 = vpow.pop %v1687
  %v1689 = vadd.f32 %v1688, 1.0
  %v1690 = vrcp.pop %v1689
  %v1691 = vmul.f32 1.0, %v1690
  %1693 = vrot.lane.b32.xlu0 %v1679, 32
  %v1694 = vpop.permute.xlu0 %1693
  %v1696 = vmul.f32 %v1685, %v1694
  %v1697 = vmul.f32 %v1685, %v1561
  %1699 = vrot.lane.b32.xlu0 %v1697, 96
  %v1700 = vpop.permute.xlu0 %1699
  %v1702 = vadd.f32 %v1696, %v1700
  %v1703 = vmul.f32 %v1685, %v1565
  %1705 = vrot.lane.b32.xlu0 %v1703, 64
  %v1706 = vpop.permute.xlu0 %1705
  %v1708 = vadd.f32 %v1702, %v1706
  %v1709 = vtanh.pop %v1708
  %1711 = vrot.lane.b32.xlu0 %v1709, 96
  %v1712 = vpop.permute.xlu0 %1711
  %v1714 = vmul.f32 %v1691, %v1712
  %v1715 = vsel %vm210, %v1714, %v1708
  %1717 = vset.pattern.permute.xlu0 0
  %1718 = vperm.xlu0 %1717, %v1388
  %v1719 = vpop.permute.xlu0 %1718
  %v1721 = vmul.f32 %v1719, %v1715
  %s1722 = scalar_lea.vmem %s6, 32
  %1723 = vst.msk [vmem:[%s1722] sm:$0xff] %vm23, %v1721
  %s1724 = scalar_lea.vmem %s0, 40
  %v1725 = vld [vmem:[%s1724] sm:$0xff]
  %s1726 = scalar_lea.vmem %s1, 40
  %v1727 = vld [vmem:[%s1726] sm:$0xff]
  %s1728 = scalar_lea.vmem %s2, 40
  %v1729 = vld [vmem:[%s1728] sm:$0xff]
  %s1730 = scalar_lea.vmem %s3, 40
  %v1731 = vld [vmem:[%s1730] sm:$0xff]
  %v1732 = vld [vmem:[%s6] sm:$0xff]
  %v1733 = vld [vmem:[%s6 + $0x8] sm:$0xff]
  %v1734 = vld [vmem:[%s6 + $0x10] sm:$0xff]
  %v1735 = vld [vmem:[%s6 + $0x18] sm:$0xff]
  %v1736 = vld [vmem:[%s6 + $0x20] sm:$0xff]
  %v1737 = vld [vmem:[%s6 + $0x28] sm:$0xff]
  %v1738 = vld [vmem:[%s6 + $0x30] sm:$0xff]
  %v1739 = vld [vmem:[%s6 + $0x38] sm:$0xff]
  %v1740 = vlaneseq
  %v1741 = vshrl.u32 %v1740, 7
  %v1742 = vsub.s32 0, %v1741
  %v1743 = vrot.slane %v1729, %v1742
  %1745 = vbcast.lane.b32.xlu0 %v1743, 256
  %v1746 = vpop.permute.xlu0 %1745
  %v1747 = vlaneseq
  %v1748 = vshrl.u32 %v1747, 7
  %v1749 = vsub.s32 1, %v1748
  %v1750 = vrot.slane %v1729, %v1749
  %1752 = vbcast.lane.b32.xlu0 %v1750, 256
  %v1753 = vpop.permute.xlu0 %1752
  %v1754 = vlaneseq
  %v1755 = vshrl.u32 %v1754, 7
  %v1756 = vsub.s32 2, %v1755
  %v1757 = vrot.slane %v1729, %v1756
  %1759 = vbcast.lane.b32.xlu0 %v1757, 256
  %v1760 = vpop.permute.xlu0 %1759
  %v1761 = vlaneseq
  %v1762 = vshrl.u32 %v1761, 7
  %v1763 = vsub.s32 3, %v1762
  %v1764 = vrot.slane %v1729, %v1763
  %1766 = vbcast.lane.b32.xlu0 %v1764, 256
  %v1767 = vpop.permute.xlu0 %1766
  %v1768 = vlaneseq
  %v1769 = vshrl.u32 %v1768, 7
  %v1770 = vsub.s32 4, %v1769
  %v1771 = vrot.slane %v1729, %v1770
  %1773 = vbcast.lane.b32.xlu0 %v1771, 256
  %v1774 = vpop.permute.xlu0 %1773
  %v1775 = vlaneseq
  %v1776 = vshrl.u32 %v1775, 7
  %v1777 = vsub.s32 5, %v1776
  %v1778 = vrot.slane %v1729, %v1777
  %1780 = vbcast.lane.b32.xlu0 %v1778, 256
  %v1781 = vpop.permute.xlu0 %1780
  %v1782 = vlaneseq
  %v1783 = vshrl.u32 %v1782, 7
  %v1784 = vsub.s32 6, %v1783
  %v1785 = vrot.slane %v1729, %v1784
  %1787 = vbcast.lane.b32.xlu0 %v1785, 256
  %v1788 = vpop.permute.xlu0 %1787
  %v1789 = vlaneseq
  %v1790 = vshrl.u32 %v1789, 7
  %v1791 = vsub.s32 7, %v1790
  %v1792 = vrot.slane %v1729, %v1791
  %1794 = vbcast.lane.b32.xlu0 %v1792, 256
  %v1795 = vpop.permute.xlu0 %1794
  %v1796 = vmul.f32 %v1746, %v1732
  %v1797 = vmul.f32 %v1753, %v1733
  %v1798 = vmul.f32 %v1760, %v1734
  %v1799 = vmul.f32 %v1767, %v1735
  %v1800 = vmul.f32 %v1774, %v1736
  %v1801 = vmul.f32 %v1781, %v1737
  %v1802 = vmul.f32 %v1788, %v1738
  %v1803 = vmul.f32 %v1795, %v1739
  %v1804 = vsel %vm23, %v1796, 0.0
  %v1805 = vsel %vm23, %v1797, 0.0
  %v1806 = vadd.f32 %v1804, %v1805
  %v1807 = vsel %vm23, %v1798, 0.0
  %v1808 = vadd.f32 %v1806, %v1807
  %v1809 = vsel %vm23, %v1799, 0.0
  %v1810 = vadd.f32 %v1808, %v1809
  %v1811 = vsel %vm23, %v1800, 0.0
  %v1812 = vadd.f32 %v1810, %v1811
  %v1813 = vsel %vm23, %v1801, 0.0
  %v1814 = vadd.f32 %v1812, %v1813
  %v1815 = vsel %vm23, %v1802, 0.0
  %v1816 = vadd.f32 %v1814, %v1815
  %v1817 = vsel %vm23, %v1803, 0.0
  %v1818 = vadd.f32 %v1816, %v1817
  %v1819 = vlaneseq
  %v1820 = vshrl.u32 %v1819, 7
  %v1821 = vsub.s32 0, %v1820
  %v1822 = vrot.slane %v1731, %v1821
  %1824 = vbcast.lane.b32.xlu0 %v1822, 256
  %v1825 = vpop.permute.xlu0 %1824
  %v1826 = vlaneseq
  %v1827 = vshrl.u32 %v1826, 7
  %v1828 = vsub.s32 1, %v1827
  %v1829 = vrot.slane %v1731, %v1828
  %1831 = vbcast.lane.b32.xlu0 %v1829, 256
  %v1832 = vpop.permute.xlu0 %1831
  %v1833 = vlaneseq
  %v1834 = vshrl.u32 %v1833, 7
  %v1835 = vsub.s32 2, %v1834
  %v1836 = vrot.slane %v1731, %v1835
  %1838 = vbcast.lane.b32.xlu0 %v1836, 256
  %v1839 = vpop.permute.xlu0 %1838
  %v1840 = vlaneseq
  %v1841 = vshrl.u32 %v1840, 7
  %v1842 = vsub.s32 3, %v1841
  %v1843 = vrot.slane %v1731, %v1842
  %1845 = vbcast.lane.b32.xlu0 %v1843, 256
  %v1846 = vpop.permute.xlu0 %1845
  %v1847 = vlaneseq
  %v1848 = vshrl.u32 %v1847, 7
  %v1849 = vsub.s32 4, %v1848
  %v1850 = vrot.slane %v1731, %v1849
  %1852 = vbcast.lane.b32.xlu0 %v1850, 256
  %v1853 = vpop.permute.xlu0 %1852
  %v1854 = vlaneseq
  %v1855 = vshrl.u32 %v1854, 7
  %v1856 = vsub.s32 5, %v1855
  %v1857 = vrot.slane %v1731, %v1856
  %1859 = vbcast.lane.b32.xlu0 %v1857, 256
  %v1860 = vpop.permute.xlu0 %1859
  %v1861 = vlaneseq
  %v1862 = vshrl.u32 %v1861, 7
  %v1863 = vsub.s32 6, %v1862
  %v1864 = vrot.slane %v1731, %v1863
  %1866 = vbcast.lane.b32.xlu0 %v1864, 256
  %v1867 = vpop.permute.xlu0 %1866
  %v1868 = vlaneseq
  %v1869 = vshrl.u32 %v1868, 7
  %v1870 = vsub.s32 7, %v1869
  %v1871 = vrot.slane %v1731, %v1870
  %1873 = vbcast.lane.b32.xlu0 %v1871, 256
  %v1874 = vpop.permute.xlu0 %1873
  %v1875 = vmul.f32 %v1825, %v1732
  %v1876 = vmul.f32 %v1832, %v1733
  %v1877 = vmul.f32 %v1839, %v1734
  %v1878 = vmul.f32 %v1846, %v1735
  %v1879 = vmul.f32 %v1853, %v1736
  %v1880 = vmul.f32 %v1860, %v1737
  %v1881 = vmul.f32 %v1867, %v1738
  %v1882 = vmul.f32 %v1874, %v1739
  %v1883 = vsel %vm23, %v1875, 0.0
  %v1884 = vsel %vm23, %v1876, 0.0
  %v1885 = vadd.f32 %v1883, %v1884
  %v1886 = vsel %vm23, %v1877, 0.0
  %v1887 = vadd.f32 %v1885, %v1886
  %v1888 = vsel %vm23, %v1878, 0.0
  %v1889 = vadd.f32 %v1887, %v1888
  %v1890 = vsel %vm23, %v1879, 0.0
  %v1891 = vadd.f32 %v1889, %v1890
  %v1892 = vsel %vm23, %v1880, 0.0
  %v1893 = vadd.f32 %v1891, %v1892
  %v1894 = vsel %vm23, %v1881, 0.0
  %v1895 = vadd.f32 %v1893, %v1894
  %v1896 = vsel %vm23, %v1882, 0.0
  %v1897 = vadd.f32 %v1895, %v1896
  %1899 = vrot.lane.b32.xlu0 %v1818, 32
  %v1900 = vpop.permute.xlu0 %1899
  %1903 = vrot.lane.b32.xlu0 %v1897, 64
  %v1904 = vpop.permute.xlu0 %1903
  %v1906 = vsel %vm210, %v1725, %v1900
  %v1907 = vsel %vm23, %v1906, %v1904
  %v1908 = vld [vmem:[%s4] sm:$0xff]
  %v1909 = vld [vmem:[%s4 + $0x8] sm:$0xff]
  %v1910 = vld [vmem:[%s4 + $0x10] sm:$0xff]
  %v1911 = vld [vmem:[%s4 + $0x18] sm:$0xff]
  %v1912 = vld [vmem:[%s4 + $0x20] sm:$0xff]
  %v1913 = vld [vmem:[%s4 + $0x28] sm:$0xff]
  %v1914 = vld [vmem:[%s4 + $0x30] sm:$0xff]
  %v1915 = vld [vmem:[%s4 + $0x38] sm:$0xff]
  %v1916 = vld [vmem:[%s4 + $0x40] sm:$0xff]
  %v1917 = vld [vmem:[%s4 + $0x48] sm:$0xff]
  %v1918 = vld [vmem:[%s4 + $0x50] sm:$0xff]
  %v1919 = vld [vmem:[%s4 + $0x58] sm:$0xff]
  %v1920 = vld [vmem:[%s4 + $0x60] sm:$0xff]
  %v1921 = vld [vmem:[%s4 + $0x68] sm:$0xff]
  %v1922 = vld [vmem:[%s4 + $0x70] sm:$0xff]
  %v1923 = vld [vmem:[%s4 + $0x78] sm:$0xff]
  %v1924 = vld [vmem:[%s4 + $0x80] sm:$0xff]
  %v1925 = vld [vmem:[%s4 + $0x88] sm:$0xff]
  %v1926 = vld [vmem:[%s4 + $0x90] sm:$0xff]
  %v1927 = vld [vmem:[%s4 + $0x98] sm:$0xff]
  %v1928 = vld [vmem:[%s4 + $0xa0] sm:$0xff]
  %v1929 = vld [vmem:[%s4 + $0xa8] sm:$0xff]
  %v1930 = vld [vmem:[%s4 + $0xb0] sm:$0xff]
  %v1931 = vld [vmem:[%s4 + $0xb8] sm:$0xff]
  %v1932 = vld [vmem:[%s5] sm:$0x3]
  %v1934 = vlaneseq
  %v1935 = vshrl.u32 %v1934, 7
  %v1936 = vsub.s32 0, %v1935
  %v1937 = vrot.slane %v1932, %v1936
  %v1938 = vlaneseq
  %v1939 = vshrl.u32 %v1938, 7
  %v1940 = vsub.s32 1, %v1939
  %v1941 = vrot.slane %v1932, %v1940
  %v1945 = vsel %vm249, %v1907, 0
  %1947 = vmatprep.subr.mxu0 %v1909
  %1948 = vmatpush1.msra.mxu0 %v1908
  %1949 = vmatprep.subr.mxu0 %v1911
  %1950 = vmatpush1.msra.mxu0 %v1910
  %1951 = vmatprep.subr.mxu0 %v1913
  %1952 = vmatpush1.msra.mxu0 %v1912
  %1953 = vmatprep.subr.mxu0 %v1915
  %1954 = vmatpush1.msra.mxu0 %v1914
  %1955 = vmatprep.subr.mxu0 %v1917
  %1956 = vmatpush1.msra.mxu0 %v1916
  %1957 = vmatprep.subr.mxu0 %v1919
  %1958 = vmatpush1.msra.mxu0 %v1918
  %1959 = vmatprep.subr.mxu0 %v1921
  %1960 = vmatpush1.msra.mxu0 %v1920
  %1961 = vmatprep.subr.mxu0 %v1923
  %1962 = vmatpush1.msra.mxu0 %v1922
  %1963 = vmatprep.subr.mxu0 %v1925
  %1964 = vmatpush1.msra.mxu0 %v1924
  %1965 = vmatprep.subr.mxu0 %v1927
  %1966 = vmatpush1.msra.mxu0 %v1926
  %1967 = vmatprep.subr.mxu0 %v1929
  %1968 = vmatpush1.msra.mxu0 %v1928
  %1969 = vmatprep.subr.mxu0 %v1931
  %1970 = vmatpush1.msra.mxu0 %v1930
  %1971 = vmatprep.subr.mxu0 0.0
  %1972 = vmatpush1.msra.mxu0 0.0
  %1973 = vmatprep.subr.mxu0 0.0
  %1974 = vmatpush1.msra.mxu0 0.0
  %1975 = vmatprep.subr.mxu0 0.0
  %1976 = vmatpush1.msra.mxu0 0.0
  %1977 = vmatprep.subr.mxu0 0.0
  %1978 = vmatpush1.msra.mxu0 0.0
  %1979 = vmatprep.subr.mxu0 0.0
  %1980 = vmatpush1.msra.mxu0 0.0
  %1981 = vmatprep.subr.mxu0 0.0
  %1982 = vmatpush1.msra.mxu0 0.0
  %1983 = vmatprep.subr.mxu0 0.0
  %1984 = vmatpush1.msra.mxu0 0.0
  %1985 = vmatprep.subr.mxu0 0.0
  %1986 = vmatpush1.msra.mxu0 0.0
  %1987 = vmatprep.subr.mxu0 0.0
  %1988 = vmatpush1.msra.mxu0 0.0
  %1989 = vmatprep.subr.mxu0 0.0
  %1990 = vmatpush1.msra.mxu0 0.0
  %1991 = vmatprep.subr.mxu0 0.0
  %1992 = vmatpush1.msra.mxu0 0.0
  %1993 = vmatprep.subr.mxu0 0.0
  %1994 = vmatpush1.msra.mxu0 0.0
  %1995 = vmatprep.subr.mxu0 0.0
  %1996 = vmatpush1.msra.mxu0 0.0
  %1997 = vmatprep.subr.mxu0 0.0
  %1998 = vmatpush1.msra.mxu0 0.0
  %1999 = vmatprep.subr.mxu0 0.0
  %2000 = vmatpush1.msra.mxu0 0.0
  %2001 = vmatprep.subr.mxu0 0.0
  %2002 = vmatpush1.msra.mxu0 0.0
  %2003 = vmatprep.subr.mxu0 0.0
  %2004 = vmatpush1.msra.mxu0 0.0
  %2005 = vmatprep.subr.mxu0 0.0
  %2006 = vmatpush1.msra.mxu0 0.0
  %2007 = vmatprep.subr.mxu0 0.0
  %2008 = vmatpush1.msra.mxu0 0.0
  %2009 = vmatprep.subr.mxu0 0.0
  %2010 = vmatpush1.msra.mxu0 0.0
  %2011 = vmatprep.mubr.f32.mxu0 0.0
  %2012 = vmatmul.mubr.f32.gmra.mrb[0].mxu0 %v1945
  %v2013 = vpop.f32.mrb[0].mxu0
  %v2014 = vadd.f32 %v1937, %v2013
  %v2015 = vpop.f32.mrb[0].mxu0
  %v2016 = vadd.f32 %v1941, %v2015
  %2017 = vdwg.mxu0
  %v2018 = vtanh.pop %v2014
  %v2019 = vxor.u32 %v2014, 2147483648
  %v2020 = vmul.f32 %v2019, 1.442695
  %v2021 = vpow.pop %v2020
  %v2022 = vadd.f32 %v2021, 1.0
  %v2023 = vrcp.pop %v2022
  %v2024 = vmul.f32 1.0, %v2023
  %v2025 = vxor.u32 %v2016, 2147483648
  %v2026 = vmul.f32 %v2025, 1.442695
  %v2027 = vpow.pop %v2026
  %v2028 = vadd.f32 %v2027, 1.0
  %v2029 = vrcp.pop %v2028
  %v2030 = vmul.f32 1.0, %v2029
  %2032 = vrot.lane.b32.xlu0 %v2018, 32
  %v2033 = vpop.permute.xlu0 %2032
  %v2035 = vmul.f32 %v2024, %v2033
  %v2036 = vmul.f32 %v2024, %v1900
  %2038 = vrot.lane.b32.xlu0 %v2036, 96
  %v2039 = vpop.permute.xlu0 %2038
  %v2041 = vadd.f32 %v2035, %v2039
  %v2042 = vmul.f32 %v2024, %v1904
  %2044 = vrot.lane.b32.xlu0 %v2042, 64
  %v2045 = vpop.permute.xlu0 %2044
  %v2047 = vadd.f32 %v2041, %v2045
  %v2048 = vtanh.pop %v2047
  %2050 = vrot.lane.b32.xlu0 %v2048, 96
  %v2051 = vpop.permute.xlu0 %2050
  %v2053 = vmul.f32 %v2030, %v2051
  %v2054 = vsel %vm210, %v2053, %v2047
  %2056 = vset.pattern.permute.xlu0 0
  %2057 = vperm.xlu0 %2056, %v1727
  %v2058 = vpop.permute.xlu0 %2057
  %v2060 = vmul.f32 %v2058, %v2054
  %s2061 = scalar_lea.vmem %s6, 40
  %2062 = vst.msk [vmem:[%s2061] sm:$0xff] %vm23, %v2060
  %s2063 = scalar_lea.vmem %s0, 48
  %v2064 = vld [vmem:[%s2063] sm:$0xff]
  %s2065 = scalar_lea.vmem %s1, 48
  %v2066 = vld [vmem:[%s2065] sm:$0xff]
  %s2067 = scalar_lea.vmem %s2, 48
  %v2068 = vld [vmem:[%s2067] sm:$0xff]
  %s2069 = scalar_lea.vmem %s3, 48
  %v2070 = vld [vmem:[%s2069] sm:$0xff]
  %v2071 = vld [vmem:[%s6] sm:$0xff]
  %v2072 = vld [vmem:[%s6 + $0x8] sm:$0xff]
  %v2073 = vld [vmem:[%s6 + $0x10] sm:$0xff]
  %v2074 = vld [vmem:[%s6 + $0x18] sm:$0xff]
  %v2075 = vld [vmem:[%s6 + $0x20] sm:$0xff]
  %v2076 = vld [vmem:[%s6 + $0x28] sm:$0xff]
  %v2077 = vld [vmem:[%s6 + $0x30] sm:$0xff]
  %v2078 = vld [vmem:[%s6 + $0x38] sm:$0xff]
  %v2079 = vlaneseq
  %v2080 = vshrl.u32 %v2079, 7
  %v2081 = vsub.s32 0, %v2080
  %v2082 = vrot.slane %v2068, %v2081
  %2084 = vbcast.lane.b32.xlu0 %v2082, 256
  %v2085 = vpop.permute.xlu0 %2084
  %v2086 = vlaneseq
  %v2087 = vshrl.u32 %v2086, 7
  %v2088 = vsub.s32 1, %v2087
  %v2089 = vrot.slane %v2068, %v2088
  %2091 = vbcast.lane.b32.xlu0 %v2089, 256
  %v2092 = vpop.permute.xlu0 %2091
  %v2093 = vlaneseq
  %v2094 = vshrl.u32 %v2093, 7
  %v2095 = vsub.s32 2, %v2094
  %v2096 = vrot.slane %v2068, %v2095
  %2098 = vbcast.lane.b32.xlu0 %v2096, 256
  %v2099 = vpop.permute.xlu0 %2098
  %v2100 = vlaneseq
  %v2101 = vshrl.u32 %v2100, 7
  %v2102 = vsub.s32 3, %v2101
  %v2103 = vrot.slane %v2068, %v2102
  %2105 = vbcast.lane.b32.xlu0 %v2103, 256
  %v2106 = vpop.permute.xlu0 %2105
  %v2107 = vlaneseq
  %v2108 = vshrl.u32 %v2107, 7
  %v2109 = vsub.s32 4, %v2108
  %v2110 = vrot.slane %v2068, %v2109
  %2112 = vbcast.lane.b32.xlu0 %v2110, 256
  %v2113 = vpop.permute.xlu0 %2112
  %v2114 = vlaneseq
  %v2115 = vshrl.u32 %v2114, 7
  %v2116 = vsub.s32 5, %v2115
  %v2117 = vrot.slane %v2068, %v2116
  %2119 = vbcast.lane.b32.xlu0 %v2117, 256
  %v2120 = vpop.permute.xlu0 %2119
  %v2121 = vlaneseq
  %v2122 = vshrl.u32 %v2121, 7
  %v2123 = vsub.s32 6, %v2122
  %v2124 = vrot.slane %v2068, %v2123
  %2126 = vbcast.lane.b32.xlu0 %v2124, 256
  %v2127 = vpop.permute.xlu0 %2126
  %v2128 = vlaneseq
  %v2129 = vshrl.u32 %v2128, 7
  %v2130 = vsub.s32 7, %v2129
  %v2131 = vrot.slane %v2068, %v2130
  %2133 = vbcast.lane.b32.xlu0 %v2131, 256
  %v2134 = vpop.permute.xlu0 %2133
  %v2135 = vmul.f32 %v2085, %v2071
  %v2136 = vmul.f32 %v2092, %v2072
  %v2137 = vmul.f32 %v2099, %v2073
  %v2138 = vmul.f32 %v2106, %v2074
  %v2139 = vmul.f32 %v2113, %v2075
  %v2140 = vmul.f32 %v2120, %v2076
  %v2141 = vmul.f32 %v2127, %v2077
  %v2142 = vmul.f32 %v2134, %v2078
  %v2143 = vsel %vm23, %v2135, 0.0
  %v2144 = vsel %vm23, %v2136, 0.0
  %v2145 = vadd.f32 %v2143, %v2144
  %v2146 = vsel %vm23, %v2137, 0.0
  %v2147 = vadd.f32 %v2145, %v2146
  %v2148 = vsel %vm23, %v2138, 0.0
  %v2149 = vadd.f32 %v2147, %v2148
  %v2150 = vsel %vm23, %v2139, 0.0
  %v2151 = vadd.f32 %v2149, %v2150
  %v2152 = vsel %vm23, %v2140, 0.0
  %v2153 = vadd.f32 %v2151, %v2152
  %v2154 = vsel %vm23, %v2141, 0.0
  %v2155 = vadd.f32 %v2153, %v2154
  %v2156 = vsel %vm23, %v2142, 0.0
  %v2157 = vadd.f32 %v2155, %v2156
  %v2158 = vlaneseq
  %v2159 = vshrl.u32 %v2158, 7
  %v2160 = vsub.s32 0, %v2159
  %v2161 = vrot.slane %v2070, %v2160
  %2163 = vbcast.lane.b32.xlu0 %v2161, 256
  %v2164 = vpop.permute.xlu0 %2163
  %v2165 = vlaneseq
  %v2166 = vshrl.u32 %v2165, 7
  %v2167 = vsub.s32 1, %v2166
  %v2168 = vrot.slane %v2070, %v2167
  %2170 = vbcast.lane.b32.xlu0 %v2168, 256
  %v2171 = vpop.permute.xlu0 %2170
  %v2172 = vlaneseq
  %v2173 = vshrl.u32 %v2172, 7
  %v2174 = vsub.s32 2, %v2173
  %v2175 = vrot.slane %v2070, %v2174
  %2177 = vbcast.lane.b32.xlu0 %v2175, 256
  %v2178 = vpop.permute.xlu0 %2177
  %v2179 = vlaneseq
  %v2180 = vshrl.u32 %v2179, 7
  %v2181 = vsub.s32 3, %v2180
  %v2182 = vrot.slane %v2070, %v2181
  %2184 = vbcast.lane.b32.xlu0 %v2182, 256
  %v2185 = vpop.permute.xlu0 %2184
  %v2186 = vlaneseq
  %v2187 = vshrl.u32 %v2186, 7
  %v2188 = vsub.s32 4, %v2187
  %v2189 = vrot.slane %v2070, %v2188
  %2191 = vbcast.lane.b32.xlu0 %v2189, 256
  %v2192 = vpop.permute.xlu0 %2191
  %v2193 = vlaneseq
  %v2194 = vshrl.u32 %v2193, 7
  %v2195 = vsub.s32 5, %v2194
  %v2196 = vrot.slane %v2070, %v2195
  %2198 = vbcast.lane.b32.xlu0 %v2196, 256
  %v2199 = vpop.permute.xlu0 %2198
  %v2200 = vlaneseq
  %v2201 = vshrl.u32 %v2200, 7
  %v2202 = vsub.s32 6, %v2201
  %v2203 = vrot.slane %v2070, %v2202
  %2205 = vbcast.lane.b32.xlu0 %v2203, 256
  %v2206 = vpop.permute.xlu0 %2205
  %v2207 = vlaneseq
  %v2208 = vshrl.u32 %v2207, 7
  %v2209 = vsub.s32 7, %v2208
  %v2210 = vrot.slane %v2070, %v2209
  %2212 = vbcast.lane.b32.xlu0 %v2210, 256
  %v2213 = vpop.permute.xlu0 %2212
  %v2214 = vmul.f32 %v2164, %v2071
  %v2215 = vmul.f32 %v2171, %v2072
  %v2216 = vmul.f32 %v2178, %v2073
  %v2217 = vmul.f32 %v2185, %v2074
  %v2218 = vmul.f32 %v2192, %v2075
  %v2219 = vmul.f32 %v2199, %v2076
  %v2220 = vmul.f32 %v2206, %v2077
  %v2221 = vmul.f32 %v2213, %v2078
  %v2222 = vsel %vm23, %v2214, 0.0
  %v2223 = vsel %vm23, %v2215, 0.0
  %v2224 = vadd.f32 %v2222, %v2223
  %v2225 = vsel %vm23, %v2216, 0.0
  %v2226 = vadd.f32 %v2224, %v2225
  %v2227 = vsel %vm23, %v2217, 0.0
  %v2228 = vadd.f32 %v2226, %v2227
  %v2229 = vsel %vm23, %v2218, 0.0
  %v2230 = vadd.f32 %v2228, %v2229
  %v2231 = vsel %vm23, %v2219, 0.0
  %v2232 = vadd.f32 %v2230, %v2231
  %v2233 = vsel %vm23, %v2220, 0.0
  %v2234 = vadd.f32 %v2232, %v2233
  %v2235 = vsel %vm23, %v2221, 0.0
  %v2236 = vadd.f32 %v2234, %v2235
  %2238 = vrot.lane.b32.xlu0 %v2157, 32
  %v2239 = vpop.permute.xlu0 %2238
  %2242 = vrot.lane.b32.xlu0 %v2236, 64
  %v2243 = vpop.permute.xlu0 %2242
  %v2245 = vsel %vm210, %v2064, %v2239
  %v2246 = vsel %vm23, %v2245, %v2243
  %v2247 = vld [vmem:[%s4] sm:$0xff]
  %v2248 = vld [vmem:[%s4 + $0x8] sm:$0xff]
  %v2249 = vld [vmem:[%s4 + $0x10] sm:$0xff]
  %v2250 = vld [vmem:[%s4 + $0x18] sm:$0xff]
  %v2251 = vld [vmem:[%s4 + $0x20] sm:$0xff]
  %v2252 = vld [vmem:[%s4 + $0x28] sm:$0xff]
  %v2253 = vld [vmem:[%s4 + $0x30] sm:$0xff]
  %v2254 = vld [vmem:[%s4 + $0x38] sm:$0xff]
  %v2255 = vld [vmem:[%s4 + $0x40] sm:$0xff]
  %v2256 = vld [vmem:[%s4 + $0x48] sm:$0xff]
  %v2257 = vld [vmem:[%s4 + $0x50] sm:$0xff]
  %v2258 = vld [vmem:[%s4 + $0x58] sm:$0xff]
  %v2259 = vld [vmem:[%s4 + $0x60] sm:$0xff]
  %v2260 = vld [vmem:[%s4 + $0x68] sm:$0xff]
  %v2261 = vld [vmem:[%s4 + $0x70] sm:$0xff]
  %v2262 = vld [vmem:[%s4 + $0x78] sm:$0xff]
  %v2263 = vld [vmem:[%s4 + $0x80] sm:$0xff]
  %v2264 = vld [vmem:[%s4 + $0x88] sm:$0xff]
  %v2265 = vld [vmem:[%s4 + $0x90] sm:$0xff]
  %v2266 = vld [vmem:[%s4 + $0x98] sm:$0xff]
  %v2267 = vld [vmem:[%s4 + $0xa0] sm:$0xff]
  %v2268 = vld [vmem:[%s4 + $0xa8] sm:$0xff]
  %v2269 = vld [vmem:[%s4 + $0xb0] sm:$0xff]
  %v2270 = vld [vmem:[%s4 + $0xb8] sm:$0xff]
  %v2271 = vld [vmem:[%s5] sm:$0x3]
  %v2273 = vlaneseq
  %v2274 = vshrl.u32 %v2273, 7
  %v2275 = vsub.s32 0, %v2274
  %v2276 = vrot.slane %v2271, %v2275
  %v2277 = vlaneseq
  %v2278 = vshrl.u32 %v2277, 7
  %v2279 = vsub.s32 1, %v2278
  %v2280 = vrot.slane %v2271, %v2279
  %v2284 = vsel %vm249, %v2246, 0
  %2286 = vmatprep.subr.mxu0 %v2248
  %2287 = vmatpush1.msra.mxu0 %v2247
  %2288 = vmatprep.subr.mxu0 %v2250
  %2289 = vmatpush1.msra.mxu0 %v2249
  %2290 = vmatprep.subr.mxu0 %v2252
  %2291 = vmatpush1.msra.mxu0 %v2251
  %2292 = vmatprep.subr.mxu0 %v2254
  %2293 = vmatpush1.msra.mxu0 %v2253
  %2294 = vmatprep.subr.mxu0 %v2256
  %2295 = vmatpush1.msra.mxu0 %v2255
  %2296 = vmatprep.subr.mxu0 %v2258
  %2297 = vmatpush1.msra.mxu0 %v2257
  %2298 = vmatprep.subr.mxu0 %v2260
  %2299 = vmatpush1.msra.mxu0 %v2259
  %2300 = vmatprep.subr.mxu0 %v2262
  %2301 = vmatpush1.msra.mxu0 %v2261
  %2302 = vmatprep.subr.mxu0 %v2264
  %2303 = vmatpush1.msra.mxu0 %v2263
  %2304 = vmatprep.subr.mxu0 %v2266
  %2305 = vmatpush1.msra.mxu0 %v2265
  %2306 = vmatprep.subr.mxu0 %v2268
  %2307 = vmatpush1.msra.mxu0 %v2267
  %2308 = vmatprep.subr.mxu0 %v2270
  %2309 = vmatpush1.msra.mxu0 %v2269
  %2310 = vmatprep.subr.mxu0 0.0
  %2311 = vmatpush1.msra.mxu0 0.0
  %2312 = vmatprep.subr.mxu0 0.0
  %2313 = vmatpush1.msra.mxu0 0.0
  %2314 = vmatprep.subr.mxu0 0.0
  %2315 = vmatpush1.msra.mxu0 0.0
  %2316 = vmatprep.subr.mxu0 0.0
  %2317 = vmatpush1.msra.mxu0 0.0
  %2318 = vmatprep.subr.mxu0 0.0
  %2319 = vmatpush1.msra.mxu0 0.0
  %2320 = vmatprep.subr.mxu0 0.0
  %2321 = vmatpush1.msra.mxu0 0.0
  %2322 = vmatprep.subr.mxu0 0.0
  %2323 = vmatpush1.msra.mxu0 0.0
  %2324 = vmatprep.subr.mxu0 0.0
  %2325 = vmatpush1.msra.mxu0 0.0
  %2326 = vmatprep.subr.mxu0 0.0
  %2327 = vmatpush1.msra.mxu0 0.0
  %2328 = vmatprep.subr.mxu0 0.0
  %2329 = vmatpush1.msra.mxu0 0.0
  %2330 = vmatprep.subr.mxu0 0.0
  %2331 = vmatpush1.msra.mxu0 0.0
  %2332 = vmatprep.subr.mxu0 0.0
  %2333 = vmatpush1.msra.mxu0 0.0
  %2334 = vmatprep.subr.mxu0 0.0
  %2335 = vmatpush1.msra.mxu0 0.0
  %2336 = vmatprep.subr.mxu0 0.0
  %2337 = vmatpush1.msra.mxu0 0.0
  %2338 = vmatprep.subr.mxu0 0.0
  %2339 = vmatpush1.msra.mxu0 0.0
  %2340 = vmatprep.subr.mxu0 0.0
  %2341 = vmatpush1.msra.mxu0 0.0
  %2342 = vmatprep.subr.mxu0 0.0
  %2343 = vmatpush1.msra.mxu0 0.0
  %2344 = vmatprep.subr.mxu0 0.0
  %2345 = vmatpush1.msra.mxu0 0.0
  %2346 = vmatprep.subr.mxu0 0.0
  %2347 = vmatpush1.msra.mxu0 0.0
  %2348 = vmatprep.subr.mxu0 0.0
  %2349 = vmatpush1.msra.mxu0 0.0
  %2350 = vmatprep.mubr.f32.mxu0 0.0
  %2351 = vmatmul.mubr.f32.gmra.mrb[0].mxu0 %v2284
  %v2352 = vpop.f32.mrb[0].mxu0
  %v2353 = vadd.f32 %v2276, %v2352
  %v2354 = vpop.f32.mrb[0].mxu0
  %v2355 = vadd.f32 %v2280, %v2354
  %2356 = vdwg.mxu0
  %v2357 = vtanh.pop %v2353
  %v2358 = vxor.u32 %v2353, 2147483648
  %v2359 = vmul.f32 %v2358, 1.442695
  %v2360 = vpow.pop %v2359
  %v2361 = vadd.f32 %v2360, 1.0
  %v2362 = vrcp.pop %v2361
  %v2363 = vmul.f32 1.0, %v2362
  %v2364 = vxor.u32 %v2355, 2147483648
  %v2365 = vmul.f32 %v2364, 1.442695
  %v2366 = vpow.pop %v2365
  %v2367 = vadd.f32 %v2366, 1.0
  %v2368 = vrcp.pop %v2367
  %v2369 = vmul.f32 1.0, %v2368
  %2371 = vrot.lane.b32.xlu0 %v2357, 32
  %v2372 = vpop.permute.xlu0 %2371
  %v2374 = vmul.f32 %v2363, %v2372
  %v2375 = vmul.f32 %v2363, %v2239
  %2377 = vrot.lane.b32.xlu0 %v2375, 96
  %v2378 = vpop.permute.xlu0 %2377
  %v2380 = vadd.f32 %v2374, %v2378
  %v2381 = vmul.f32 %v2363, %v2243
  %2383 = vrot.lane.b32.xlu0 %v2381, 64
  %v2384 = vpop.permute.xlu0 %2383
  %v2386 = vadd.f32 %v2380, %v2384
  %v2387 = vtanh.pop %v2386
  %2389 = vrot.lane.b32.xlu0 %v2387, 96
  %v2390 = vpop.permute.xlu0 %2389
  %v2392 = vmul.f32 %v2369, %v2390
  %v2393 = vsel %vm210, %v2392, %v2386
  %2395 = vset.pattern.permute.xlu0 0
  %2396 = vperm.xlu0 %2395, %v2066
  %v2397 = vpop.permute.xlu0 %2396
  %v2399 = vmul.f32 %v2397, %v2393
  %s2400 = scalar_lea.vmem %s6, 48
  %2401 = vst.msk [vmem:[%s2400] sm:$0xff] %vm23, %v2399
  %s2402 = scalar_lea.vmem %s0, 56
  %v2403 = vld [vmem:[%s2402] sm:$0xff]
  %s2404 = scalar_lea.vmem %s1, 56
  %v2405 = vld [vmem:[%s2404] sm:$0xff]
  %s2406 = scalar_lea.vmem %s2, 56
  %v2407 = vld [vmem:[%s2406] sm:$0xff]
  %s2408 = scalar_lea.vmem %s3, 56
  %v2409 = vld [vmem:[%s2408] sm:$0xff]
  %v2410 = vld [vmem:[%s6] sm:$0xff]
  %v2411 = vld [vmem:[%s6 + $0x8] sm:$0xff]
  %v2412 = vld [vmem:[%s6 + $0x10] sm:$0xff]
  %v2413 = vld [vmem:[%s6 + $0x18] sm:$0xff]
  %v2414 = vld [vmem:[%s6 + $0x20] sm:$0xff]
  %v2415 = vld [vmem:[%s6 + $0x28] sm:$0xff]
  %v2416 = vld [vmem:[%s6 + $0x30] sm:$0xff]
  %v2417 = vld [vmem:[%s6 + $0x38] sm:$0xff]
  %v2418 = vlaneseq
  %v2419 = vshrl.u32 %v2418, 7
  %v2420 = vsub.s32 0, %v2419
  %v2421 = vrot.slane %v2407, %v2420
  %2423 = vbcast.lane.b32.xlu0 %v2421, 256
  %v2424 = vpop.permute.xlu0 %2423
  %v2425 = vlaneseq
  %v2426 = vshrl.u32 %v2425, 7
  %v2427 = vsub.s32 1, %v2426
  %v2428 = vrot.slane %v2407, %v2427
  %2430 = vbcast.lane.b32.xlu0 %v2428, 256
  %v2431 = vpop.permute.xlu0 %2430
  %v2432 = vlaneseq
  %v2433 = vshrl.u32 %v2432, 7
  %v2434 = vsub.s32 2, %v2433
  %v2435 = vrot.slane %v2407, %v2434
  %2437 = vbcast.lane.b32.xlu0 %v2435, 256
  %v2438 = vpop.permute.xlu0 %2437
  %v2439 = vlaneseq
  %v2440 = vshrl.u32 %v2439, 7
  %v2441 = vsub.s32 3, %v2440
  %v2442 = vrot.slane %v2407, %v2441
  %2444 = vbcast.lane.b32.xlu0 %v2442, 256
  %v2445 = vpop.permute.xlu0 %2444
  %v2446 = vlaneseq
  %v2447 = vshrl.u32 %v2446, 7
  %v2448 = vsub.s32 4, %v2447
  %v2449 = vrot.slane %v2407, %v2448
  %2451 = vbcast.lane.b32.xlu0 %v2449, 256
  %v2452 = vpop.permute.xlu0 %2451
  %v2453 = vlaneseq
  %v2454 = vshrl.u32 %v2453, 7
  %v2455 = vsub.s32 5, %v2454
  %v2456 = vrot.slane %v2407, %v2455
  %2458 = vbcast.lane.b32.xlu0 %v2456, 256
  %v2459 = vpop.permute.xlu0 %2458
  %v2460 = vlaneseq
  %v2461 = vshrl.u32 %v2460, 7
  %v2462 = vsub.s32 6, %v2461
  %v2463 = vrot.slane %v2407, %v2462
  %2465 = vbcast.lane.b32.xlu0 %v2463, 256
  %v2466 = vpop.permute.xlu0 %2465
  %v2467 = vlaneseq
  %v2468 = vshrl.u32 %v2467, 7
  %v2469 = vsub.s32 7, %v2468
  %v2470 = vrot.slane %v2407, %v2469
  %2472 = vbcast.lane.b32.xlu0 %v2470, 256
  %v2473 = vpop.permute.xlu0 %2472
  %v2474 = vmul.f32 %v2424, %v2410
  %v2475 = vmul.f32 %v2431, %v2411
  %v2476 = vmul.f32 %v2438, %v2412
  %v2477 = vmul.f32 %v2445, %v2413
  %v2478 = vmul.f32 %v2452, %v2414
  %v2479 = vmul.f32 %v2459, %v2415
  %v2480 = vmul.f32 %v2466, %v2416
  %v2481 = vmul.f32 %v2473, %v2417
  %v2482 = vsel %vm23, %v2474, 0.0
  %v2483 = vsel %vm23, %v2475, 0.0
  %v2484 = vadd.f32 %v2482, %v2483
  %v2485 = vsel %vm23, %v2476, 0.0
  %v2486 = vadd.f32 %v2484, %v2485
  %v2487 = vsel %vm23, %v2477, 0.0
  %v2488 = vadd.f32 %v2486, %v2487
  %v2489 = vsel %vm23, %v2478, 0.0
  %v2490 = vadd.f32 %v2488, %v2489
  %v2491 = vsel %vm23, %v2479, 0.0
  %v2492 = vadd.f32 %v2490, %v2491
  %v2493 = vsel %vm23, %v2480, 0.0
  %v2494 = vadd.f32 %v2492, %v2493
  %v2495 = vsel %vm23, %v2481, 0.0
  %v2496 = vadd.f32 %v2494, %v2495
  %v2497 = vlaneseq
  %v2498 = vshrl.u32 %v2497, 7
  %v2499 = vsub.s32 0, %v2498
  %v2500 = vrot.slane %v2409, %v2499
  %2502 = vbcast.lane.b32.xlu0 %v2500, 256
  %v2503 = vpop.permute.xlu0 %2502
  %v2504 = vlaneseq
  %v2505 = vshrl.u32 %v2504, 7
  %v2506 = vsub.s32 1, %v2505
  %v2507 = vrot.slane %v2409, %v2506
  %2509 = vbcast.lane.b32.xlu0 %v2507, 256
  %v2510 = vpop.permute.xlu0 %2509
  %v2511 = vlaneseq
  %v2512 = vshrl.u32 %v2511, 7
  %v2513 = vsub.s32 2, %v2512
  %v2514 = vrot.slane %v2409, %v2513
  %2516 = vbcast.lane.b32.xlu0 %v2514, 256
  %v2517 = vpop.permute.xlu0 %2516
  %v2518 = vlaneseq
  %v2519 = vshrl.u32 %v2518, 7
  %v2520 = vsub.s32 3, %v2519
  %v2521 = vrot.slane %v2409, %v2520
  %2523 = vbcast.lane.b32.xlu0 %v2521, 256
  %v2524 = vpop.permute.xlu0 %2523
  %v2525 = vlaneseq
  %v2526 = vshrl.u32 %v2525, 7
  %v2527 = vsub.s32 4, %v2526
  %v2528 = vrot.slane %v2409, %v2527
  %2530 = vbcast.lane.b32.xlu0 %v2528, 256
  %v2531 = vpop.permute.xlu0 %2530
  %v2532 = vlaneseq
  %v2533 = vshrl.u32 %v2532, 7
  %v2534 = vsub.s32 5, %v2533
  %v2535 = vrot.slane %v2409, %v2534
  %2537 = vbcast.lane.b32.xlu0 %v2535, 256
  %v2538 = vpop.permute.xlu0 %2537
  %v2539 = vlaneseq
  %v2540 = vshrl.u32 %v2539, 7
  %v2541 = vsub.s32 6, %v2540
  %v2542 = vrot.slane %v2409, %v2541
  %2544 = vbcast.lane.b32.xlu0 %v2542, 256
  %v2545 = vpop.permute.xlu0 %2544
  %v2546 = vlaneseq
  %v2547 = vshrl.u32 %v2546, 7
  %v2548 = vsub.s32 7, %v2547
  %v2549 = vrot.slane %v2409, %v2548
  %2551 = vbcast.lane.b32.xlu0 %v2549, 256
  %v2552 = vpop.permute.xlu0 %2551
  %v2553 = vmul.f32 %v2503, %v2410
  %v2554 = vmul.f32 %v2510, %v2411
  %v2555 = vmul.f32 %v2517, %v2412
  %v2556 = vmul.f32 %v2524, %v2413
  %v2557 = vmul.f32 %v2531, %v2414
  %v2558 = vmul.f32 %v2538, %v2415
  %v2559 = vmul.f32 %v2545, %v2416
  %v2560 = vmul.f32 %v2552, %v2417
  %v2561 = vsel %vm23, %v2553, 0.0
  %v2562 = vsel %vm23, %v2554, 0.0
  %v2563 = vadd.f32 %v2561, %v2562
  %v2564 = vsel %vm23, %v2555, 0.0
  %v2565 = vadd.f32 %v2563, %v2564
  %v2566 = vsel %vm23, %v2556, 0.0
  %v2567 = vadd.f32 %v2565, %v2566
  %v2568 = vsel %vm23, %v2557, 0.0
  %v2569 = vadd.f32 %v2567, %v2568
  %v2570 = vsel %vm23, %v2558, 0.0
  %v2571 = vadd.f32 %v2569, %v2570
  %v2572 = vsel %vm23, %v2559, 0.0
  %v2573 = vadd.f32 %v2571, %v2572
  %v2574 = vsel %vm23, %v2560, 0.0
  %v2575 = vadd.f32 %v2573, %v2574
  %2577 = vrot.lane.b32.xlu0 %v2496, 32
  %v2578 = vpop.permute.xlu0 %2577
  %2581 = vrot.lane.b32.xlu0 %v2575, 64
  %v2582 = vpop.permute.xlu0 %2581
  %v2584 = vsel %vm210, %v2403, %v2578
  %v2585 = vsel %vm23, %v2584, %v2582
  %v2586 = vld [vmem:[%s4] sm:$0xff]
  %v2587 = vld [vmem:[%s4 + $0x8] sm:$0xff]
  %v2588 = vld [vmem:[%s4 + $0x10] sm:$0xff]
  %v2589 = vld [vmem:[%s4 + $0x18] sm:$0xff]
  %v2590 = vld [vmem:[%s4 + $0x20] sm:$0xff]
  %v2591 = vld [vmem:[%s4 + $0x28] sm:$0xff]
  %v2592 = vld [vmem:[%s4 + $0x30] sm:$0xff]
  %v2593 = vld [vmem:[%s4 + $0x38] sm:$0xff]
  %v2594 = vld [vmem:[%s4 + $0x40] sm:$0xff]
  %v2595 = vld [vmem:[%s4 + $0x48] sm:$0xff]
  %v2596 = vld [vmem:[%s4 + $0x50] sm:$0xff]
  %v2597 = vld [vmem:[%s4 + $0x58] sm:$0xff]
  %v2598 = vld [vmem:[%s4 + $0x60] sm:$0xff]
  %v2599 = vld [vmem:[%s4 + $0x68] sm:$0xff]
  %v2600 = vld [vmem:[%s4 + $0x70] sm:$0xff]
  %v2601 = vld [vmem:[%s4 + $0x78] sm:$0xff]
  %v2602 = vld [vmem:[%s4 + $0x80] sm:$0xff]
  %v2603 = vld [vmem:[%s4 + $0x88] sm:$0xff]
  %v2604 = vld [vmem:[%s4 + $0x90] sm:$0xff]
  %v2605 = vld [vmem:[%s4 + $0x98] sm:$0xff]
  %v2606 = vld [vmem:[%s4 + $0xa0] sm:$0xff]
  %v2607 = vld [vmem:[%s4 + $0xa8] sm:$0xff]
  %v2608 = vld [vmem:[%s4 + $0xb0] sm:$0xff]
  %v2609 = vld [vmem:[%s4 + $0xb8] sm:$0xff]
  %v2610 = vld [vmem:[%s5] sm:$0x3]
  %v2612 = vlaneseq
  %v2613 = vshrl.u32 %v2612, 7
  %v2614 = vsub.s32 0, %v2613
  %v2615 = vrot.slane %v2610, %v2614
  %v2616 = vlaneseq
  %v2617 = vshrl.u32 %v2616, 7
  %v2618 = vsub.s32 1, %v2617
  %v2619 = vrot.slane %v2610, %v2618
  %v2623 = vsel %vm249, %v2585, 0
  %2625 = vmatprep.subr.mxu0 %v2587
  %2626 = vmatpush1.msra.mxu0 %v2586
  %2627 = vmatprep.subr.mxu0 %v2589
  %2628 = vmatpush1.msra.mxu0 %v2588
  %2629 = vmatprep.subr.mxu0 %v2591
  %2630 = vmatpush1.msra.mxu0 %v2590
  %2631 = vmatprep.subr.mxu0 %v2593
  %2632 = vmatpush1.msra.mxu0 %v2592
  %2633 = vmatprep.subr.mxu0 %v2595
  %2634 = vmatpush1.msra.mxu0 %v2594
  %2635 = vmatprep.subr.mxu0 %v2597
  %2636 = vmatpush1.msra.mxu0 %v2596
  %2637 = vmatprep.subr.mxu0 %v2599
  %2638 = vmatpush1.msra.mxu0 %v2598
  %2639 = vmatprep.subr.mxu0 %v2601
  %2640 = vmatpush1.msra.mxu0 %v2600
  %2641 = vmatprep.subr.mxu0 %v2603
  %2642 = vmatpush1.msra.mxu0 %v2602
  %2643 = vmatprep.subr.mxu0 %v2605
  %2644 = vmatpush1.msra.mxu0 %v2604
  %2645 = vmatprep.subr.mxu0 %v2607
  %2646 = vmatpush1.msra.mxu0 %v2606
  %2647 = vmatprep.subr.mxu0 %v2609
  %2648 = vmatpush1.msra.mxu0 %v2608
  %2649 = vmatprep.subr.mxu0 0.0
  %2650 = vmatpush1.msra.mxu0 0.0
  %2651 = vmatprep.subr.mxu0 0.0
  %2652 = vmatpush1.msra.mxu0 0.0
  %2653 = vmatprep.subr.mxu0 0.0
  %2654 = vmatpush1.msra.mxu0 0.0
  %2655 = vmatprep.subr.mxu0 0.0
  %2656 = vmatpush1.msra.mxu0 0.0
  %2657 = vmatprep.subr.mxu0 0.0
  %2658 = vmatpush1.msra.mxu0 0.0
  %2659 = vmatprep.subr.mxu0 0.0
  %2660 = vmatpush1.msra.mxu0 0.0
  %2661 = vmatprep.subr.mxu0 0.0
  %2662 = vmatpush1.msra.mxu0 0.0
  %2663 = vmatprep.subr.mxu0 0.0
  %2664 = vmatpush1.msra.mxu0 0.0
  %2665 = vmatprep.subr.mxu0 0.0
  %2666 = vmatpush1.msra.mxu0 0.0
  %2667 = vmatprep.subr.mxu0 0.0
  %2668 = vmatpush1.msra.mxu0 0.0
  %2669 = vmatprep.subr.mxu0 0.0
  %2670 = vmatpush1.msra.mxu0 0.0
  %2671 = vmatprep.subr.mxu0 0.0
  %2672 = vmatpush1.msra.mxu0 0.0
  %2673 = vmatprep.subr.mxu0 0.0
  %2674 = vmatpush1.msra.mxu0 0.0
  %2675 = vmatprep.subr.mxu0 0.0
  %2676 = vmatpush1.msra.mxu0 0.0
  %2677 = vmatprep.subr.mxu0 0.0
  %2678 = vmatpush1.msra.mxu0 0.0
  %2679 = vmatprep.subr.mxu0 0.0
  %2680 = vmatpush1.msra.mxu0 0.0
  %2681 = vmatprep.subr.mxu0 0.0
  %2682 = vmatpush1.msra.mxu0 0.0
  %2683 = vmatprep.subr.mxu0 0.0
  %2684 = vmatpush1.msra.mxu0 0.0
  %2685 = vmatprep.subr.mxu0 0.0
  %2686 = vmatpush1.msra.mxu0 0.0
  %2687 = vmatprep.subr.mxu0 0.0
  %2688 = vmatpush1.msra.mxu0 0.0
  %2689 = vmatprep.mubr.f32.mxu0 0.0
  %2690 = vmatmul.mubr.f32.gmra.mrb[0].mxu0 %v2623
  %v2691 = vpop.f32.mrb[0].mxu0
  %v2692 = vadd.f32 %v2615, %v2691
  %v2693 = vpop.f32.mrb[0].mxu0
  %v2694 = vadd.f32 %v2619, %v2693
  %2695 = vdwg.mxu0
  %v2696 = vtanh.pop %v2692
  %v2697 = vxor.u32 %v2692, 2147483648
  %v2698 = vmul.f32 %v2697, 1.442695
  %v2699 = vpow.pop %v2698
  %v2700 = vadd.f32 %v2699, 1.0
  %v2701 = vrcp.pop %v2700
  %v2702 = vmul.f32 1.0, %v2701
  %v2703 = vxor.u32 %v2694, 2147483648
  %v2704 = vmul.f32 %v2703, 1.442695
  %v2705 = vpow.pop %v2704
  %v2706 = vadd.f32 %v2705, 1.0
  %v2707 = vrcp.pop %v2706
  %v2708 = vmul.f32 1.0, %v2707
  %2710 = vrot.lane.b32.xlu0 %v2696, 32
  %v2711 = vpop.permute.xlu0 %2710
  %v2713 = vmul.f32 %v2702, %v2711
  %v2714 = vmul.f32 %v2702, %v2578
  %2716 = vrot.lane.b32.xlu0 %v2714, 96
  %v2717 = vpop.permute.xlu0 %2716
  %v2719 = vadd.f32 %v2713, %v2717
  %v2720 = vmul.f32 %v2702, %v2582
  %2722 = vrot.lane.b32.xlu0 %v2720, 64
  %v2723 = vpop.permute.xlu0 %2722
  %v2725 = vadd.f32 %v2719, %v2723
  %v2726 = vtanh.pop %v2725
  %2728 = vrot.lane.b32.xlu0 %v2726, 96
  %v2729 = vpop.permute.xlu0 %2728
  %v2731 = vmul.f32 %v2708, %v2729
  %v2732 = vsel %vm210, %v2731, %v2725
  %2734 = vset.pattern.permute.xlu0 0
  %2735 = vperm.xlu0 %2734, %v2405
  %v2736 = vpop.permute.xlu0 %2735
  %v2738 = vmul.f32 %v2736, %v2732
  %s2739 = scalar_lea.vmem %s6, 56
  %2740 = vst.msk [vmem:[%s2739] sm:$0xff] %vm23, %v2738
  // Predicated region
  $region26: #{binary_tree_lstm_forward.1} parent=0 // pred_check
    _
  $region27: #{binary_tree_lstm_forward.1} parent=0 // pred_check_branch
    %2742 = sbr.rel (0) target = $region29
  $region28: #{binary_tree_lstm_forward.1} parent=0 // pred_region
    _
  $region29: #{binary_tree_lstm_forward.1} parent=0 // pred_fallthru
    _
  // Predicated region
  $region30: #{binary_tree_lstm_forward.1} parent=0 // pred_check
    _
  $region31: #{binary_tree_lstm_forward.1} parent=0 // pred_check_branch
    %2744 = sbr.rel (0) target = $region33
  $region32: #{binary_tree_lstm_forward.1} parent=0 // pred_region
    _
  $region33: #{binary_tree_lstm_forward.1} parent=0 // pred_fallthru
    _

</llo_original>
